<compile_context>
chip_gen: v5e
topology: v5e:2x2
jax: 0.10.0
libtpu: 0.0.40
codegen_flags: <defaults>
</compile_context>

<pallas_src>
import math

import jax
import jax.numpy as jnp
from jax.experimental import pallas as pl
from jax.experimental.pallas import tpu as pltpu

EPS = 1e-5                         # nn.BatchNorm2d default eps
_WPAD = 16                         # tile-aligned left margin in the padded scratch
_VMEM_LIMIT = 32 * 1024 * 1024     # explicit scoped-VMEM budget (fits v5e/v6e/v7x)


# ------------------- conv3x3 + fused BN-statistics kernel -------------------
def _conv3x3_bn_stats_kernel(x_ref, w_ref, b_ref, o_ref, ssum_ref, ssq_ref, xp_ref):
    # x_ref   : (1, H, W, Cin)          whole input image (fetched once per n)
    # w_ref   : (3, 3, Cin, TCO)  bf16  HWIO weight tile
    # b_ref   : (1, TCO)          f32   bias
    # o_ref   : (1, TH, W, TCO)         conv output row-tile
    # ssum_ref: (1, 1, 1, TCO)    f32   per-(n, row-tile, co-tile) sum
    # ssq_ref : (1, 1, 1, TCO)    f32   per-(n, row-tile, co-tile) sum of squares
    # xp_ref  : (H+2, W+2*_WPAD, Cin)   zero-padded image scratch (VMEM)
    H, W, Cin = x_ref.shape[1], x_ref.shape[2], x_ref.shape[3]
    TH, TCO = o_ref.shape[1], o_ref.shape[3]
    t = pl.program_id(1)          # row-tile index
    r0 = t * TH

    # Build the zero-padded image in VMEM (replaces the host-side jnp.pad HBM
    # round trip).  Row offset 1 is on an untiled leading dim and the W offset
    # (_WPAD) is sublane-tile aligned, so the interior store is an aligned store.
    # (Refilled every (t, co) step; cheap vs. the conv, simplifies "parallel".)
    xp_ref[...] = jnp.zeros_like(xp_ref)
    xp_ref[1:H + 1, _WPAD:_WPAD + W, :] = x_ref[0]

    acc = jnp.zeros((TH * W, TCO), jnp.float32)
    for kh in range(3):
        # TH padded rows starting at r0 + kh (dynamic offset on the leading dim).
        slab = xp_ref[pl.ds(r0 + kh, TH), :, :]          # (TH, W + 2*_WPAD, Cin)
        for kw in range(3):
            c0 = _WPAD - 1 + kw
            patch = slab[:, c0:c0 + W, :].reshape(TH * W, Cin)
            acc = acc + jnp.dot(patch.astype(jnp.bfloat16), w_ref[kh, kw],
                                preferred_element_type=jnp.float32)
    acc = acc + b_ref[...].astype(jnp.float32)

    # Fused BN-statistics epilogue (uses the f32 accumulator while it is hot).
    ssum_ref[...] = jnp.sum(acc, axis=0).reshape(1, 1, 1, TCO)
    ssq_ref[...] = jnp.sum(acc * acc, axis=0).reshape(1, 1, 1, TCO)

    o_ref[...] = acc.reshape(1, TH, W, TCO).astype(o_ref.dtype)


def _pick_row_tile(H, W):
    # Largest divisor of H that keeps TH*W (matmul M rows / live accumulator) <= 128.
    target = max(1, 128 // max(W, 1))
    for d in range(min(H, target), 0, -1):
        if H % d == 0:
            return d
    return H


def conv3x3_bn_stats(x_nhwc, w_hwio, bias):
    """3x3 conv (stride 1, pad 1, bias) fused with BN batch-statistic partials."""
    N, H, W, Cin = x_nhwc.shape
    Cout = w_hwio.shape[-1]
    TCO = Cout if Cout <= 256 else 256        # 256-wide Cout tiles match v6e/v7x MXU
    n_co = pl.cdiv(Cout, TCO)
    TH = _pick_row_tile(H, W)
    n_t = H // TH

    w_bf16 = w_hwio.astype(jnp.bfloat16)      # bf16 MXU operands, f32 accumulation
    b2 = bias.reshape(1, Cout).astype(jnp.float32)

    out_shape = (
        jax.ShapeDtypeStruct((N, H, W, Cout), x_nhwc.dtype),
        jax.ShapeDtypeStruct((N, n_t, 1, Cout), jnp.float32),
        jax.ShapeDtypeStruct((N, n_t, 1, Cout), jnp.float32),
    )
    conv_out, ssum, ssq = pl.pallas_call(
        _conv3x3_bn_stats_kernel,
        out_shape=out_shape,
        grid=(N, n_t, n_co),
        in_specs=[
            # Whole image per n; the block index ignores (t, co), so the DMA is
            # only re-issued when n changes.
            pl.BlockSpec((1, H, W, Cin), lambda n, t, c: (n, 0, 0, 0)),
            pl.BlockSpec((3, 3, Cin, TCO), lambda n, t, c: (0, 0, 0, c)),
            pl.BlockSpec((1, TCO), lambda n, t, c: (0, c)),
        ],
        out_specs=(
            pl.BlockSpec((1, TH, W, TCO), lambda n, t, c: (n, t, 0, c)),
            pl.BlockSpec((1, 1, 1, TCO), lambda n, t, c: (n, t, 0, c)),
            pl.BlockSpec((1, 1, 1, TCO), lambda n, t, c: (n, t, 0, c)),
        ),
        scratch_shapes=[pltpu.VMEM((H + 2, W + 2 * _WPAD, Cin), x_nhwc.dtype)],
        compiler_params=pltpu.CompilerParams(
            dimension_semantics=("parallel", "parallel", "parallel"),
            vmem_limit_bytes=_VMEM_LIMIT),
    )(x_nhwc, w_bf16, b2)
    return conv_out, ssum, ssq


# --------------- BN finalize (tiny per-channel scale/shift math) -------------
def _bn_scale_shift(ssum, ssq, gamma, beta, count):
    # Fold training-mode batch statistics + affine params into per-channel
    # scale/shift once, hoisted out of the tiled elementwise pass.
    s = jnp.sum(ssum, axis=(0, 1, 2))
    q = jnp.sum(ssq, axis=(0, 1, 2))
    mean = s / count
    var = jnp.maximum(q / count - mean * mean, 0.0)   # biased variance (train BN)
    scale = gamma * jax.lax.rsqrt(var + EPS)
    shift = beta - mean * scale
    return scale, shift


# --------------- fused BN-apply (+ residual add) + ReLU passes ---------------
def _scale_relu_kernel(x_ref, sc_ref, sh_ref, o_ref):
    y = x_ref[...].astype(jnp.float32) * sc_ref[...] + sh_ref[...]
    o_ref[...] = jnp.maximum(y, 0.0).astype(o_ref.dtype)


def _scale_add_relu_kernel(x_ref, id_ref, sc_ref, sh_ref, o_ref):
    y = x_ref[...].astype(jnp.float32) * sc_ref[...] + sh_ref[...]
    y = y + id_ref[...].astype(jnp.float32)
    o_ref[...] = jnp.maximum(y, 0.0).astype(o_ref.dtype)


def _lane_width(C, total):
    # Smallest multiple of both C and 128 (grown while it still divides the
    # element count) so the elementwise pass loads/stores lane-dense rows.
    L = C * (128 // math.gcd(C, 128))
    if total % L != 0:
        return C                       # fallback: per-pixel rows (still correct)
    while L * 2 <= 1024 and total % (L * 2) == 0:
        L *= 2
    return L


def bn_apply_relu(x_nhwc, scale_c, shift_c, identity_nhwc=None):
    """y = relu(x * scale + shift [+ identity]) over a lane-dense (R, L) view."""
    N, H, W, C = x_nhwc.shape
    total = N * H * W * C
    L = _lane_width(C, total)
    R = total // L
    TR = R if R <= 512 else 512        # ~512-row blocks: good HBM-roofline tile
    grid = (pl.cdiv(R, TR),)

    xf = x_nhwc.reshape(R, L)
    reps = L // C
    sc = jnp.tile(scale_c.astype(jnp.float32), reps).reshape(1, L)
    sh = jnp.tile(shift_c.astype(jnp.float32), reps).reshape(1, L)

    row_spec = pl.BlockSpec((TR, L), lambda r: (r, 0))
    par_spec = pl.BlockSpec((1, L), lambda r: (0, 0))

    if identity_nhwc is None:
        kernel, args = _scale_relu_kernel, (xf, sc, sh)
        in_specs = [row_spec, par_spec, par_spec]
    else:
        kernel = _scale_add_relu_kernel
        args = (xf, identity_nhwc.reshape(R, L), sc, sh)
        in_specs = [row_spec, row_spec, par_spec, par_spec]

    out = pl.pallas_call(
        kernel,
        out_shape=jax.ShapeDtypeStruct((R, L), x_nhwc.dtype),
        grid=grid,
        in_specs=in_specs,
        out_specs=row_spec,
        compiler_params=pltpu.CompilerParams(
            dimension_semantics=("parallel",),
            vmem_limit_bytes=_VMEM_LIMIT),
    )(*args)
    return out.reshape(N, H, W, C)


# ------------------------------ full forward ---------------------------------
def basicblock_forward(x_nchw, w1, b1, w2, b2, gamma, beta):
    # NCHW (PyTorch) -> NHWC for the kernels (channels on the lane axis).
    # (These two transposes could be folded into the conv DMA; kept host-side
    #  for simplicity since they are single XLA relayouts.)
    x = jnp.transpose(x_nchw, (0, 2, 3, 1))
    N, H, W, C = x.shape
    count = N * H * W

    y1, s1, q1 = conv3x3_bn_stats(x, w1, b1)                # conv1 + fused BN stats
    sc1, sh1 = _bn_scale_shift(s1, q1, gamma, beta, count)
    a1 = bn_apply_relu(y1, sc1, sh1)                        # bn + relu

    y2, s2, q2 = conv3x3_bn_stats(a1, w2, b2)               # conv2 + fused BN stats
    sc2, sh2 = _bn_scale_shift(s2, q2, gamma, beta, count)
    out = bn_apply_relu(y2, sc2, sh2, identity_nhwc=x)      # bn + residual + relu
    # downsample is None in this module instantiation (identity passthrough)

    return jnp.transpose(out, (0, 3, 1, 2))                 # back to NCHW


if __name__ == "__main__":
    N, C, H, W = 2, 4, 16, 16   # in_channels == out_channels, stride=1, downsample=None

    key = jax.random.PRNGKey(0)
    kx, k1, k2, k3, k4 = jax.random.split(key, 5)

    x = jax.random.normal(kx, (N, C, H, W), jnp.float32)

    # Synthetic parameters (HWIO conv weights + bias; shared BatchNorm2d affine).
    w1 = 0.1 * jax.random.normal(k1, (3, 3, C, C), jnp.float32)
    b1 = 0.1 * jax.random.normal(k2, (C,), jnp.float32)
    w2 = 0.1 * jax.random.normal(k3, (3, 3, C, C), jnp.float32)
    b2 = 0.1 * jax.random.normal(k4, (C,), jnp.float32)
    gamma = jnp.ones((C,), jnp.float32)    # bn.weight init
    beta = jnp.zeros((C,), jnp.float32)    # bn.bias init

    fwd = jax.jit(basicblock_forward)
    out = fwd(x, w1, b1, w2, b2, gamma, beta)
    jax.block_until_ready(out)
    assert out.shape == (N, C, H, W)
    print("KERNEL_OK")
</pallas_src>

<mosaic_0001>
module attributes {stable_mosaic.version = 11 : i64} {
  func.func @_conv3x3_bn_stats_kernel(%arg0: i32, %arg1: i32, %arg2: i32, %arg3: memref<1x16x16x4xf32, #tpu.memory_space<vmem>>, %arg4: memref<3x3x4x4xbf16, #tpu.memory_space<vmem>>, %arg5: memref<1x4xf32, #tpu.memory_space<vmem>>, %arg6: memref<1x8x16x4xf32, #tpu.memory_space<vmem>>, %arg7: memref<1x1x1x4xf32, #tpu.memory_space<vmem>>, %arg8: memref<1x1x1x4xf32, #tpu.memory_space<vmem>>, %arg9: memref<18x48x4xf32, #tpu.memory_space<vmem>>) attributes {dimension_semantics = [#tpu.dimension_semantics<parallel>, #tpu.dimension_semantics<parallel>, #tpu.dimension_semantics<parallel>], iteration_bounds = array<i64: 2, 2, 1>, scalar_prefetch = 0 : i64, scratch_operands = 1 : i64, tpu.core_type = #tpu.core_type<tc>, window_params = [{transform_indices = @transform_0, window_bounds = array<i64: 1, 16, 16, 4>}, {transform_indices = @transform_1, window_bounds = array<i64: 3, 3, 4, 4>}, {transform_indices = @transform_2, window_bounds = array<i64: 1, 4>}, {transform_indices = @transform_3, window_bounds = array<i64: 1, 8, 16, 4>}, {transform_indices = @transform_4, window_bounds = array<i64: 1, 1, 1, 4>}, {transform_indices = @transform_5, window_bounds = array<i64: 1, 1, 1, 4>}]} {
    %c8_i32 = arith.constant 8 : i32
    %0 = arith.muli %arg1, %c8_i32 : i32
    %cst = arith.constant 0.000000e+00 : f32
    %1 = vector.broadcast %cst : f32 to vector<18x48x4xf32>
    %c0 = arith.constant 0 : index
    %c0_0 = arith.constant 0 : index
    %c0_1 = arith.constant 0 : index
    %2 = vector.load %arg9[%c0, %c0_0, %c0_1] : memref<18x48x4xf32, #tpu.memory_space<vmem>>, vector<18x48x4xf32>
    tpu.vector_store %arg9[%c0, %c0_0, %c0_1], %1 {strides = array<i32>} : memref<18x48x4xf32, #tpu.memory_space<vmem>>, vector<18x48x4xf32>,
    %c0_2 = arith.constant 0 : index
    %c0_3 = arith.constant 0 : index
    %c0_4 = arith.constant 0 : index
    %c0_5 = arith.constant 0 : index
    %3 = vector.load %arg3[%c0_2, %c0_3, %c0_4, %c0_5] : memref<1x16x16x4xf32, #tpu.memory_space<vmem>>, vector<1x16x16x4xf32>
    %4 = vector.shape_cast %3 : vector<1x16x16x4xf32> to vector<16x16x4xf32>
    %c1 = arith.constant 1 : index
    %c16 = arith.constant 16 : index
    %c0_6 = arith.constant 0 : index
    %5 = vector.load %arg9[%c1, %c16, %c0_6] : memref<18x48x4xf32, #tpu.memory_space<vmem>>, vector<16x16x4xf32>
    tpu.vector_store %arg9[%c1, %c16, %c0_6], %4 {strides = array<i32>} : memref<18x48x4xf32, #tpu.memory_space<vmem>>, vector<16x16x4xf32>,
    %cst_7 = arith.constant 0.000000e+00 : f32
    %6 = vector.broadcast %cst_7 : f32 to vector<128x4xf32>
    %c0_i32 = arith.constant 0 : i32
    %7 = arith.addi %0, %c0_i32 : i32
    %8 = arith.index_cast %7 : i32 to index
    %c0_8 = arith.constant 0 : index
    %c0_9 = arith.constant 0 : index
    %9 = vector.load %arg9[%8, %c0_8, %c0_9] : memref<18x48x4xf32, #tpu.memory_space<vmem>>, vector<8x48x4xf32>
    %10 = vector.extract_strided_slice %9 {offsets = [0, 15, 0], sizes = [8, 16, 4], strides = [1, 1, 1]} : vector<8x48x4xf32> to vector<8x16x4xf32>
    %11 = vector.shape_cast %10 : vector<8x16x4xf32> to vector<128x4xf32>
    %12 = arith.truncf %11 : vector<128x4xf32> to vector<128x4xbf16>
    %c0_10 = arith.constant 0 : index
    %c0_11 = arith.constant 0 : index
    %c0_12 = arith.constant 0 : index
    %c0_13 = arith.constant 0 : index
    %13 = vector.load %arg4[%c0_10, %c0_11, %c0_12, %c0_13] : memref<3x3x4x4xbf16, #tpu.memory_space<vmem>>, vector<1x1x4x4xbf16>
    %14 = vector.shape_cast %13 : vector<1x1x4x4xbf16> to vector<4x4xbf16>
    %cst_14 = arith.constant dense<0.000000e+00> : vector<128x4xf32>
    %15 = tpu.matmul %12, %14, %cst_14 {dimension_numbers = #tpu.dot_dimension_numbers<[1], [0], [0], [1], [0, 0, 1, 1], [], []>} : vector<128x4xbf16>, vector<4x4xbf16>, vector<128x4xf32> -> vector<128x4xf32>
    %16 = arith.addf %6, %15 : vector<128x4xf32>
    %17 = vector.extract_strided_slice %9 {offsets = [0, 16, 0], sizes = [8, 16, 4], strides = [1, 1, 1]} : vector<8x48x4xf32> to vector<8x16x4xf32>
    %18 = vector.shape_cast %17 : vector<8x16x4xf32> to vector<128x4xf32>
    %19 = arith.truncf %18 : vector<128x4xf32> to vector<128x4xbf16>
    %c0_15 = arith.constant 0 : index
    %c1_16 = arith.constant 1 : index
    %c0_17 = arith.constant 0 : index
    %c0_18 = arith.constant 0 : index
    %20 = vector.load %arg4[%c0_15, %c1_16, %c0_17, %c0_18] : memref<3x3x4x4xbf16, #tpu.memory_space<vmem>>, vector<1x1x4x4xbf16>
    %21 = vector.shape_cast %20 : vector<1x1x4x4xbf16> to vector<4x4xbf16>
    %cst_19 = arith.constant dense<0.000000e+00> : vector<128x4xf32>
    %22 = tpu.matmul %19, %21, %cst_19 {dimension_numbers = #tpu.dot_dimension_numbers<[1], [0], [0], [1], [0, 0, 1, 1], [], []>} : vector<128x4xbf16>, vector<4x4xbf16>, vector<128x4xf32> -> vector<128x4xf32>
    %23 = arith.addf %16, %22 : vector<128x4xf32>
    %24 = vector.extract_strided_slice %9 {offsets = [0, 17, 0], sizes = [8, 16, 4], strides = [1, 1, 1]} : vector<8x48x4xf32> to vector<8x16x4xf32>
    %25 = vector.shape_cast %24 : vector<8x16x4xf32> to vector<128x4xf32>
    %26 = arith.truncf %25 : vector<128x4xf32> to vector<128x4xbf16>
    %c0_20 = arith.constant 0 : index
    %c2 = arith.constant 2 : index
    %c0_21 = arith.constant 0 : index
    %c0_22 = arith.constant 0 : index
    %27 = vector.load %arg4[%c0_20, %c2, %c0_21, %c0_22] : memref<3x3x4x4xbf16, #tpu.memory_space<vmem>>, vector<1x1x4x4xbf16>
    %28 = vector.shape_cast %27 : vector<1x1x4x4xbf16> to vector<4x4xbf16>
    %cst_23 = arith.constant dense<0.000000e+00> : vector<128x4xf32>
    %29 = tpu.matmul %26, %28, %cst_23 {dimension_numbers = #tpu.dot_dimension_numbers<[1], [0], [0], [1], [0, 0, 1, 1], [], []>} : vector<128x4xbf16>, vector<4x4xbf16>, vector<128x4xf32> -> vector<128x4xf32>
    %30 = arith.addf %23, %29 : vector<128x4xf32>
    %c1_i32 = arith.constant 1 : i32
    %31 = arith.addi %0, %c1_i32 : i32
    %32 = arith.index_cast %31 : i32 to index
    %c0_24 = arith.constant 0 : index
    %c0_25 = arith.constant 0 : index
    %33 = vector.load %arg9[%32, %c0_24, %c0_25] : memref<18x48x4xf32, #tpu.memory_space<vmem>>, vector<8x48x4xf32>
    %34 = vector.extract_strided_slice %33 {offsets = [0, 15, 0], sizes = [8, 16, 4], strides = [1, 1, 1]} : vector<8x48x4xf32> to vector<8x16x4xf32>
    %35 = vector.shape_cast %34 : vector<8x16x4xf32> to vector<128x4xf32>
    %36 = arith.truncf %35 : vector<128x4xf32> to vector<128x4xbf16>
    %c1_26 = arith.constant 1 : index
    %c0_27 = arith.constant 0 : index
    %c0_28 = arith.constant 0 : index
    %c0_29 = arith.constant 0 : index
    %37 = vector.load %arg4[%c1_26, %c0_27, %c0_28, %c0_29] : memref<3x3x4x4xbf16, #tpu.memory_space<vmem>>, vector<1x1x4x4xbf16>
    %38 = vector.shape_cast %37 : vector<1x1x4x4xbf16> to vector<4x4xbf16>
    %cst_30 = arith.constant dense<0.000000e+00> : vector<128x4xf32>
    %39 = tpu.matmul %36, %38, %cst_30 {dimension_numbers = #tpu.dot_dimension_numbers<[1], [0], [0], [1], [0, 0, 1, 1], [], []>} : vector<128x4xbf16>, vector<4x4xbf16>, vector<128x4xf32> -> vector<128x4xf32>
    %40 = arith.addf %30, %39 : vector<128x4xf32>
    %41 = vector.extract_strided_slice %33 {offsets = [0, 16, 0], sizes = [8, 16, 4], strides = [1, 1, 1]} : vector<8x48x4xf32> to vector<8x16x4xf32>
    %42 = vector.shape_cast %41 : vector<8x16x4xf32> to vector<128x4xf32>
    %43 = arith.truncf %42 : vector<128x4xf32> to vector<128x4xbf16>
    %c1_31 = arith.constant 1 : index
    %c1_32 = arith.constant 1 : index
    %c0_33 = arith.constant 0 : index
    %c0_34 = arith.constant 0 : index
    %44 = vector.load %arg4[%c1_31, %c1_32, %c0_33, %c0_34] : memref<3x3x4x4xbf16, #tpu.memory_space<vmem>>, vector<1x1x4x4xbf16>
    %45 = vector.shape_cast %44 : vector<1x1x4x4xbf16> to vector<4x4xbf16>
    %cst_35 = arith.constant dense<0.000000e+00> : vector<128x4xf32>
    %46 = tpu.matmul %43, %45, %cst_35 {dimension_numbers = #tpu.dot_dimension_numbers<[1], [0], [0], [1], [0, 0, 1, 1], [], []>} : vector<128x4xbf16>, vector<4x4xbf16>, vector<128x4xf32> -> vector<128x4xf32>
    %47 = arith.addf %40, %46 : vector<128x4xf32>
    %48 = vector.extract_strided_slice %33 {offsets = [0, 17, 0], sizes = [8, 16, 4], strides = [1, 1, 1]} : vector<8x48x4xf32> to vector<8x16x4xf32>
    %49 = vector.shape_cast %48 : vector<8x16x4xf32> to vector<128x4xf32>
    %50 = arith.truncf %49 : vector<128x4xf32> to vector<128x4xbf16>
    %c1_36 = arith.constant 1 : index
    %c2_37 = arith.constant 2 : index
    %c0_38 = arith.constant 0 : index
    %c0_39 = arith.constant 0 : index
    %51 = vector.load %arg4[%c1_36, %c2_37, %c0_38, %c0_39] : memref<3x3x4x4xbf16, #tpu.memory_space<vmem>>, vector<1x1x4x4xbf16>
    %52 = vector.shape_cast %51 : vector<1x1x4x4xbf16> to vector<4x4xbf16>
    %cst_40 = arith.constant dense<0.000000e+00> : vector<128x4xf32>
    %53 = tpu.matmul %50, %52, %cst_40 {dimension_numbers = #tpu.dot_dimension_numbers<[1], [0], [0], [1], [0, 0, 1, 1], [], []>} : vector<128x4xbf16>, vector<4x4xbf16>, vector<128x4xf32> -> vector<128x4xf32>
    %54 = arith.addf %47, %53 : vector<128x4xf32>
    %c2_i32 = arith.constant 2 : i32
    %55 = arith.addi %0, %c2_i32 : i32
    %56 = arith.index_cast %55 : i32 to index
    %c0_41 = arith.constant 0 : index
    %c0_42 = arith.constant 0 : index
    %57 = vector.load %arg9[%56, %c0_41, %c0_42] : memref<18x48x4xf32, #tpu.memory_space<vmem>>, vector<8x48x4xf32>
    %58 = vector.extract_strided_slice %57 {offsets = [0, 15, 0], sizes = [8, 16, 4], strides = [1, 1, 1]} : vector<8x48x4xf32> to vector<8x16x4xf32>
    %59 = vector.shape_cast %58 : vector<8x16x4xf32> to vector<128x4xf32>
    %60 = arith.truncf %59 : vector<128x4xf32> to vector<128x4xbf16>
    %c2_43 = arith.constant 2 : index
    %c0_44 = arith.constant 0 : index
    %c0_45 = arith.constant 0 : index
    %c0_46 = arith.constant 0 : index
    %61 = vector.load %arg4[%c2_43, %c0_44, %c0_45, %c0_46] : memref<3x3x4x4xbf16, #tpu.memory_space<vmem>>, vector<1x1x4x4xbf16>
    %62 = vector.shape_cast %61 : vector<1x1x4x4xbf16> to vector<4x4xbf16>
    %cst_47 = arith.constant dense<0.000000e+00> : vector<128x4xf32>
    %63 = tpu.matmul %60, %62, %cst_47 {dimension_numbers = #tpu.dot_dimension_numbers<[1], [0], [0], [1], [0, 0, 1, 1], [], []>} : vector<128x4xbf16>, vector<4x4xbf16>, vector<128x4xf32> -> vector<128x4xf32>
    %64 = arith.addf %54, %63 : vector<128x4xf32>
    %65 = vector.extract_strided_slice %57 {offsets = [0, 16, 0], sizes = [8, 16, 4], strides = [1, 1, 1]} : vector<8x48x4xf32> to vector<8x16x4xf32>
    %66 = vector.shape_cast %65 : vector<8x16x4xf32> to vector<128x4xf32>
    %67 = arith.truncf %66 : vector<128x4xf32> to vector<128x4xbf16>
    %c2_48 = arith.constant 2 : index
    %c1_49 = arith.constant 1 : index
    %c0_50 = arith.constant 0 : index
    %c0_51 = arith.constant 0 : index
    %68 = vector.load %arg4[%c2_48, %c1_49, %c0_50, %c0_51] : memref<3x3x4x4xbf16, #tpu.memory_space<vmem>>, vector<1x1x4x4xbf16>
    %69 = vector.shape_cast %68 : vector<1x1x4x4xbf16> to vector<4x4xbf16>
    %cst_52 = arith.constant dense<0.000000e+00> : vector<128x4xf32>
    %70 = tpu.matmul %67, %69, %cst_52 {dimension_numbers = #tpu.dot_dimension_numbers<[1], [0], [0], [1], [0, 0, 1, 1], [], []>} : vector<128x4xbf16>, vector<4x4xbf16>, vector<128x4xf32> -> vector<128x4xf32>
    %71 = arith.addf %64, %70 : vector<128x4xf32>
    %72 = vector.extract_strided_slice %57 {offsets = [0, 17, 0], sizes = [8, 16, 4], strides = [1, 1, 1]} : vector<8x48x4xf32> to vector<8x16x4xf32>
    %73 = vector.shape_cast %72 : vector<8x16x4xf32> to vector<128x4xf32>
    %74 = arith.truncf %73 : vector<128x4xf32> to vector<128x4xbf16>
    %c2_53 = arith.constant 2 : index
    %c2_54 = arith.constant 2 : index
    %c0_55 = arith.constant 0 : index
    %c0_56 = arith.constant 0 : index
    %75 = vector.load %arg4[%c2_53, %c2_54, %c0_55, %c0_56] : memref<3x3x4x4xbf16, #tpu.memory_space<vmem>>, vector<1x1x4x4xbf16>
    %76 = vector.shape_cast %75 : vector<1x1x4x4xbf16> to vector<4x4xbf16>
    %cst_57 = arith.constant dense<0.000000e+00> : vector<128x4xf32>
    %77 = tpu.matmul %74, %76, %cst_57 {dimension_numbers = #tpu.dot_dimension_numbers<[1], [0], [0], [1], [0, 0, 1, 1], [], []>} : vector<128x4xbf16>, vector<4x4xbf16>, vector<128x4xf32> -> vector<128x4xf32>
    %78 = arith.addf %71, %77 : vector<128x4xf32>
    %c0_58 = arith.constant 0 : index
    %c0_59 = arith.constant 0 : index
    %79 = vector.load %arg5[%c0_58, %c0_59] : memref<1x4xf32, #tpu.memory_space<vmem>>, vector<1x4xf32>
    %80 = vector.broadcast %79 : vector<1x4xf32> to vector<128x4xf32>
    %81 = arith.addf %78, %80 : vector<128x4xf32>
    %cst_60 = arith.constant dense<0.000000e+00> : vector<4xf32>
    %82 = vector.multi_reduction <add>, %81, %cst_60 [0] : vector<128x4xf32> to vector<4xf32>
    %83 = vector.shape_cast %82 : vector<4xf32> to vector<1x1x1x4xf32>
    %c0_61 = arith.constant 0 : index
    %c0_62 = arith.constant 0 : index
    %c0_63 = arith.constant 0 : index
    %c0_64 = arith.constant 0 : index
    %84 = vector.load %arg7[%c0_61, %c0_62, %c0_63, %c0_64] : memref<1x1x1x4xf32, #tpu.memory_space<vmem>>, vector<1x1x1x4xf32>
    tpu.vector_store %arg7[%c0_61, %c0_62, %c0_63, %c0_64], %83 {strides = array<i32>} : memref<1x1x1x4xf32, #tpu.memory_space<vmem>>, vector<1x1x1x4xf32>,
    %85 = arith.mulf %81, %81 : vector<128x4xf32>
    %cst_65 = arith.constant dense<0.000000e+00> : vector<4xf32>
    %86 = vector.multi_reduction <add>, %85, %cst_65 [0] : vector<128x4xf32> to vector<4xf32>
    %87 = vector.shape_cast %86 : vector<4xf32> to vector<1x1x1x4xf32>
    %c0_66 = arith.constant 0 : index
    %c0_67 = arith.constant 0 : index
    %c0_68 = arith.constant 0 : index
    %c0_69 = arith.constant 0 : index
    %88 = vector.load %arg8[%c0_66, %c0_67, %c0_68, %c0_69] : memref<1x1x1x4xf32, #tpu.memory_space<vmem>>, vector<1x1x1x4xf32>
    tpu.vector_store %arg8[%c0_66, %c0_67, %c0_68, %c0_69], %87 {strides = array<i32>} : memref<1x1x1x4xf32, #tpu.memory_space<vmem>>, vector<1x1x1x4xf32>,
    %89 = vector.shape_cast %81 : vector<128x4xf32> to vector<1x8x16x4xf32>
    %c0_70 = arith.constant 0 : index
    %c0_71 = arith.constant 0 : index
    %c0_72 = arith.constant 0 : index
    %c0_73 = arith.constant 0 : index
    %90 = vector.load %arg6[%c0_70, %c0_71, %c0_72, %c0_73] : memref<1x8x16x4xf32, #tpu.memory_space<vmem>>, vector<1x8x16x4xf32>
    tpu.vector_store %arg6[%c0_70, %c0_71, %c0_72, %c0_73], %89 {strides = array<i32>} : memref<1x8x16x4xf32, #tpu.memory_space<vmem>>, vector<1x8x16x4xf32>,
    return
  }
  func.func @transform_0(%arg0: i32, %arg1: i32, %arg2: i32) -> (i32, i32, i32, i32) {
    %c0_i32 = arith.constant 0 : i32
    %c0_i32_0 = arith.constant 0 : i32
    %c0_i32_1 = arith.constant 0 : i32
    %c0_i32_2 = arith.constant 0 : i32
    return %arg0, %c0_i32, %c0_i32_0, %c0_i32_1 : i32, i32, i32, i32
  }
  func.func @transform_1(%arg0: i32, %arg1: i32, %arg2: i32) -> (i32, i32, i32, i32) {
    %c0_i32 = arith.constant 0 : i32
    %c0_i32_0 = arith.constant 0 : i32
    %c0_i32_1 = arith.constant 0 : i32
    %c0_i32_2 = arith.constant 0 : i32
    return %c0_i32, %c0_i32_0, %c0_i32_1, %arg2 : i32, i32, i32, i32
  }
  func.func @transform_2(%arg0: i32, %arg1: i32, %arg2: i32) -> (i32, i32) {
    %c0_i32 = arith.constant 0 : i32
    %c0_i32_0 = arith.constant 0 : i32
    return %c0_i32, %arg2 : i32, i32
  }
  func.func @transform_3(%arg0: i32, %arg1: i32, %arg2: i32) -> (i32, i32, i32, i32) {
    %c0_i32 = arith.constant 0 : i32
    %c0_i32_0 = arith.constant 0 : i32
    return %arg0, %arg1, %c0_i32, %arg2 : i32, i32, i32, i32
  }
  func.func @transform_4(%arg0: i32, %arg1: i32, %arg2: i32) -> (i32, i32, i32, i32) {
    %c0_i32 = arith.constant 0 : i32
    %c0_i32_0 = arith.constant 0 : i32
    return %arg0, %arg1, %c0_i32, %arg2 : i32, i32, i32, i32
  }
  func.func @transform_5(%arg0: i32, %arg1: i32, %arg2: i32) -> (i32, i32, i32, i32) {
    %c0_i32 = arith.constant 0 : i32
    %c0_i32_0 = arith.constant 0 : i32
    return %arg0, %arg1, %c0_i32, %arg2 : i32, i32, i32, i32
  }
}

module attributes {stable_mosaic.version = 11 : i64} {
  func.func @_scale_relu_kernel(%arg0: i32, %arg1: memref<2x1024xf32, #tpu.memory_space<vmem>>, %arg2: memref<1x1024xf32, #tpu.memory_space<vmem>>, %arg3: memref<1x1024xf32, #tpu.memory_space<vmem>>, %arg4: memref<2x1024xf32, #tpu.memory_space<vmem>>) attributes {dimension_semantics = [#tpu.dimension_semantics<parallel>], iteration_bounds = array<i64: 1>, scalar_prefetch = 0 : i64, scratch_operands = 0 : i64, tpu.core_type = #tpu.core_type<tc>, window_params = [{transform_indices = @transform_0, window_bounds = array<i64: 2, 1024>}, {pipeline_mode = #tpu.pipeline_mode<synchronous>, transform_indices = @transform_1, window_bounds = array<i64: 1, 1024>}, {pipeline_mode = #tpu.pipeline_mode<synchronous>, transform_indices = @transform_2, window_bounds = array<i64: 1, 1024>}, {transform_indices = @transform_3, window_bounds = array<i64: 2, 1024>}]} {
    %c0 = arith.constant 0 : index
    %c0_0 = arith.constant 0 : index
    %0 = vector.load %arg1[%c0, %c0_0] : memref<2x1024xf32, #tpu.memory_space<vmem>>, vector<2x1024xf32>
    %c0_1 = arith.constant 0 : index
    %c0_2 = arith.constant 0 : index
    %1 = vector.load %arg2[%c0_1, %c0_2] : memref<1x1024xf32, #tpu.memory_space<vmem>>, vector<1x1024xf32>
    %2 = vector.broadcast %1 : vector<1x1024xf32> to vector<2x1024xf32>
    %3 = arith.mulf %0, %2 : vector<2x1024xf32>
    %c0_3 = arith.constant 0 : index
    %c0_4 = arith.constant 0 : index
    %4 = vector.load %arg3[%c0_3, %c0_4] : memref<1x1024xf32, #tpu.memory_space<vmem>>, vector<1x1024xf32>
    %5 = vector.broadcast %4 : vector<1x1024xf32> to vector<2x1024xf32>
    %6 = arith.addf %3, %5 : vector<2x1024xf32>
    %cst = arith.constant 0.000000e+00 : f32
    %7 = vector.broadcast %cst : f32 to vector<2x1024xf32>
    %8 = arith.maximumf %6, %7 : vector<2x1024xf32>
    %c0_5 = arith.constant 0 : index
    %c0_6 = arith.constant 0 : index
    %9 = vector.load %arg4[%c0_5, %c0_6] : memref<2x1024xf32, #tpu.memory_space<vmem>>, vector<2x1024xf32>
    tpu.vector_store %arg4[%c0_5, %c0_6], %8 {strides = array<i32>} : memref<2x1024xf32, #tpu.memory_space<vmem>>, vector<2x1024xf32>,
    return
  }
  func.func @transform_0(%arg0: i32) -> (i32, i32) {
    %c0_i32 = arith.constant 0 : i32
    %c0_i32_0 = arith.constant 0 : i32
    return %arg0, %c0_i32 : i32, i32
  }
  func.func @transform_1(%arg0: i32) -> (i32, i32) {
    %c0_i32 = arith.constant 0 : i32
    %c0_i32_0 = arith.constant 0 : i32
    %c0_i32_1 = arith.constant 0 : i32
    return %c0_i32, %c0_i32_0 : i32, i32
  }
  func.func @transform_2(%arg0: i32) -> (i32, i32) {
    %c0_i32 = arith.constant 0 : i32
    %c0_i32_0 = arith.constant 0 : i32
    %c0_i32_1 = arith.constant 0 : i32
    return %c0_i32, %c0_i32_0 : i32, i32
  }
  func.func @transform_3(%arg0: i32) -> (i32, i32) {
    %c0_i32 = arith.constant 0 : i32
    %c0_i32_0 = arith.constant 0 : i32
    return %arg0, %c0_i32 : i32, i32
  }
}

module attributes {stable_mosaic.version = 11 : i64} {
  func.func @_scale_add_relu_kernel(%arg0: i32, %arg1: memref<2x1024xf32, #tpu.memory_space<vmem>>, %arg2: memref<2x1024xf32, #tpu.memory_space<vmem>>, %arg3: memref<1x1024xf32, #tpu.memory_space<vmem>>, %arg4: memref<1x1024xf32, #tpu.memory_space<vmem>>, %arg5: memref<2x1024xf32, #tpu.memory_space<vmem>>) attributes {dimension_semantics = [#tpu.dimension_semantics<parallel>], iteration_bounds = array<i64: 1>, scalar_prefetch = 0 : i64, scratch_operands = 0 : i64, tpu.core_type = #tpu.core_type<tc>, window_params = [{transform_indices = @transform_0, window_bounds = array<i64: 2, 1024>}, {transform_indices = @transform_1, window_bounds = array<i64: 2, 1024>}, {pipeline_mode = #tpu.pipeline_mode<synchronous>, transform_indices = @transform_2, window_bounds = array<i64: 1, 1024>}, {pipeline_mode = #tpu.pipeline_mode<synchronous>, transform_indices = @transform_3, window_bounds = array<i64: 1, 1024>}, {transform_indices = @transform_4, window_bounds = array<i64: 2, 1024>}]} {
    %c0 = arith.constant 0 : index
    %c0_0 = arith.constant 0 : index
    %0 = vector.load %arg1[%c0, %c0_0] : memref<2x1024xf32, #tpu.memory_space<vmem>>, vector<2x1024xf32>
    %c0_1 = arith.constant 0 : index
    %c0_2 = arith.constant 0 : index
    %1 = vector.load %arg3[%c0_1, %c0_2] : memref<1x1024xf32, #tpu.memory_space<vmem>>, vector<1x1024xf32>
    %2 = vector.broadcast %1 : vector<1x1024xf32> to vector<2x1024xf32>
    %3 = arith.mulf %0, %2 : vector<2x1024xf32>
    %c0_3 = arith.constant 0 : index
    %c0_4 = arith.constant 0 : index
    %4 = vector.load %arg4[%c0_3, %c0_4] : memref<1x1024xf32, #tpu.memory_space<vmem>>, vector<1x1024xf32>
    %5 = vector.broadcast %4 : vector<1x1024xf32> to vector<2x1024xf32>
    %6 = arith.addf %3, %5 : vector<2x1024xf32>
    %c0_5 = arith.constant 0 : index
    %c0_6 = arith.constant 0 : index
    %7 = vector.load %arg2[%c0_5, %c0_6] : memref<2x1024xf32, #tpu.memory_space<vmem>>, vector<2x1024xf32>
    %8 = arith.addf %6, %7 : vector<2x1024xf32>
    %cst = arith.constant 0.000000e+00 : f32
    %9 = vector.broadcast %cst : f32 to vector<2x1024xf32>
    %10 = arith.maximumf %8, %9 : vector<2x1024xf32>
    %c0_7 = arith.constant 0 : index
    %c0_8 = arith.constant 0 : index
    %11 = vector.load %arg5[%c0_7, %c0_8] : memref<2x1024xf32, #tpu.memory_space<vmem>>, vector<2x1024xf32>
    tpu.vector_store %arg5[%c0_7, %c0_8], %10 {strides = array<i32>} : memref<2x1024xf32, #tpu.memory_space<vmem>>, vector<2x1024xf32>,
    return
  }
  func.func @transform_0(%arg0: i32) -> (i32, i32) {
    %c0_i32 = arith.constant 0 : i32
    %c0_i32_0 = arith.constant 0 : i32
    return %arg0, %c0_i32 : i32, i32
  }
  func.func @transform_1(%arg0: i32) -> (i32, i32) {
    %c0_i32 = arith.constant 0 : i32
    %c0_i32_0 = arith.constant 0 : i32
    return %arg0, %c0_i32 : i32, i32
  }
  func.func @transform_2(%arg0: i32) -> (i32, i32) {
    %c0_i32 = arith.constant 0 : i32
    %c0_i32_0 = arith.constant 0 : i32
    %c0_i32_1 = arith.constant 0 : i32
    return %c0_i32, %c0_i32_0 : i32, i32
  }
  func.func @transform_3(%arg0: i32) -> (i32, i32) {
    %c0_i32 = arith.constant 0 : i32
    %c0_i32_0 = arith.constant 0 : i32
    %c0_i32_1 = arith.constant 0 : i32
    return %c0_i32, %c0_i32_0 : i32, i32
  }
  func.func @transform_4(%arg0: i32) -> (i32, i32) {
    %c0_i32 = arith.constant 0 : i32
    %c0_i32_0 = arith.constant 0 : i32
    return %arg0, %c0_i32 : i32, i32
  }
}

</mosaic_0001>

<llo_original>
// kernel: tile.28
$region0: #{tile.28}
  #allocation0 [shape = 's32[1]{0}', space=sflag, size = 0x4, scoped, tag = 'scoped memory for tile.28']
  %s0 = inlined_call_operand.vmem [shape: f32[4], index: 0, kind: input, shape index: {}]
  %s1 = inlined_call_operand.vmem [shape: f32[256,4], index: 1, kind: output, shape index: {}]
  // Predicated region
  $region2: #{tile.28} parent=0 // pred_check
    _
  $region3: #{tile.28} parent=0 // pred_check_branch
    %3 = sbr.rel (0) target = $region5
  $region4: #{tile.28} parent=0 // pred_region
    _
  $region5: #{tile.28} parent=0 // pred_fallthru
    _
  %v4 = vld [vmem:[%s0] ss:$0 sm:$0xff]
  %5 = vst [vmem:[%s1] sm:$0xff] %v4
  %s6 = scalar_lea.vmem %s1, 8
  %7 = vst [vmem:[%s6] sm:$0xff] %v4
  %s8 = scalar_lea.vmem %s1, 16
  %9 = vst [vmem:[%s8] sm:$0xff] %v4
  %s10 = scalar_lea.vmem %s1, 24
  %11 = vst [vmem:[%s10] sm:$0xff] %v4
  %s12 = scalar_lea.vmem %s1, 32
  %13 = vst [vmem:[%s12] sm:$0xff] %v4
  %s14 = scalar_lea.vmem %s1, 40
  %15 = vst [vmem:[%s14] sm:$0xff] %v4
  %s16 = scalar_lea.vmem %s1, 48
  %17 = vst [vmem:[%s16] sm:$0xff] %v4
  %s18 = scalar_lea.vmem %s1, 56
  %19 = vst [vmem:[%s18] sm:$0xff] %v4
  %s20 = scalar_lea.vmem %s1, 64
  %21 = vst [vmem:[%s20] sm:$0xff] %v4
  %s22 = scalar_lea.vmem %s1, 72
  %23 = vst [vmem:[%s22] sm:$0xff] %v4
  %s24 = scalar_lea.vmem %s1, 80
  %25 = vst [vmem:[%s24] sm:$0xff] %v4
  %s26 = scalar_lea.vmem %s1, 88
  %27 = vst [vmem:[%s26] sm:$0xff] %v4
  %s28 = scalar_lea.vmem %s1, 96
  %29 = vst [vmem:[%s28] sm:$0xff] %v4
  %s30 = scalar_lea.vmem %s1, 104
  %31 = vst [vmem:[%s30] sm:$0xff] %v4
  %s32 = scalar_lea.vmem %s1, 112
  %33 = vst [vmem:[%s32] sm:$0xff] %v4
  %s34 = scalar_lea.vmem %s1, 120
  %35 = vst [vmem:[%s34] sm:$0xff] %v4
  %s36 = scalar_lea.vmem %s1, 128
  %37 = vst [vmem:[%s36] sm:$0xff] %v4
  %s38 = scalar_lea.vmem %s1, 136
  %39 = vst [vmem:[%s38] sm:$0xff] %v4
  %s40 = scalar_lea.vmem %s1, 144
  %41 = vst [vmem:[%s40] sm:$0xff] %v4
  %s42 = scalar_lea.vmem %s1, 152
  %43 = vst [vmem:[%s42] sm:$0xff] %v4
  %s44 = scalar_lea.vmem %s1, 160
  %45 = vst [vmem:[%s44] sm:$0xff] %v4
  %s46 = scalar_lea.vmem %s1, 168
  %47 = vst [vmem:[%s46] sm:$0xff] %v4
  %s48 = scalar_lea.vmem %s1, 176
  %49 = vst [vmem:[%s48] sm:$0xff] %v4
  %s50 = scalar_lea.vmem %s1, 184
  %51 = vst [vmem:[%s50] sm:$0xff] %v4
  %s52 = scalar_lea.vmem %s1, 192
  %53 = vst [vmem:[%s52] sm:$0xff] %v4
  %s54 = scalar_lea.vmem %s1, 200
  %55 = vst [vmem:[%s54] sm:$0xff] %v4
  %s56 = scalar_lea.vmem %s1, 208
  %57 = vst [vmem:[%s56] sm:$0xff] %v4
  %s58 = scalar_lea.vmem %s1, 216
  %59 = vst [vmem:[%s58] sm:$0xff] %v4
  %s60 = scalar_lea.vmem %s1, 224
  %61 = vst [vmem:[%s60] sm:$0xff] %v4
  %s62 = scalar_lea.vmem %s1, 232
  %63 = vst [vmem:[%s62] sm:$0xff] %v4
  %s64 = scalar_lea.vmem %s1, 240
  %65 = vst [vmem:[%s64] sm:$0xff] %v4
  %s66 = scalar_lea.vmem %s1, 248
  %67 = vst [vmem:[%s66] sm:$0xff] %v4

// kernel: tile.29
$region0: #{tile.29}
  %s0 = inlined_call_operand.vmem [shape: f32[256,4], index: 0, kind: input, shape index: {}]
  %s1 = inlined_call_operand.vmem [shape: f32[1,1024], index: 1, kind: output, shape index: {}]
  $region1: #{tile.29} parent=0
    #allocation0 [shape = 'u8[32768]{0}', space=vmem, size = 0x8000, scoped, tag = 'scoped mem for output reshape']
    %v2 = vld [vmem:[%s0] sm:$0x1]
    %s3 = scalar_lea.vmem %s0, 31
    %v4 = vld [vmem:[%s3] sm:$0x2]
    %vm5 = vcmask 1041409
    %v6 = vsel %vm5, %v4, %v2
    %s7 = scalar_lea.vmem %s0, 62
    %v8 = vld [vmem:[%s7] sm:$0x4]
    %vm9 = vcmask 1042434
    %v10 = vsel %vm9, %v8, %v6
    %s11 = scalar_lea.vmem %s0, 93
    %v12 = vld [vmem:[%s11] sm:$0x8]
    %vm13 = vcmask 1043459
    %v14 = vsel %vm13, %v12, %v10
    %s15 = scalar_lea.vmem %s0, 124
    %v16 = vld [vmem:[%s15] sm:$0x10]
    %vm17 = vcmask 1044484
    %v18 = vsel %vm17, %v16, %v14
    %s19 = scalar_lea.vmem %s0, 155
    %v20 = vld [vmem:[%s19] sm:$0x20]
    %vm21 = vcmask 1045509
    %v22 = vsel %vm21, %v20, %v18
    %s23 = scalar_lea.vmem %s0, 186
    %v24 = vld [vmem:[%s23] sm:$0x40]
    %vm25 = vcmask 1046534
    %v26 = vsel %vm25, %v24, %v22
    %s27 = scalar_lea.vmem %s0, 217
    %v28 = vld [vmem:[%s27] sm:$0x80]
    %vm29 = vcmask 1047559
    %v30 = vsel %vm29, %v28, %v26
    %vm31 = vcmask 31744
    %32 = vst.msk [vmem:[#allocation0] ss:$8 sm:$0xf] %vm31, %v30
    %33 = vst.msk [vmem:[#allocation0] ss:$8 sm:$0xf0] %vm31, %v30
    %s34 = scalar_lea.vmem %s0, 31
    %v35 = vld [vmem:[%s34] sm:$0x1]
    %s36 = scalar_lea.vmem %s0, 62
    %v37 = vld [vmem:[%s36] sm:$0x2]
    %vm38 = vcmask 1041409
    %v39 = vsel %vm38, %v37, %v35
    %s40 = scalar_lea.vmem %s0, 93
    %v41 = vld [vmem:[%s40] sm:$0x4]
    %vm42 = vcmask 1042434
    %v43 = vsel %vm42, %v41, %v39
    %s44 = scalar_lea.vmem %s0, 124
    %v45 = vld [vmem:[%s44] sm:$0x8]
    %vm46 = vcmask 1043459
    %v47 = vsel %vm46, %v45, %v43
    %s48 = scalar_lea.vmem %s0, 155
    %v49 = vld [vmem:[%s48] sm:$0x10]
    %vm50 = vcmask 1044484
    %v51 = vsel %vm50, %v49, %v47
    %s52 = scalar_lea.vmem %s0, 186
    %v53 = vld [vmem:[%s52] sm:$0x20]
    %vm54 = vcmask 1045509
    %v55 = vsel %vm54, %v53, %v51
    %s56 = scalar_lea.vmem %s0, 217
    %v57 = vld [vmem:[%s56] sm:$0x40]
    %vm58 = vcmask 1046534
    %v59 = vsel %vm58, %v57, %v55
    %s60 = scalar_lea.vmem %s0, 248
    %v61 = vld [vmem:[%s60] sm:$0x80]
    %vm62 = vcmask 1047559
    %v63 = vsel %vm62, %v61, %v59
    %64 = vrot.lane.b32.xlu0 %v63, 124
    %v65 = vpop.permute.xlu0 %64
    %vm66 = vcmask 1048544
    %67 = vst.msk [vmem:[#allocation0] ss:$8 sm:$0xf] %vm66, %v65
    %68 = vst.msk [vmem:[#allocation0] ss:$8 sm:$0xf0] %vm66, %v65
    %s69 = scalar_lea.vmem %s0, 30
    %v70 = vld [vmem:[%s69] sm:$0x1]
    %s71 = scalar_lea.vmem %s0, 61
    %v72 = vld [vmem:[%s71] sm:$0x2]
    %vm73 = vcmask 1041409
    %v74 = vsel %vm73, %v72, %v70
    %s75 = scalar_lea.vmem %s0, 92
    %v76 = vld [vmem:[%s75] sm:$0x4]
    %vm77 = vcmask 1042434
    %v78 = vsel %vm77, %v76, %v74
    %s79 = scalar_lea.vmem %s0, 123
    %v80 = vld [vmem:[%s79] sm:$0x8]
    %vm81 = vcmask 1043459
    %v82 = vsel %vm81, %v80, %v78
    %s83 = scalar_lea.vmem %s0, 154
    %v84 = vld [vmem:[%s83] sm:$0x10]
    %vm85 = vcmask 1044484
    %v86 = vsel %vm85, %v84, %v82
    %s87 = scalar_lea.vmem %s0, 185
    %v88 = vld [vmem:[%s87] sm:$0x20]
    %vm89 = vcmask 1045509
    %v90 = vsel %vm89, %v88, %v86
    %s91 = scalar_lea.vmem %s0, 216
    %v92 = vld [vmem:[%s91] sm:$0x40]
    %vm93 = vcmask 1046534
    %v94 = vsel %vm93, %v92, %v90
    %s95 = scalar_lea.vmem %s0, 247
    %v96 = vld [vmem:[%s95] sm:$0x80]
    %vm97 = vcmask 1047559
    %v98 = vsel %vm97, %v96, %v94
    %99 = vrot.lane.b32.xlu0 %v98, 120
    %v100 = vpop.permute.xlu0 %99
    %vm101 = vcmask 1015744
    %102 = vst.msk [vmem:[#allocation0] ss:$8 sm:$0xf] %vm101, %v100
    %103 = vst.msk [vmem:[#allocation0] ss:$8 sm:$0xf0] %vm101, %v100
    %s104 = scalar_lea.vmem %s0, 29
    %v105 = vld [vmem:[%s104] sm:$0x1]
    %s106 = scalar_lea.vmem %s0, 60
    %v107 = vld [vmem:[%s106] sm:$0x2]
    %vm108 = vcmask 1041409
    %v109 = vsel %vm108, %v107, %v105
    %s110 = scalar_lea.vmem %s0, 91
    %v111 = vld [vmem:[%s110] sm:$0x4]
    %vm112 = vcmask 1042434
    %v113 = vsel %vm112, %v111, %v109
    %s114 = scalar_lea.vmem %s0, 122
    %v115 = vld [vmem:[%s114] sm:$0x8]
    %vm116 = vcmask 1043459
    %v117 = vsel %vm116, %v115, %v113
    %s118 = scalar_lea.vmem %s0, 153
    %v119 = vld [vmem:[%s118] sm:$0x10]
    %vm120 = vcmask 1044484
    %v121 = vsel %vm120, %v119, %v117
    %s122 = scalar_lea.vmem %s0, 184
    %v123 = vld [vmem:[%s122] sm:$0x20]
    %vm124 = vcmask 1045509
    %v125 = vsel %vm124, %v123, %v121
    %s126 = scalar_lea.vmem %s0, 215
    %v127 = vld [vmem:[%s126] sm:$0x40]
    %vm128 = vcmask 1046534
    %v129 = vsel %vm128, %v127, %v125
    %s130 = scalar_lea.vmem %s0, 246
    %v131 = vld [vmem:[%s130] sm:$0x80]
    %vm132 = vcmask 1047559
    %v133 = vsel %vm132, %v131, %v129
    %134 = vrot.lane.b32.xlu0 %v133, 116
    %v135 = vpop.permute.xlu0 %134
    %vm136 = vcmask 982944
    %137 = vst.msk [vmem:[#allocation0] ss:$8 sm:$0xf] %vm136, %v135
    %138 = vst.msk [vmem:[#allocation0] ss:$8 sm:$0xf0] %vm136, %v135
    %s139 = scalar_lea.vmem %s0, 28
    %v140 = vld [vmem:[%s139] sm:$0x1]
    %s141 = scalar_lea.vmem %s0, 59
    %v142 = vld [vmem:[%s141] sm:$0x2]
    %vm143 = vcmask 1041409
    %v144 = vsel %vm143, %v142, %v140
    %s145 = scalar_lea.vmem %s0, 90
    %v146 = vld [vmem:[%s145] sm:$0x4]
    %vm147 = vcmask 1042434
    %v148 = vsel %vm147, %v146, %v144
    %s149 = scalar_lea.vmem %s0, 121
    %v150 = vld [vmem:[%s149] sm:$0x8]
    %vm151 = vcmask 1043459
    %v152 = vsel %vm151, %v150, %v148
    %s153 = scalar_lea.vmem %s0, 152
    %v154 = vld [vmem:[%s153] sm:$0x10]
    %vm155 = vcmask 1044484
    %v156 = vsel %vm155, %v154, %v152
    %s157 = scalar_lea.vmem %s0, 183
    %v158 = vld [vmem:[%s157] sm:$0x20]
    %vm159 = vcmask 1045509
    %v160 = vsel %vm159, %v158, %v156
    %s161 = scalar_lea.vmem %s0, 214
    %v162 = vld [vmem:[%s161] sm:$0x40]
    %vm163 = vcmask 1046534
    %v164 = vsel %vm163, %v162, %v160
    %s165 = scalar_lea.vmem %s0, 245
    %v166 = vld [vmem:[%s165] sm:$0x80]
    %vm167 = vcmask 1047559
    %v168 = vsel %vm167, %v166, %v164
    %169 = vrot.lane.b32.xlu0 %v168, 112
    %v170 = vpop.permute.xlu0 %169
    %vm171 = vcmask 950144
    %172 = vst.msk [vmem:[#allocation0] ss:$8 sm:$0xf] %vm171, %v170
    %173 = vst.msk [vmem:[#allocation0] ss:$8 sm:$0xf0] %vm171, %v170
    %s174 = scalar_lea.vmem %s0, 27
    %v175 = vld [vmem:[%s174] sm:$0x1]
    %s176 = scalar_lea.vmem %s0, 58
    %v177 = vld [vmem:[%s176] sm:$0x2]
    %vm178 = vcmask 1041409
    %v179 = vsel %vm178, %v177, %v175
    %s180 = scalar_lea.vmem %s0, 89
    %v181 = vld [vmem:[%s180] sm:$0x4]
    %vm182 = vcmask 1042434
    %v183 = vsel %vm182, %v181, %v179
    %s184 = scalar_lea.vmem %s0, 120
    %v185 = vld [vmem:[%s184] sm:$0x8]
    %vm186 = vcmask 1043459
    %v187 = vsel %vm186, %v185, %v183
    %s188 = scalar_lea.vmem %s0, 151
    %v189 = vld [vmem:[%s188] sm:$0x10]
    %vm190 = vcmask 1044484
    %v191 = vsel %vm190, %v189, %v187
    %s192 = scalar_lea.vmem %s0, 182
    %v193 = vld [vmem:[%s192] sm:$0x20]
    %vm194 = vcmask 1045509
    %v195 = vsel %vm194, %v193, %v191
    %s196 = scalar_lea.vmem %s0, 213
    %v197 = vld [vmem:[%s196] sm:$0x40]
    %vm198 = vcmask 1046534
    %v199 = vsel %vm198, %v197, %v195
    %s200 = scalar_lea.vmem %s0, 244
    %v201 = vld [vmem:[%s200] sm:$0x80]
    %vm202 = vcmask 1047559
    %v203 = vsel %vm202, %v201, %v199
    %204 = vrot.lane.b32.xlu0 %v203, 108
    %v205 = vpop.permute.xlu0 %204
    %vm206 = vcmask 917344
    %207 = vst.msk [vmem:[#allocation0] ss:$8 sm:$0xf] %vm206, %v205
    %208 = vst.msk [vmem:[#allocation0] ss:$8 sm:$0xf0] %vm206, %v205
    %s209 = scalar_lea.vmem %s0, 26
    %v210 = vld [vmem:[%s209] sm:$0x1]
    %s211 = scalar_lea.vmem %s0, 57
    %v212 = vld [vmem:[%s211] sm:$0x2]
    %vm213 = vcmask 1041409
    %v214 = vsel %vm213, %v212, %v210
    %s215 = scalar_lea.vmem %s0, 88
    %v216 = vld [vmem:[%s215] sm:$0x4]
    %vm217 = vcmask 1042434
    %v218 = vsel %vm217, %v216, %v214
    %s219 = scalar_lea.vmem %s0, 119
    %v220 = vld [vmem:[%s219] sm:$0x8]
    %vm221 = vcmask 1043459
    %v222 = vsel %vm221, %v220, %v218
    %s223 = scalar_lea.vmem %s0, 150
    %v224 = vld [vmem:[%s223] sm:$0x10]
    %vm225 = vcmask 1044484
    %v226 = vsel %vm225, %v224, %v222
    %s227 = scalar_lea.vmem %s0, 181
    %v228 = vld [vmem:[%s227] sm:$0x20]
    %vm229 = vcmask 1045509
    %v230 = vsel %vm229, %v228, %v226
    %s231 = scalar_lea.vmem %s0, 212
    %v232 = vld [vmem:[%s231] sm:$0x40]
    %vm233 = vcmask 1046534
    %v234 = vsel %vm233, %v232, %v230
    %s235 = scalar_lea.vmem %s0, 243
    %v236 = vld [vmem:[%s235] sm:$0x80]
    %vm237 = vcmask 1047559
    %v238 = vsel %vm237, %v236, %v234
    %239 = vrot.lane.b32.xlu0 %v238, 104
    %v240 = vpop.permute.xlu0 %239
    %vm241 = vcmask 884544
    %242 = vst.msk [vmem:[#allocation0] ss:$8 sm:$0xf] %vm241, %v240
    %243 = vst.msk [vmem:[#allocation0] ss:$8 sm:$0xf0] %vm241, %v240
    %s244 = scalar_lea.vmem %s0, 25
    %v245 = vld [vmem:[%s244] sm:$0x1]
    %s246 = scalar_lea.vmem %s0, 56
    %v247 = vld [vmem:[%s246] sm:$0x2]
    %vm248 = vcmask 1041409
    %v249 = vsel %vm248, %v247, %v245
    %s250 = scalar_lea.vmem %s0, 87
    %v251 = vld [vmem:[%s250] sm:$0x4]
    %vm252 = vcmask 1042434
    %v253 = vsel %vm252, %v251, %v249
    %s254 = scalar_lea.vmem %s0, 118
    %v255 = vld [vmem:[%s254] sm:$0x8]
    %vm256 = vcmask 1043459
    %v257 = vsel %vm256, %v255, %v253
    %s258 = scalar_lea.vmem %s0, 149
    %v259 = vld [vmem:[%s258] sm:$0x10]
    %vm260 = vcmask 1044484
    %v261 = vsel %vm260, %v259, %v257
    %s262 = scalar_lea.vmem %s0, 180
    %v263 = vld [vmem:[%s262] sm:$0x20]
    %vm264 = vcmask 1045509
    %v265 = vsel %vm264, %v263, %v261
    %s266 = scalar_lea.vmem %s0, 211
    %v267 = vld [vmem:[%s266] sm:$0x40]
    %vm268 = vcmask 1046534
    %v269 = vsel %vm268, %v267, %v265
    %s270 = scalar_lea.vmem %s0, 242
    %v271 = vld [vmem:[%s270] sm:$0x80]
    %vm272 = vcmask 1047559
    %v273 = vsel %vm272, %v271, %v269
    %274 = vrot.lane.b32.xlu0 %v273, 100
    %v275 = vpop.permute.xlu0 %274
    %vm276 = vcmask 851744
    %277 = vst.msk [vmem:[#allocation0] ss:$8 sm:$0xf] %vm276, %v275
    %278 = vst.msk [vmem:[#allocation0] ss:$8 sm:$0xf0] %vm276, %v275
    %s279 = scalar_lea.vmem %s0, 24
    %v280 = vld [vmem:[%s279] sm:$0x1]
    %s281 = scalar_lea.vmem %s0, 55
    %v282 = vld [vmem:[%s281] sm:$0x2]
    %vm283 = vcmask 1041409
    %v284 = vsel %vm283, %v282, %v280
    %s285 = scalar_lea.vmem %s0, 86
    %v286 = vld [vmem:[%s285] sm:$0x4]
    %vm287 = vcmask 1042434
    %v288 = vsel %vm287, %v286, %v284
    %s289 = scalar_lea.vmem %s0, 117
    %v290 = vld [vmem:[%s289] sm:$0x8]
    %vm291 = vcmask 1043459
    %v292 = vsel %vm291, %v290, %v288
    %s293 = scalar_lea.vmem %s0, 148
    %v294 = vld [vmem:[%s293] sm:$0x10]
    %vm295 = vcmask 1044484
    %v296 = vsel %vm295, %v294, %v292
    %s297 = scalar_lea.vmem %s0, 179
    %v298 = vld [vmem:[%s297] sm:$0x20]
    %vm299 = vcmask 1045509
    %v300 = vsel %vm299, %v298, %v296
    %s301 = scalar_lea.vmem %s0, 210
    %v302 = vld [vmem:[%s301] sm:$0x40]
    %vm303 = vcmask 1046534
    %v304 = vsel %vm303, %v302, %v300
    %s305 = scalar_lea.vmem %s0, 241
    %v306 = vld [vmem:[%s305] sm:$0x80]
    %vm307 = vcmask 1047559
    %v308 = vsel %vm307, %v306, %v304
    %309 = vrot.lane.b32.xlu0 %v308, 96
    %v310 = vpop.permute.xlu0 %309
    %vm311 = vcmask 818944
    %312 = vst.msk [vmem:[#allocation0] ss:$8 sm:$0xf] %vm311, %v310
    %313 = vst.msk [vmem:[#allocation0] ss:$8 sm:$0xf0] %vm311, %v310
    %s314 = scalar_lea.vmem %s0, 23
    %v315 = vld [vmem:[%s314] sm:$0x1]
    %s316 = scalar_lea.vmem %s0, 54
    %v317 = vld [vmem:[%s316] sm:$0x2]
    %vm318 = vcmask 1041409
    %v319 = vsel %vm318, %v317, %v315
    %s320 = scalar_lea.vmem %s0, 85
    %v321 = vld [vmem:[%s320] sm:$0x4]
    %vm322 = vcmask 1042434
    %v323 = vsel %vm322, %v321, %v319
    %s324 = scalar_lea.vmem %s0, 116
    %v325 = vld [vmem:[%s324] sm:$0x8]
    %vm326 = vcmask 1043459
    %v327 = vsel %vm326, %v325, %v323
    %s328 = scalar_lea.vmem %s0, 147
    %v329 = vld [vmem:[%s328] sm:$0x10]
    %vm330 = vcmask 1044484
    %v331 = vsel %vm330, %v329, %v327
    %s332 = scalar_lea.vmem %s0, 178
    %v333 = vld [vmem:[%s332] sm:$0x20]
    %vm334 = vcmask 1045509
    %v335 = vsel %vm334, %v333, %v331
    %s336 = scalar_lea.vmem %s0, 209
    %v337 = vld [vmem:[%s336] sm:$0x40]
    %vm338 = vcmask 1046534
    %v339 = vsel %vm338, %v337, %v335
    %s340 = scalar_lea.vmem %s0, 240
    %v341 = vld [vmem:[%s340] sm:$0x80]
    %vm342 = vcmask 1047559
    %v343 = vsel %vm342, %v341, %v339
    %344 = vrot.lane.b32.xlu0 %v343, 92
    %v345 = vpop.permute.xlu0 %344
    %vm346 = vcmask 786144
    %347 = vst.msk [vmem:[#allocation0] ss:$8 sm:$0xf] %vm346, %v345
    %348 = vst.msk [vmem:[#allocation0] ss:$8 sm:$0xf0] %vm346, %v345
    %s349 = scalar_lea.vmem %s0, 22
    %v350 = vld [vmem:[%s349] sm:$0x1]
    %s351 = scalar_lea.vmem %s0, 53
    %v352 = vld [vmem:[%s351] sm:$0x2]
    %vm353 = vcmask 1041409
    %v354 = vsel %vm353, %v352, %v350
    %s355 = scalar_lea.vmem %s0, 84
    %v356 = vld [vmem:[%s355] sm:$0x4]
    %vm357 = vcmask 1042434
    %v358 = vsel %vm357, %v356, %v354
    %s359 = scalar_lea.vmem %s0, 115
    %v360 = vld [vmem:[%s359] sm:$0x8]
    %vm361 = vcmask 1043459
    %v362 = vsel %vm361, %v360, %v358
    %s363 = scalar_lea.vmem %s0, 146
    %v364 = vld [vmem:[%s363] sm:$0x10]
    %vm365 = vcmask 1044484
    %v366 = vsel %vm365, %v364, %v362
    %s367 = scalar_lea.vmem %s0, 177
    %v368 = vld [vmem:[%s367] sm:$0x20]
    %vm369 = vcmask 1045509
    %v370 = vsel %vm369, %v368, %v366
    %s371 = scalar_lea.vmem %s0, 208
    %v372 = vld [vmem:[%s371] sm:$0x40]
    %vm373 = vcmask 1046534
    %v374 = vsel %vm373, %v372, %v370
    %s375 = scalar_lea.vmem %s0, 239
    %v376 = vld [vmem:[%s375] sm:$0x80]
    %vm377 = vcmask 1047559
    %v378 = vsel %vm377, %v376, %v374
    %379 = vrot.lane.b32.xlu0 %v378, 88
    %v380 = vpop.permute.xlu0 %379
    %vm381 = vcmask 753344
    %382 = vst.msk [vmem:[#allocation0] ss:$8 sm:$0xf] %vm381, %v380
    %383 = vst.msk [vmem:[#allocation0] ss:$8 sm:$0xf0] %vm381, %v380
    %s384 = scalar_lea.vmem %s0, 21
    %v385 = vld [vmem:[%s384] sm:$0x1]
    %s386 = scalar_lea.vmem %s0, 52
    %v387 = vld [vmem:[%s386] sm:$0x2]
    %vm388 = vcmask 1041409
    %v389 = vsel %vm388, %v387, %v385
    %s390 = scalar_lea.vmem %s0, 83
    %v391 = vld [vmem:[%s390] sm:$0x4]
    %vm392 = vcmask 1042434
    %v393 = vsel %vm392, %v391, %v389
    %s394 = scalar_lea.vmem %s0, 114
    %v395 = vld [vmem:[%s394] sm:$0x8]
    %vm396 = vcmask 1043459
    %v397 = vsel %vm396, %v395, %v393
    %s398 = scalar_lea.vmem %s0, 145
    %v399 = vld [vmem:[%s398] sm:$0x10]
    %vm400 = vcmask 1044484
    %v401 = vsel %vm400, %v399, %v397
    %s402 = scalar_lea.vmem %s0, 176
    %v403 = vld [vmem:[%s402] sm:$0x20]
    %vm404 = vcmask 1045509
    %v405 = vsel %vm404, %v403, %v401
    %s406 = scalar_lea.vmem %s0, 207
    %v407 = vld [vmem:[%s406] sm:$0x40]
    %vm408 = vcmask 1046534
    %v409 = vsel %vm408, %v407, %v405
    %s410 = scalar_lea.vmem %s0, 238
    %v411 = vld [vmem:[%s410] sm:$0x80]
    %vm412 = vcmask 1047559
    %v413 = vsel %vm412, %v411, %v409
    %414 = vrot.lane.b32.xlu0 %v413, 84
    %v415 = vpop.permute.xlu0 %414
    %vm416 = vcmask 720544
    %417 = vst.msk [vmem:[#allocation0] ss:$8 sm:$0xf] %vm416, %v415
    %418 = vst.msk [vmem:[#allocation0] ss:$8 sm:$0xf0] %vm416, %v415
    %s419 = scalar_lea.vmem %s0, 20
    %v420 = vld [vmem:[%s419] sm:$0x1]
    %s421 = scalar_lea.vmem %s0, 51
    %v422 = vld [vmem:[%s421] sm:$0x2]
    %vm423 = vcmask 1041409
    %v424 = vsel %vm423, %v422, %v420
    %s425 = scalar_lea.vmem %s0, 82
    %v426 = vld [vmem:[%s425] sm:$0x4]
    %vm427 = vcmask 1042434
    %v428 = vsel %vm427, %v426, %v424
    %s429 = scalar_lea.vmem %s0, 113
    %v430 = vld [vmem:[%s429] sm:$0x8]
    %vm431 = vcmask 1043459
    %v432 = vsel %vm431, %v430, %v428
    %s433 = scalar_lea.vmem %s0, 144
    %v434 = vld [vmem:[%s433] sm:$0x10]
    %vm435 = vcmask 1044484
    %v436 = vsel %vm435, %v434, %v432
    %s437 = scalar_lea.vmem %s0, 175
    %v438 = vld [vmem:[%s437] sm:$0x20]
    %vm439 = vcmask 1045509
    %v440 = vsel %vm439, %v438, %v436
    %s441 = scalar_lea.vmem %s0, 206
    %v442 = vld [vmem:[%s441] sm:$0x40]
    %vm443 = vcmask 1046534
    %v444 = vsel %vm443, %v442, %v440
    %s445 = scalar_lea.vmem %s0, 237
    %v446 = vld [vmem:[%s445] sm:$0x80]
    %vm447 = vcmask 1047559
    %v448 = vsel %vm447, %v446, %v444
    %449 = vrot.lane.b32.xlu0 %v448, 80
    %v450 = vpop.permute.xlu0 %449
    %vm451 = vcmask 687744
    %452 = vst.msk [vmem:[#allocation0] ss:$8 sm:$0xf] %vm451, %v450
    %453 = vst.msk [vmem:[#allocation0] ss:$8 sm:$0xf0] %vm451, %v450
    %s454 = scalar_lea.vmem %s0, 19
    %v455 = vld [vmem:[%s454] sm:$0x1]
    %s456 = scalar_lea.vmem %s0, 50
    %v457 = vld [vmem:[%s456] sm:$0x2]
    %vm458 = vcmask 1041409
    %v459 = vsel %vm458, %v457, %v455
    %s460 = scalar_lea.vmem %s0, 81
    %v461 = vld [vmem:[%s460] sm:$0x4]
    %vm462 = vcmask 1042434
    %v463 = vsel %vm462, %v461, %v459
    %s464 = scalar_lea.vmem %s0, 112
    %v465 = vld [vmem:[%s464] sm:$0x8]
    %vm466 = vcmask 1043459
    %v467 = vsel %vm466, %v465, %v463
    %s468 = scalar_lea.vmem %s0, 143
    %v469 = vld [vmem:[%s468] sm:$0x10]
    %vm470 = vcmask 1044484
    %v471 = vsel %vm470, %v469, %v467
    %s472 = scalar_lea.vmem %s0, 174
    %v473 = vld [vmem:[%s472] sm:$0x20]
    %vm474 = vcmask 1045509
    %v475 = vsel %vm474, %v473, %v471
    %s476 = scalar_lea.vmem %s0, 205
    %v477 = vld [vmem:[%s476] sm:$0x40]
    %vm478 = vcmask 1046534
    %v479 = vsel %vm478, %v477, %v475
    %s480 = scalar_lea.vmem %s0, 236
    %v481 = vld [vmem:[%s480] sm:$0x80]
    %vm482 = vcmask 1047559
    %v483 = vsel %vm482, %v481, %v479
    %484 = vrot.lane.b32.xlu0 %v483, 76
    %v485 = vpop.permute.xlu0 %484
    %vm486 = vcmask 654944
    %487 = vst.msk [vmem:[#allocation0] ss:$8 sm:$0xf] %vm486, %v485
    %488 = vst.msk [vmem:[#allocation0] ss:$8 sm:$0xf0] %vm486, %v485
    %s489 = scalar_lea.vmem %s0, 18
    %v490 = vld [vmem:[%s489] sm:$0x1]
    %s491 = scalar_lea.vmem %s0, 49
    %v492 = vld [vmem:[%s491] sm:$0x2]
    %vm493 = vcmask 1041409
    %v494 = vsel %vm493, %v492, %v490
    %s495 = scalar_lea.vmem %s0, 80
    %v496 = vld [vmem:[%s495] sm:$0x4]
    %vm497 = vcmask 1042434
    %v498 = vsel %vm497, %v496, %v494
    %s499 = scalar_lea.vmem %s0, 111
    %v500 = vld [vmem:[%s499] sm:$0x8]
    %vm501 = vcmask 1043459
    %v502 = vsel %vm501, %v500, %v498
    %s503 = scalar_lea.vmem %s0, 142
    %v504 = vld [vmem:[%s503] sm:$0x10]
    %vm505 = vcmask 1044484
    %v506 = vsel %vm505, %v504, %v502
    %s507 = scalar_lea.vmem %s0, 173
    %v508 = vld [vmem:[%s507] sm:$0x20]
    %vm509 = vcmask 1045509
    %v510 = vsel %vm509, %v508, %v506
    %s511 = scalar_lea.vmem %s0, 204
    %v512 = vld [vmem:[%s511] sm:$0x40]
    %vm513 = vcmask 1046534
    %v514 = vsel %vm513, %v512, %v510
    %s515 = scalar_lea.vmem %s0, 235
    %v516 = vld [vmem:[%s515] sm:$0x80]
    %vm517 = vcmask 1047559
    %v518 = vsel %vm517, %v516, %v514
    %519 = vrot.lane.b32.xlu0 %v518, 72
    %v520 = vpop.permute.xlu0 %519
    %vm521 = vcmask 622144
    %522 = vst.msk [vmem:[#allocation0] ss:$8 sm:$0xf] %vm521, %v520
    %523 = vst.msk [vmem:[#allocation0] ss:$8 sm:$0xf0] %vm521, %v520
    %s524 = scalar_lea.vmem %s0, 17
    %v525 = vld [vmem:[%s524] sm:$0x1]
    %s526 = scalar_lea.vmem %s0, 48
    %v527 = vld [vmem:[%s526] sm:$0x2]
    %vm528 = vcmask 1041409
    %v529 = vsel %vm528, %v527, %v525
    %s530 = scalar_lea.vmem %s0, 79
    %v531 = vld [vmem:[%s530] sm:$0x4]
    %vm532 = vcmask 1042434
    %v533 = vsel %vm532, %v531, %v529
    %s534 = scalar_lea.vmem %s0, 110
    %v535 = vld [vmem:[%s534] sm:$0x8]
    %vm536 = vcmask 1043459
    %v537 = vsel %vm536, %v535, %v533
    %s538 = scalar_lea.vmem %s0, 141
    %v539 = vld [vmem:[%s538] sm:$0x10]
    %vm540 = vcmask 1044484
    %v541 = vsel %vm540, %v539, %v537
    %s542 = scalar_lea.vmem %s0, 172
    %v543 = vld [vmem:[%s542] sm:$0x20]
    %vm544 = vcmask 1045509
    %v545 = vsel %vm544, %v543, %v541
    %s546 = scalar_lea.vmem %s0, 203
    %v547 = vld [vmem:[%s546] sm:$0x40]
    %vm548 = vcmask 1046534
    %v549 = vsel %vm548, %v547, %v545
    %s550 = scalar_lea.vmem %s0, 234
    %v551 = vld [vmem:[%s550] sm:$0x80]
    %vm552 = vcmask 1047559
    %v553 = vsel %vm552, %v551, %v549
    %554 = vrot.lane.b32.xlu0 %v553, 68
    %v555 = vpop.permute.xlu0 %554
    %vm556 = vcmask 589344
    %557 = vst.msk [vmem:[#allocation0] ss:$8 sm:$0xf] %vm556, %v555
    %558 = vst.msk [vmem:[#allocation0] ss:$8 sm:$0xf0] %vm556, %v555
    %s559 = scalar_lea.vmem %s0, 16
    %v560 = vld [vmem:[%s559] sm:$0x1]
    %s561 = scalar_lea.vmem %s0, 47
    %v562 = vld [vmem:[%s561] sm:$0x2]
    %vm563 = vcmask 1041409
    %v564 = vsel %vm563, %v562, %v560
    %s565 = scalar_lea.vmem %s0, 78
    %v566 = vld [vmem:[%s565] sm:$0x4]
    %vm567 = vcmask 1042434
    %v568 = vsel %vm567, %v566, %v564
    %s569 = scalar_lea.vmem %s0, 109
    %v570 = vld [vmem:[%s569] sm:$0x8]
    %vm571 = vcmask 1043459
    %v572 = vsel %vm571, %v570, %v568
    %s573 = scalar_lea.vmem %s0, 140
    %v574 = vld [vmem:[%s573] sm:$0x10]
    %vm575 = vcmask 1044484
    %v576 = vsel %vm575, %v574, %v572
    %s577 = scalar_lea.vmem %s0, 171
    %v578 = vld [vmem:[%s577] sm:$0x20]
    %vm579 = vcmask 1045509
    %v580 = vsel %vm579, %v578, %v576
    %s581 = scalar_lea.vmem %s0, 202
    %v582 = vld [vmem:[%s581] sm:$0x40]
    %vm583 = vcmask 1046534
    %v584 = vsel %vm583, %v582, %v580
    %s585 = scalar_lea.vmem %s0, 233
    %v586 = vld [vmem:[%s585] sm:$0x80]
    %vm587 = vcmask 1047559
    %v588 = vsel %vm587, %v586, %v584
    %589 = vrot.lane.b32.xlu0 %v588, 64
    %v590 = vpop.permute.xlu0 %589
    %vm591 = vcmask 556544
    %592 = vst.msk [vmem:[#allocation0] ss:$8 sm:$0xf] %vm591, %v590
    %593 = vst.msk [vmem:[#allocation0] ss:$8 sm:$0xf0] %vm591, %v590
    %s594 = scalar_lea.vmem %s0, 15
    %v595 = vld [vmem:[%s594] sm:$0x1]
    %s596 = scalar_lea.vmem %s0, 46
    %v597 = vld [vmem:[%s596] sm:$0x2]
    %vm598 = vcmask 1041409
    %v599 = vsel %vm598, %v597, %v595
    %s600 = scalar_lea.vmem %s0, 77
    %v601 = vld [vmem:[%s600] sm:$0x4]
    %vm602 = vcmask 1042434
    %v603 = vsel %vm602, %v601, %v599
    %s604 = scalar_lea.vmem %s0, 108
    %v605 = vld [vmem:[%s604] sm:$0x8]
    %vm606 = vcmask 1043459
    %v607 = vsel %vm606, %v605, %v603
    %s608 = scalar_lea.vmem %s0, 139
    %v609 = vld [vmem:[%s608] sm:$0x10]
    %vm610 = vcmask 1044484
    %v611 = vsel %vm610, %v609, %v607
    %s612 = scalar_lea.vmem %s0, 170
    %v613 = vld [vmem:[%s612] sm:$0x20]
    %vm614 = vcmask 1045509
    %v615 = vsel %vm614, %v613, %v611
    %s616 = scalar_lea.vmem %s0, 201
    %v617 = vld [vmem:[%s616] sm:$0x40]
    %vm618 = vcmask 1046534
    %v619 = vsel %vm618, %v617, %v615
    %s620 = scalar_lea.vmem %s0, 232
    %v621 = vld [vmem:[%s620] sm:$0x80]
    %vm622 = vcmask 1047559
    %v623 = vsel %vm622, %v621, %v619
    %624 = vrot.lane.b32.xlu0 %v623, 60
    %v625 = vpop.permute.xlu0 %624
    %vm626 = vcmask 523744
    %627 = vst.msk [vmem:[#allocation0] ss:$8 sm:$0xf] %vm626, %v625
    %628 = vst.msk [vmem:[#allocation0] ss:$8 sm:$0xf0] %vm626, %v625
    %s629 = scalar_lea.vmem %s0, 14
    %v630 = vld [vmem:[%s629] sm:$0x1]
    %s631 = scalar_lea.vmem %s0, 45
    %v632 = vld [vmem:[%s631] sm:$0x2]
    %vm633 = vcmask 1041409
    %v634 = vsel %vm633, %v632, %v630
    %s635 = scalar_lea.vmem %s0, 76
    %v636 = vld [vmem:[%s635] sm:$0x4]
    %vm637 = vcmask 1042434
    %v638 = vsel %vm637, %v636, %v634
    %s639 = scalar_lea.vmem %s0, 107
    %v640 = vld [vmem:[%s639] sm:$0x8]
    %vm641 = vcmask 1043459
    %v642 = vsel %vm641, %v640, %v638
    %s643 = scalar_lea.vmem %s0, 138
    %v644 = vld [vmem:[%s643] sm:$0x10]
    %vm645 = vcmask 1044484
    %v646 = vsel %vm645, %v644, %v642
    %s647 = scalar_lea.vmem %s0, 169
    %v648 = vld [vmem:[%s647] sm:$0x20]
    %vm649 = vcmask 1045509
    %v650 = vsel %vm649, %v648, %v646
    %s651 = scalar_lea.vmem %s0, 200
    %v652 = vld [vmem:[%s651] sm:$0x40]
    %vm653 = vcmask 1046534
    %v654 = vsel %vm653, %v652, %v650
    %s655 = scalar_lea.vmem %s0, 231
    %v656 = vld [vmem:[%s655] sm:$0x80]
    %vm657 = vcmask 1047559
    %v658 = vsel %vm657, %v656, %v654
    %659 = vrot.lane.b32.xlu0 %v658, 56
    %v660 = vpop.permute.xlu0 %659
    %vm661 = vcmask 490944
    %662 = vst.msk [vmem:[#allocation0] ss:$8 sm:$0xf] %vm661, %v660
    %663 = vst.msk [vmem:[#allocation0] ss:$8 sm:$0xf0] %vm661, %v660
    %s664 = scalar_lea.vmem %s0, 13
    %v665 = vld [vmem:[%s664] sm:$0x1]
    %s666 = scalar_lea.vmem %s0, 44
    %v667 = vld [vmem:[%s666] sm:$0x2]
    %vm668 = vcmask 1041409
    %v669 = vsel %vm668, %v667, %v665
    %s670 = scalar_lea.vmem %s0, 75
    %v671 = vld [vmem:[%s670] sm:$0x4]
    %vm672 = vcmask 1042434
    %v673 = vsel %vm672, %v671, %v669
    %s674 = scalar_lea.vmem %s0, 106
    %v675 = vld [vmem:[%s674] sm:$0x8]
    %vm676 = vcmask 1043459
    %v677 = vsel %vm676, %v675, %v673
    %s678 = scalar_lea.vmem %s0, 137
    %v679 = vld [vmem:[%s678] sm:$0x10]
    %vm680 = vcmask 1044484
    %v681 = vsel %vm680, %v679, %v677
    %s682 = scalar_lea.vmem %s0, 168
    %v683 = vld [vmem:[%s682] sm:$0x20]
    %vm684 = vcmask 1045509
    %v685 = vsel %vm684, %v683, %v681
    %s686 = scalar_lea.vmem %s0, 199
    %v687 = vld [vmem:[%s686] sm:$0x40]
    %vm688 = vcmask 1046534
    %v689 = vsel %vm688, %v687, %v685
    %s690 = scalar_lea.vmem %s0, 230
    %v691 = vld [vmem:[%s690] sm:$0x80]
    %vm692 = vcmask 1047559
    %v693 = vsel %vm692, %v691, %v689
    %694 = vrot.lane.b32.xlu0 %v693, 52
    %v695 = vpop.permute.xlu0 %694
    %vm696 = vcmask 458144
    %697 = vst.msk [vmem:[#allocation0] ss:$8 sm:$0xf] %vm696, %v695
    %698 = vst.msk [vmem:[#allocation0] ss:$8 sm:$0xf0] %vm696, %v695
    %s699 = scalar_lea.vmem %s0, 12
    %v700 = vld [vmem:[%s699] sm:$0x1]
    %s701 = scalar_lea.vmem %s0, 43
    %v702 = vld [vmem:[%s701] sm:$0x2]
    %vm703 = vcmask 1041409
    %v704 = vsel %vm703, %v702, %v700
    %s705 = scalar_lea.vmem %s0, 74
    %v706 = vld [vmem:[%s705] sm:$0x4]
    %vm707 = vcmask 1042434
    %v708 = vsel %vm707, %v706, %v704
    %s709 = scalar_lea.vmem %s0, 105
    %v710 = vld [vmem:[%s709] sm:$0x8]
    %vm711 = vcmask 1043459
    %v712 = vsel %vm711, %v710, %v708
    %s713 = scalar_lea.vmem %s0, 136
    %v714 = vld [vmem:[%s713] sm:$0x10]
    %vm715 = vcmask 1044484
    %v716 = vsel %vm715, %v714, %v712
    %s717 = scalar_lea.vmem %s0, 167
    %v718 = vld [vmem:[%s717] sm:$0x20]
    %vm719 = vcmask 1045509
    %v720 = vsel %vm719, %v718, %v716
    %s721 = scalar_lea.vmem %s0, 198
    %v722 = vld [vmem:[%s721] sm:$0x40]
    %vm723 = vcmask 1046534
    %v724 = vsel %vm723, %v722, %v720
    %s725 = scalar_lea.vmem %s0, 229
    %v726 = vld [vmem:[%s725] sm:$0x80]
    %vm727 = vcmask 1047559
    %v728 = vsel %vm727, %v726, %v724
    %729 = vrot.lane.b32.xlu0 %v728, 48
    %v730 = vpop.permute.xlu0 %729
    %vm731 = vcmask 425344
    %732 = vst.msk [vmem:[#allocation0] ss:$8 sm:$0xf] %vm731, %v730
    %733 = vst.msk [vmem:[#allocation0] ss:$8 sm:$0xf0] %vm731, %v730
    %s734 = scalar_lea.vmem %s0, 11
    %v735 = vld [vmem:[%s734] sm:$0x1]
    %s736 = scalar_lea.vmem %s0, 42
    %v737 = vld [vmem:[%s736] sm:$0x2]
    %vm738 = vcmask 1041409
    %v739 = vsel %vm738, %v737, %v735
    %s740 = scalar_lea.vmem %s0, 73
    %v741 = vld [vmem:[%s740] sm:$0x4]
    %vm742 = vcmask 1042434
    %v743 = vsel %vm742, %v741, %v739
    %s744 = scalar_lea.vmem %s0, 104
    %v745 = vld [vmem:[%s744] sm:$0x8]
    %vm746 = vcmask 1043459
    %v747 = vsel %vm746, %v745, %v743
    %s748 = scalar_lea.vmem %s0, 135
    %v749 = vld [vmem:[%s748] sm:$0x10]
    %vm750 = vcmask 1044484
    %v751 = vsel %vm750, %v749, %v747
    %s752 = scalar_lea.vmem %s0, 166
    %v753 = vld [vmem:[%s752] sm:$0x20]
    %vm754 = vcmask 1045509
    %v755 = vsel %vm754, %v753, %v751
    %s756 = scalar_lea.vmem %s0, 197
    %v757 = vld [vmem:[%s756] sm:$0x40]
    %vm758 = vcmask 1046534
    %v759 = vsel %vm758, %v757, %v755
    %s760 = scalar_lea.vmem %s0, 228
    %v761 = vld [vmem:[%s760] sm:$0x80]
    %vm762 = vcmask 1047559
    %v763 = vsel %vm762, %v761, %v759
    %764 = vrot.lane.b32.xlu0 %v763, 44
    %v765 = vpop.permute.xlu0 %764
    %vm766 = vcmask 392544
    %767 = vst.msk [vmem:[#allocation0] ss:$8 sm:$0xf] %vm766, %v765
    %768 = vst.msk [vmem:[#allocation0] ss:$8 sm:$0xf0] %vm766, %v765
    %s769 = scalar_lea.vmem %s0, 10
    %v770 = vld [vmem:[%s769] sm:$0x1]
    %s771 = scalar_lea.vmem %s0, 41
    %v772 = vld [vmem:[%s771] sm:$0x2]
    %vm773 = vcmask 1041409
    %v774 = vsel %vm773, %v772, %v770
    %s775 = scalar_lea.vmem %s0, 72
    %v776 = vld [vmem:[%s775] sm:$0x4]
    %vm777 = vcmask 1042434
    %v778 = vsel %vm777, %v776, %v774
    %s779 = scalar_lea.vmem %s0, 103
    %v780 = vld [vmem:[%s779] sm:$0x8]
    %vm781 = vcmask 1043459
    %v782 = vsel %vm781, %v780, %v778
    %s783 = scalar_lea.vmem %s0, 134
    %v784 = vld [vmem:[%s783] sm:$0x10]
    %vm785 = vcmask 1044484
    %v786 = vsel %vm785, %v784, %v782
    %s787 = scalar_lea.vmem %s0, 165
    %v788 = vld [vmem:[%s787] sm:$0x20]
    %vm789 = vcmask 1045509
    %v790 = vsel %vm789, %v788, %v786
    %s791 = scalar_lea.vmem %s0, 196
    %v792 = vld [vmem:[%s791] sm:$0x40]
    %vm793 = vcmask 1046534
    %v794 = vsel %vm793, %v792, %v790
    %s795 = scalar_lea.vmem %s0, 227
    %v796 = vld [vmem:[%s795] sm:$0x80]
    %vm797 = vcmask 1047559
    %v798 = vsel %vm797, %v796, %v794
    %799 = vrot.lane.b32.xlu0 %v798, 40
    %v800 = vpop.permute.xlu0 %799
    %vm801 = vcmask 359744
    %802 = vst.msk [vmem:[#allocation0] ss:$8 sm:$0xf] %vm801, %v800
    %803 = vst.msk [vmem:[#allocation0] ss:$8 sm:$0xf0] %vm801, %v800
    %s804 = scalar_lea.vmem %s0, 9
    %v805 = vld [vmem:[%s804] sm:$0x1]
    %s806 = scalar_lea.vmem %s0, 40
    %v807 = vld [vmem:[%s806] sm:$0x2]
    %vm808 = vcmask 1041409
    %v809 = vsel %vm808, %v807, %v805
    %s810 = scalar_lea.vmem %s0, 71
    %v811 = vld [vmem:[%s810] sm:$0x4]
    %vm812 = vcmask 1042434
    %v813 = vsel %vm812, %v811, %v809
    %s814 = scalar_lea.vmem %s0, 102
    %v815 = vld [vmem:[%s814] sm:$0x8]
    %vm816 = vcmask 1043459
    %v817 = vsel %vm816, %v815, %v813
    %s818 = scalar_lea.vmem %s0, 133
    %v819 = vld [vmem:[%s818] sm:$0x10]
    %vm820 = vcmask 1044484
    %v821 = vsel %vm820, %v819, %v817
    %s822 = scalar_lea.vmem %s0, 164
    %v823 = vld [vmem:[%s822] sm:$0x20]
    %vm824 = vcmask 1045509
    %v825 = vsel %vm824, %v823, %v821
    %s826 = scalar_lea.vmem %s0, 195
    %v827 = vld [vmem:[%s826] sm:$0x40]
    %vm828 = vcmask 1046534
    %v829 = vsel %vm828, %v827, %v825
    %s830 = scalar_lea.vmem %s0, 226
    %v831 = vld [vmem:[%s830] sm:$0x80]
    %vm832 = vcmask 1047559
    %v833 = vsel %vm832, %v831, %v829
    %834 = vrot.lane.b32.xlu0 %v833, 36
    %v835 = vpop.permute.xlu0 %834
    %vm836 = vcmask 326944
    %837 = vst.msk [vmem:[#allocation0] ss:$8 sm:$0xf] %vm836, %v835
    %838 = vst.msk [vmem:[#allocation0] ss:$8 sm:$0xf0] %vm836, %v835
    %s839 = scalar_lea.vmem %s0, 8
    %v840 = vld [vmem:[%s839] sm:$0x1]
    %s841 = scalar_lea.vmem %s0, 39
    %v842 = vld [vmem:[%s841] sm:$0x2]
    %vm843 = vcmask 1041409
    %v844 = vsel %vm843, %v842, %v840
    %s845 = scalar_lea.vmem %s0, 70
    %v846 = vld [vmem:[%s845] sm:$0x4]
    %vm847 = vcmask 1042434
    %v848 = vsel %vm847, %v846, %v844
    %s849 = scalar_lea.vmem %s0, 101
    %v850 = vld [vmem:[%s849] sm:$0x8]
    %vm851 = vcmask 1043459
    %v852 = vsel %vm851, %v850, %v848
    %s853 = scalar_lea.vmem %s0, 132
    %v854 = vld [vmem:[%s853] sm:$0x10]
    %vm855 = vcmask 1044484
    %v856 = vsel %vm855, %v854, %v852
    %s857 = scalar_lea.vmem %s0, 163
    %v858 = vld [vmem:[%s857] sm:$0x20]
    %vm859 = vcmask 1045509
    %v860 = vsel %vm859, %v858, %v856
    %s861 = scalar_lea.vmem %s0, 194
    %v862 = vld [vmem:[%s861] sm:$0x40]
    %vm863 = vcmask 1046534
    %v864 = vsel %vm863, %v862, %v860
    %s865 = scalar_lea.vmem %s0, 225
    %v866 = vld [vmem:[%s865] sm:$0x80]
    %vm867 = vcmask 1047559
    %v868 = vsel %vm867, %v866, %v864
    %869 = vrot.lane.b32.xlu0 %v868, 32
    %v870 = vpop.permute.xlu0 %869
    %vm871 = vcmask 294144
    %872 = vst.msk [vmem:[#allocation0] ss:$8 sm:$0xf] %vm871, %v870
    %873 = vst.msk [vmem:[#allocation0] ss:$8 sm:$0xf0] %vm871, %v870
    %s874 = scalar_lea.vmem %s0, 7
    %v875 = vld [vmem:[%s874] sm:$0x1]
    %s876 = scalar_lea.vmem %s0, 38
    %v877 = vld [vmem:[%s876] sm:$0x2]
    %vm878 = vcmask 1041409
    %v879 = vsel %vm878, %v877, %v875
    %s880 = scalar_lea.vmem %s0, 69
    %v881 = vld [vmem:[%s880] sm:$0x4]
    %vm882 = vcmask 1042434
    %v883 = vsel %vm882, %v881, %v879
    %s884 = scalar_lea.vmem %s0, 100
    %v885 = vld [vmem:[%s884] sm:$0x8]
    %vm886 = vcmask 1043459
    %v887 = vsel %vm886, %v885, %v883
    %s888 = scalar_lea.vmem %s0, 131
    %v889 = vld [vmem:[%s888] sm:$0x10]
    %vm890 = vcmask 1044484
    %v891 = vsel %vm890, %v889, %v887
    %s892 = scalar_lea.vmem %s0, 162
    %v893 = vld [vmem:[%s892] sm:$0x20]
    %vm894 = vcmask 1045509
    %v895 = vsel %vm894, %v893, %v891
    %s896 = scalar_lea.vmem %s0, 193
    %v897 = vld [vmem:[%s896] sm:$0x40]
    %vm898 = vcmask 1046534
    %v899 = vsel %vm898, %v897, %v895
    %s900 = scalar_lea.vmem %s0, 224
    %v901 = vld [vmem:[%s900] sm:$0x80]
    %vm902 = vcmask 1047559
    %v903 = vsel %vm902, %v901, %v899
    %904 = vrot.lane.b32.xlu0 %v903, 28
    %v905 = vpop.permute.xlu0 %904
    %vm906 = vcmask 261344
    %907 = vst.msk [vmem:[#allocation0] ss:$8 sm:$0xf] %vm906, %v905
    %908 = vst.msk [vmem:[#allocation0] ss:$8 sm:$0xf0] %vm906, %v905
    %s909 = scalar_lea.vmem %s0, 6
    %v910 = vld [vmem:[%s909] sm:$0x1]
    %s911 = scalar_lea.vmem %s0, 37
    %v912 = vld [vmem:[%s911] sm:$0x2]
    %vm913 = vcmask 1041409
    %v914 = vsel %vm913, %v912, %v910
    %s915 = scalar_lea.vmem %s0, 68
    %v916 = vld [vmem:[%s915] sm:$0x4]
    %vm917 = vcmask 1042434
    %v918 = vsel %vm917, %v916, %v914
    %s919 = scalar_lea.vmem %s0, 99
    %v920 = vld [vmem:[%s919] sm:$0x8]
    %vm921 = vcmask 1043459
    %v922 = vsel %vm921, %v920, %v918
    %s923 = scalar_lea.vmem %s0, 130
    %v924 = vld [vmem:[%s923] sm:$0x10]
    %vm925 = vcmask 1044484
    %v926 = vsel %vm925, %v924, %v922
    %s927 = scalar_lea.vmem %s0, 161
    %v928 = vld [vmem:[%s927] sm:$0x20]
    %vm929 = vcmask 1045509
    %v930 = vsel %vm929, %v928, %v926
    %s931 = scalar_lea.vmem %s0, 192
    %v932 = vld [vmem:[%s931] sm:$0x40]
    %vm933 = vcmask 1046534
    %v934 = vsel %vm933, %v932, %v930
    %s935 = scalar_lea.vmem %s0, 223
    %v936 = vld [vmem:[%s935] sm:$0x80]
    %vm937 = vcmask 1047559
    %v938 = vsel %vm937, %v936, %v934
    %939 = vrot.lane.b32.xlu0 %v938, 24
    %v940 = vpop.permute.xlu0 %939
    %vm941 = vcmask 228544
    %942 = vst.msk [vmem:[#allocation0] ss:$8 sm:$0xf] %vm941, %v940
    %943 = vst.msk [vmem:[#allocation0] ss:$8 sm:$0xf0] %vm941, %v940
    %s944 = scalar_lea.vmem %s0, 5
    %v945 = vld [vmem:[%s944] sm:$0x1]
    %s946 = scalar_lea.vmem %s0, 36
    %v947 = vld [vmem:[%s946] sm:$0x2]
    %vm948 = vcmask 1041409
    %v949 = vsel %vm948, %v947, %v945
    %s950 = scalar_lea.vmem %s0, 67
    %v951 = vld [vmem:[%s950] sm:$0x4]
    %vm952 = vcmask 1042434
    %v953 = vsel %vm952, %v951, %v949
    %s954 = scalar_lea.vmem %s0, 98
    %v955 = vld [vmem:[%s954] sm:$0x8]
    %vm956 = vcmask 1043459
    %v957 = vsel %vm956, %v955, %v953
    %s958 = scalar_lea.vmem %s0, 129
    %v959 = vld [vmem:[%s958] sm:$0x10]
    %vm960 = vcmask 1044484
    %v961 = vsel %vm960, %v959, %v957
    %s962 = scalar_lea.vmem %s0, 160
    %v963 = vld [vmem:[%s962] sm:$0x20]
    %vm964 = vcmask 1045509
    %v965 = vsel %vm964, %v963, %v961
    %s966 = scalar_lea.vmem %s0, 191
    %v967 = vld [vmem:[%s966] sm:$0x40]
    %vm968 = vcmask 1046534
    %v969 = vsel %vm968, %v967, %v965
    %s970 = scalar_lea.vmem %s0, 222
    %v971 = vld [vmem:[%s970] sm:$0x80]
    %vm972 = vcmask 1047559
    %v973 = vsel %vm972, %v971, %v969
    %974 = vrot.lane.b32.xlu0 %v973, 20
    %v975 = vpop.permute.xlu0 %974
    %vm976 = vcmask 195744
    %977 = vst.msk [vmem:[#allocation0] ss:$8 sm:$0xf] %vm976, %v975
    %978 = vst.msk [vmem:[#allocation0] ss:$8 sm:$0xf0] %vm976, %v975
    %s979 = scalar_lea.vmem %s0, 4
    %v980 = vld [vmem:[%s979] sm:$0x1]
    %s981 = scalar_lea.vmem %s0, 35
    %v982 = vld [vmem:[%s981] sm:$0x2]
    %vm983 = vcmask 1041409
    %v984 = vsel %vm983, %v982, %v980
    %s985 = scalar_lea.vmem %s0, 66
    %v986 = vld [vmem:[%s985] sm:$0x4]
    %vm987 = vcmask 1042434
    %v988 = vsel %vm987, %v986, %v984
    %s989 = scalar_lea.vmem %s0, 97
    %v990 = vld [vmem:[%s989] sm:$0x8]
    %vm991 = vcmask 1043459
    %v992 = vsel %vm991, %v990, %v988
    %s993 = scalar_lea.vmem %s0, 128
    %v994 = vld [vmem:[%s993] sm:$0x10]
    %vm995 = vcmask 1044484
    %v996 = vsel %vm995, %v994, %v992
    %s997 = scalar_lea.vmem %s0, 159
    %v998 = vld [vmem:[%s997] sm:$0x20]
    %vm999 = vcmask 1045509
    %v1000 = vsel %vm999, %v998, %v996
    %s1001 = scalar_lea.vmem %s0, 190
    %v1002 = vld [vmem:[%s1001] sm:$0x40]
    %vm1003 = vcmask 1046534
    %v1004 = vsel %vm1003, %v1002, %v1000
    %s1005 = scalar_lea.vmem %s0, 221
    %v1006 = vld [vmem:[%s1005] sm:$0x80]
    %vm1007 = vcmask 1047559
    %v1008 = vsel %vm1007, %v1006, %v1004
    %1009 = vrot.lane.b32.xlu0 %v1008, 16
    %v1010 = vpop.permute.xlu0 %1009
    %vm1011 = vcmask 162944
    %1012 = vst.msk [vmem:[#allocation0] ss:$8 sm:$0xf] %vm1011, %v1010
    %1013 = vst.msk [vmem:[#allocation0] ss:$8 sm:$0xf0] %vm1011, %v1010
    %s1014 = scalar_lea.vmem %s0, 3
    %v1015 = vld [vmem:[%s1014] sm:$0x1]
    %s1016 = scalar_lea.vmem %s0, 34
    %v1017 = vld [vmem:[%s1016] sm:$0x2]
    %vm1018 = vcmask 1041409
    %v1019 = vsel %vm1018, %v1017, %v1015
    %s1020 = scalar_lea.vmem %s0, 65
    %v1021 = vld [vmem:[%s1020] sm:$0x4]
    %vm1022 = vcmask 1042434
    %v1023 = vsel %vm1022, %v1021, %v1019
    %s1024 = scalar_lea.vmem %s0, 96
    %v1025 = vld [vmem:[%s1024] sm:$0x8]
    %vm1026 = vcmask 1043459
    %v1027 = vsel %vm1026, %v1025, %v1023
    %s1028 = scalar_lea.vmem %s0, 127
    %v1029 = vld [vmem:[%s1028] sm:$0x10]
    %vm1030 = vcmask 1044484
    %v1031 = vsel %vm1030, %v1029, %v1027
    %s1032 = scalar_lea.vmem %s0, 158
    %v1033 = vld [vmem:[%s1032] sm:$0x20]
    %vm1034 = vcmask 1045509
    %v1035 = vsel %vm1034, %v1033, %v1031
    %s1036 = scalar_lea.vmem %s0, 189
    %v1037 = vld [vmem:[%s1036] sm:$0x40]
    %vm1038 = vcmask 1046534
    %v1039 = vsel %vm1038, %v1037, %v1035
    %s1040 = scalar_lea.vmem %s0, 220
    %v1041 = vld [vmem:[%s1040] sm:$0x80]
    %vm1042 = vcmask 1047559
    %v1043 = vsel %vm1042, %v1041, %v1039
    %1044 = vrot.lane.b32.xlu0 %v1043, 12
    %v1045 = vpop.permute.xlu0 %1044
    %vm1046 = vcmask 130144
    %1047 = vst.msk [vmem:[#allocation0] ss:$8 sm:$0xf] %vm1046, %v1045
    %1048 = vst.msk [vmem:[#allocation0] ss:$8 sm:$0xf0] %vm1046, %v1045
    %s1049 = scalar_lea.vmem %s0, 2
    %v1050 = vld [vmem:[%s1049] sm:$0x1]
    %s1051 = scalar_lea.vmem %s0, 33
    %v1052 = vld [vmem:[%s1051] sm:$0x2]
    %vm1053 = vcmask 1041409
    %v1054 = vsel %vm1053, %v1052, %v1050
    %s1055 = scalar_lea.vmem %s0, 64
    %v1056 = vld [vmem:[%s1055] sm:$0x4]
    %vm1057 = vcmask 1042434
    %v1058 = vsel %vm1057, %v1056, %v1054
    %s1059 = scalar_lea.vmem %s0, 95
    %v1060 = vld [vmem:[%s1059] sm:$0x8]
    %vm1061 = vcmask 1043459
    %v1062 = vsel %vm1061, %v1060, %v1058
    %s1063 = scalar_lea.vmem %s0, 126
    %v1064 = vld [vmem:[%s1063] sm:$0x10]
    %vm1065 = vcmask 1044484
    %v1066 = vsel %vm1065, %v1064, %v1062
    %s1067 = scalar_lea.vmem %s0, 157
    %v1068 = vld [vmem:[%s1067] sm:$0x20]
    %vm1069 = vcmask 1045509
    %v1070 = vsel %vm1069, %v1068, %v1066
    %s1071 = scalar_lea.vmem %s0, 188
    %v1072 = vld [vmem:[%s1071] sm:$0x40]
    %vm1073 = vcmask 1046534
    %v1074 = vsel %vm1073, %v1072, %v1070
    %s1075 = scalar_lea.vmem %s0, 219
    %v1076 = vld [vmem:[%s1075] sm:$0x80]
    %vm1077 = vcmask 1047559
    %v1078 = vsel %vm1077, %v1076, %v1074
    %1079 = vrot.lane.b32.xlu0 %v1078, 8
    %v1080 = vpop.permute.xlu0 %1079
    %vm1081 = vcmask 97344
    %1082 = vst.msk [vmem:[#allocation0] ss:$8 sm:$0xf] %vm1081, %v1080
    %1083 = vst.msk [vmem:[#allocation0] ss:$8 sm:$0xf0] %vm1081, %v1080
    %s1084 = scalar_lea.vmem %s0, 1
    %v1085 = vld [vmem:[%s1084] sm:$0x1]
    %s1086 = scalar_lea.vmem %s0, 32
    %v1087 = vld [vmem:[%s1086] sm:$0x2]
    %vm1088 = vcmask 1041409
    %v1089 = vsel %vm1088, %v1087, %v1085
    %s1090 = scalar_lea.vmem %s0, 63
    %v1091 = vld [vmem:[%s1090] sm:$0x4]
    %vm1092 = vcmask 1042434
    %v1093 = vsel %vm1092, %v1091, %v1089
    %s1094 = scalar_lea.vmem %s0, 94
    %v1095 = vld [vmem:[%s1094] sm:$0x8]
    %vm1096 = vcmask 1043459
    %v1097 = vsel %vm1096, %v1095, %v1093
    %s1098 = scalar_lea.vmem %s0, 125
    %v1099 = vld [vmem:[%s1098] sm:$0x10]
    %vm1100 = vcmask 1044484
    %v1101 = vsel %vm1100, %v1099, %v1097
    %s1102 = scalar_lea.vmem %s0, 156
    %v1103 = vld [vmem:[%s1102] sm:$0x20]
    %vm1104 = vcmask 1045509
    %v1105 = vsel %vm1104, %v1103, %v1101
    %s1106 = scalar_lea.vmem %s0, 187
    %v1107 = vld [vmem:[%s1106] sm:$0x40]
    %vm1108 = vcmask 1046534
    %v1109 = vsel %vm1108, %v1107, %v1105
    %s1110 = scalar_lea.vmem %s0, 218
    %v1111 = vld [vmem:[%s1110] sm:$0x80]
    %vm1112 = vcmask 1047559
    %v1113 = vsel %vm1112, %v1111, %v1109
    %1114 = vrot.lane.b32.xlu0 %v1113, 4
    %v1115 = vpop.permute.xlu0 %1114
    %vm1116 = vcmask 64544
    %1117 = vst.msk [vmem:[#allocation0] ss:$8 sm:$0xf] %vm1116, %v1115
    %1118 = vst.msk [vmem:[#allocation0] ss:$8 sm:$0xf0] %vm1116, %v1115
    %s1120 = ssub.s32 2, 1
    %v1121 = vld [vmem:[#allocation0] sm:%s1120]
    %s1123 = ssub.s32 2, 1
    %1124 = vst [vmem:[%s1] sm:%s1123] %v1121
    %s1125 = scalar_lea.vmem [#allocation0], 8
    %v1126 = vld [vmem:[%s1125] sm:%s1120]
    %s1128 = ssub.s32 2, 1
    %s1129 = scalar_lea.vmem %s1, 1
    %1130 = vst [vmem:[%s1129] sm:%s1128] %v1126
    %s1131 = scalar_lea.vmem [#allocation0], 16
    %v1132 = vld [vmem:[%s1131] sm:%s1120]
    %s1134 = ssub.s32 2, 1
    %s1135 = scalar_lea.vmem %s1, 2
    %1136 = vst [vmem:[%s1135] sm:%s1134] %v1132
    %s1137 = scalar_lea.vmem [#allocation0], 24
    %v1138 = vld [vmem:[%s1137] sm:%s1120]
    %s1140 = ssub.s32 2, 1
    %s1141 = scalar_lea.vmem %s1, 3
    %1142 = vst [vmem:[%s1141] sm:%s1140] %v1138
    %s1143 = scalar_lea.vmem [#allocation0], 32
    %v1144 = vld [vmem:[%s1143] sm:%s1120]
    %s1146 = ssub.s32 2, 1
    %s1147 = scalar_lea.vmem %s1, 4
    %1148 = vst [vmem:[%s1147] sm:%s1146] %v1144
    %s1149 = scalar_lea.vmem [#allocation0], 40
    %v1150 = vld [vmem:[%s1149] sm:%s1120]
    %s1152 = ssub.s32 2, 1
    %s1153 = scalar_lea.vmem %s1, 5
    %1154 = vst [vmem:[%s1153] sm:%s1152] %v1150
    %s1155 = scalar_lea.vmem [#allocation0], 48
    %v1156 = vld [vmem:[%s1155] sm:%s1120]
    %s1158 = ssub.s32 2, 1
    %s1159 = scalar_lea.vmem %s1, 6
    %1160 = vst [vmem:[%s1159] sm:%s1158] %v1156
    %s1161 = scalar_lea.vmem [#allocation0], 56
    %v1162 = vld [vmem:[%s1161] sm:%s1120]
    %s1164 = ssub.s32 2, 1
    %s1165 = scalar_lea.vmem %s1, 7
    %1166 = vst [vmem:[%s1165] sm:%s1164] %v1162

// kernel: basicblock_forward.5
$region0: #{basicblock_forward.5}
  #allocation0 [shape = 'u32[]', space=smem, size = 0x4, offset = 0x4, fixed_abs, tag = 'smem constant byte address 0x4 - core index']
  #allocation1 [shape = 'u32[72,128]{1,0:T(1,128)}', space=vmem, size = 0x9000, scoped, tag = 'internal scratch']
  %s0 = inlined_call_operand.vmem [shape: f32[2,1024], index: 0, kind: input, shape index: {}]
  %s1 = inlined_call_operand.vmem [shape: f32[1,1024], index: 1, kind: input, shape index: {}]
  %s2 = inlined_call_operand.vmem [shape: f32[1,1024], index: 2, kind: input, shape index: {}]
  %s3 = inlined_call_operand.vmem [shape: f32[2,1024], index: 3, kind: output, shape index: {}]
  %s4 = sld [smem:[#allocation0]]
  $region22: #{basicblock_forward.5} parent=0
    _
  %s6 = ssub.s32 1, %s4
  %s7 = scalar_select 0, %s6, %s4
  // Predicated region
  $region2: #{basicblock_forward.5} parent=0 // pred_check
    _
  $region3: #{basicblock_forward.5} parent=0 // pred_check_branch
    %9 = sbr.rel (0) target = $region5
  $region4: #{basicblock_forward.5} parent=0 // pred_region
    _
  $region5: #{basicblock_forward.5} parent=0 // pred_fallthru
    _
  // Predicated region
  $region6: #{basicblock_forward.5} parent=0 // pred_check
    _
  $region7: #{basicblock_forward.5} parent=0 // pred_check_branch
    %11 = sbr.rel (0) target = $region9
  $region8: #{basicblock_forward.5} parent=0 // pred_region
    _
  $region9: #{basicblock_forward.5} parent=0 // pred_fallthru
    _
  // Predicated region
  $region10: #{basicblock_forward.5} parent=0 // pred_check
    _
  $region11: #{basicblock_forward.5} parent=0 // pred_check_branch
    %13 = sbr.rel (0) target = $region13
  $region12: #{basicblock_forward.5} parent=0 // pred_region
    _
  $region13: #{basicblock_forward.5} parent=0 // pred_fallthru
    _
  %v14 = vld [vmem:[%s0] sm:$0xff]
  %v15 = vld [vmem:[%s0 + $0x8] sm:$0xff]
  %v16 = vld [vmem:[%s1] sm:$0xff]
  %v18 = vperm.slane %v16, 0
  %v19 = vperm.slane %v16, 1
  %v20 = vperm.slane %v16, 2
  %v21 = vperm.slane %v16, 3
  %v22 = vperm.slane %v16, 4
  %v23 = vperm.slane %v16, 5
  %v24 = vperm.slane %v16, 6
  %v25 = vperm.slane %v16, 7
  %v26 = vrot.slane %v19, 6
  %v27 = vrot.slane %v20, 4
  %v28 = vrot.slane %v21, 2
  %v29 = vrot.slane %v23, 6
  %v30 = vrot.slane %v24, 4
  %v31 = vrot.slane %v25, 2
  %vm32 = vcmask 1041408
  %v33 = vsel %vm32, %v18, %v26
  %vm34 = vcmask 1045508
  %v35 = vsel %vm34, %v27, %v28
  %vm36 = vcmask 1043456
  %v37 = vsel %vm36, %v33, %v35
  %v38 = vsel %vm32, %v22, %v29
  %v39 = vsel %vm34, %v30, %v31
  %v40 = vsel %vm36, %v38, %v39
  %v43 = vmul.f32 %v14, %v37
  %v44 = vmul.f32 %v15, %v40
  %v45 = vld [vmem:[%s2] sm:$0xff]
  %v47 = vperm.slane %v45, 0
  %v48 = vperm.slane %v45, 1
  %v49 = vperm.slane %v45, 2
  %v50 = vperm.slane %v45, 3
  %v51 = vperm.slane %v45, 4
  %v52 = vperm.slane %v45, 5
  %v53 = vperm.slane %v45, 6
  %v54 = vperm.slane %v45, 7
  %v55 = vrot.slane %v48, 6
  %v56 = vrot.slane %v49, 4
  %v57 = vrot.slane %v50, 2
  %v58 = vrot.slane %v52, 6
  %v59 = vrot.slane %v53, 4
  %v60 = vrot.slane %v54, 2
  %v61 = vsel %vm32, %v47, %v55
  %v62 = vsel %vm34, %v56, %v57
  %v63 = vsel %vm36, %v61, %v62
  %v64 = vsel %vm32, %v51, %v58
  %v65 = vsel %vm34, %v59, %v60
  %v66 = vsel %vm36, %v64, %v65
  %v69 = vadd.f32 %v43, %v63
  %v70 = vadd.f32 %v44, %v66
  %v71 = vmax.f32 %v69, 0.0
  %v72 = vmax.f32 %v70, 0.0
  %73 = vst [vmem:[%s3] sm:$0xff] %v71
  %74 = vst [vmem:[%s3 + $0x8] sm:$0xff] %v72
  // Predicated region
  $region14: #{basicblock_forward.5} parent=0 // pred_check
    _
  $region15: #{basicblock_forward.5} parent=0 // pred_check_branch
    %76 = sbr.rel (0) target = $region17
  $region16: #{basicblock_forward.5} parent=0 // pred_region
    _
  $region17: #{basicblock_forward.5} parent=0 // pred_fallthru
    _
  // Predicated region
  $region18: #{basicblock_forward.5} parent=0 // pred_check
    _
  $region19: #{basicblock_forward.5} parent=0 // pred_check_branch
    %78 = sbr.rel (0) target = $region21
  $region20: #{basicblock_forward.5} parent=0 // pred_region
    _
  $region21: #{basicblock_forward.5} parent=0 // pred_fallthru
    _

// kernel: basicblock_forward.7
$region0: #{basicblock_forward.7}
  #allocation0 [shape = 'u32[]', space=smem, size = 0x4, offset = 0x4, fixed_abs, tag = 'smem constant byte address 0x4 - core index']
  #allocation1 [shape = 'u32[72,128]{1,0:T(1,128)}', space=vmem, size = 0x9000, scoped, tag = 'internal scratch']
  %s0 = inlined_call_operand.vmem [shape: f32[2,1024], index: 0, kind: input, shape index: {}]
  %s1 = inlined_call_operand.vmem [shape: f32[2,1024], index: 1, kind: input, shape index: {}]
  %s2 = inlined_call_operand.vmem [shape: f32[1,1024], index: 2, kind: input, shape index: {}]
  %s3 = inlined_call_operand.vmem [shape: f32[1,1024], index: 3, kind: input, shape index: {}]
  %s4 = inlined_call_operand.vmem [shape: f32[2,1024], index: 4, kind: output, shape index: {}]
  %s5 = sld [smem:[#allocation0]]
  $region26: #{basicblock_forward.7} parent=0
    _
  %s7 = ssub.s32 1, %s5
  %s8 = scalar_select 0, %s7, %s5
  // Predicated region
  $region2: #{basicblock_forward.7} parent=0 // pred_check
    _
  $region3: #{basicblock_forward.7} parent=0 // pred_check_branch
    %10 = sbr.rel (0) target = $region5
  $region4: #{basicblock_forward.7} parent=0 // pred_region
    _
  $region5: #{basicblock_forward.7} parent=0 // pred_fallthru
    _
  // Predicated region
  $region6: #{basicblock_forward.7} parent=0 // pred_check
    _
  $region7: #{basicblock_forward.7} parent=0 // pred_check_branch
    %12 = sbr.rel (0) target = $region9
  $region8: #{basicblock_forward.7} parent=0 // pred_region
    _
  $region9: #{basicblock_forward.7} parent=0 // pred_fallthru
    _
  // Predicated region
  $region10: #{basicblock_forward.7} parent=0 // pred_check
    _
  $region11: #{basicblock_forward.7} parent=0 // pred_check_branch
    %14 = sbr.rel (0) target = $region13
  $region12: #{basicblock_forward.7} parent=0 // pred_region
    _
  $region13: #{basicblock_forward.7} parent=0 // pred_fallthru
    _
  // Predicated region
  $region14: #{basicblock_forward.7} parent=0 // pred_check
    _
  $region15: #{basicblock_forward.7} parent=0 // pred_check_branch
    %16 = sbr.rel (0) target = $region17
  $region16: #{basicblock_forward.7} parent=0 // pred_region
    _
  $region17: #{basicblock_forward.7} parent=0 // pred_fallthru
    _
  %v17 = vld [vmem:[%s0] sm:$0xff]
  %v18 = vld [vmem:[%s0 + $0x8] sm:$0xff]
  %v19 = vld [vmem:[%s2] sm:$0xff]
  %v21 = vperm.slane %v19, 0
  %v22 = vperm.slane %v19, 1
  %v23 = vperm.slane %v19, 2
  %v24 = vperm.slane %v19, 3
  %v25 = vperm.slane %v19, 4
  %v26 = vperm.slane %v19, 5
  %v27 = vperm.slane %v19, 6
  %v28 = vperm.slane %v19, 7
  %v29 = vrot.slane %v22, 6
  %v30 = vrot.slane %v23, 4
  %v31 = vrot.slane %v24, 2
  %v32 = vrot.slane %v26, 6
  %v33 = vrot.slane %v27, 4
  %v34 = vrot.slane %v28, 2
  %vm35 = vcmask 1041408
  %v36 = vsel %vm35, %v21, %v29
  %vm37 = vcmask 1045508
  %v38 = vsel %vm37, %v30, %v31
  %vm39 = vcmask 1043456
  %v40 = vsel %vm39, %v36, %v38
  %v41 = vsel %vm35, %v25, %v32
  %v42 = vsel %vm37, %v33, %v34
  %v43 = vsel %vm39, %v41, %v42
  %v46 = vmul.f32 %v17, %v40
  %v47 = vmul.f32 %v18, %v43
  %v48 = vld [vmem:[%s3] sm:$0xff]
  %v50 = vperm.slane %v48, 0
  %v51 = vperm.slane %v48, 1
  %v52 = vperm.slane %v48, 2
  %v53 = vperm.slane %v48, 3
  %v54 = vperm.slane %v48, 4
  %v55 = vperm.slane %v48, 5
  %v56 = vperm.slane %v48, 6
  %v57 = vperm.slane %v48, 7
  %v58 = vrot.slane %v51, 6
  %v59 = vrot.slane %v52, 4
  %v60 = vrot.slane %v53, 2
  %v61 = vrot.slane %v55, 6
  %v62 = vrot.slane %v56, 4
  %v63 = vrot.slane %v57, 2
  %v64 = vsel %vm35, %v50, %v58
  %v65 = vsel %vm37, %v59, %v60
  %v66 = vsel %vm39, %v64, %v65
  %v67 = vsel %vm35, %v54, %v61
  %v68 = vsel %vm37, %v62, %v63
  %v69 = vsel %vm39, %v67, %v68
  %v72 = vadd.f32 %v46, %v66
  %v73 = vadd.f32 %v47, %v69
  %v74 = vld [vmem:[%s1] sm:$0xff]
  %v75 = vld [vmem:[%s1 + $0x8] sm:$0xff]
  %v76 = vadd.f32 %v72, %v74
  %v77 = vadd.f32 %v73, %v75
  %v78 = vmax.f32 %v76, 0.0
  %v79 = vmax.f32 %v77, 0.0
  %80 = vst [vmem:[%s4] sm:$0xff] %v78
  %81 = vst [vmem:[%s4 + $0x8] sm:$0xff] %v79
  // Predicated region
  $region18: #{basicblock_forward.7} parent=0 // pred_check
    _
  $region19: #{basicblock_forward.7} parent=0 // pred_check_branch
    %83 = sbr.rel (0) target = $region21
  $region20: #{basicblock_forward.7} parent=0 // pred_region
    _
  $region21: #{basicblock_forward.7} parent=0 // pred_fallthru
    _
  // Predicated region
  $region22: #{basicblock_forward.7} parent=0 // pred_check
    _
  $region23: #{basicblock_forward.7} parent=0 // pred_check_branch
    %85 = sbr.rel (0) target = $region25
  $region24: #{basicblock_forward.7} parent=0 // pred_region
    _
  $region25: #{basicblock_forward.7} parent=0 // pred_fallthru
    _

// kernel: basicblock_forward.4
$region0: #{basicblock_forward.4}
  #allocation0 [shape = 'u32[]', space=smem, size = 0x4, offset = 0x4, fixed_abs, tag = 'smem constant byte address 0x4 - core index']
  #allocation1 [shape = 'u32[72,128]{1,0:T(1,128)}', space=vmem, size = 0x9000, scoped, tag = 'internal scratch']
  #allocation2 [shape = 'f32[18,48,4]{2,1,0:T(8,128)}', space=vmem, size = 0x6c000, scoped, tag = 'scratch operand']
  %s0 = inlined_call_operand.vmem [shape: f32[2,16,16,4], index: 0, kind: input, shape index: {}]
  %s1 = inlined_call_operand.vmem [shape: bf16[3,3,4,4], index: 1, kind: input, shape index: {}]
  %s2 = inlined_call_operand.vmem [shape: f32[1,4], index: 2, kind: input, shape index: {}]
  %s3 = inlined_call_operand.vmem [shape: f32[2,16,16,4], index: 3, kind: output, shape index: {0}]
  %s4 = inlined_call_operand.vmem [shape: f32[2,2,1,4], index: 4, kind: output, shape index: {1}]
  %s5 = inlined_call_operand.vmem [shape: f32[2,2,1,4], index: 5, kind: output, shape index: {2}]
  %6 = xla_tuple %s3, %s4, %s5
  %s7 = sld [smem:[#allocation0]]
  $region61: #{basicblock_forward.4} parent=0
    _
  %s9 = ssub.s32 1, %s7
  %s10 = scalar_select 0, %s9, %s7
  loop: start=0, step=1, limit=6
  $region2: #{basicblock_forward.4} parent=0 // loop_pre_header
    _
  $region3: #{basicblock_forward.4} parent=0 // loop_header
    %s12 = sphi 0, %s16
    %p13 = scmp.ge.s32.totalorder %s12, 6
    %s19 = sphi 0, %s38
    %s20 = sphi 0, %s34
    %s21 = sphi 0, %s30
    %s22 = sphi 0, %s19
    %s23 = sphi 0, %s20
    %s24 = sphi 0, %s21
    %s25 = sphi 0, %s22
    %s26 = sphi 0, %s23
    %s27 = sphi 0, %s24
    %s41 = sphi 0, %s43
    %s44 = sphi 0, %s41
    %s45 = sphi 0, %s44
    %s61 = sphi 0, %s45
    %s67 = sphi 0, %s69
    %s70 = sphi 0, %s67
    %s71 = sphi 0, %s70
    %s87 = sphi 0, %s71
    %s93 = sphi 0, %s95
    %s96 = sphi 0, %s93
    %s97 = sphi 0, %s96
    %s113 = sphi 0, %s97
    %s123 = sphi 0, %s125
    %s126 = sphi 0, %s123
    %s127 = sphi 0, %s126
    %s143 = sphi 0, %s127
    %s153 = sphi 0, %s155
    %s156 = sphi 0, %s153
    %s157 = sphi 0, %s156
    %s173 = sphi 0, %s157
    %s183 = sphi 0, %s185
    %s186 = sphi 0, %s183
    %s187 = sphi 0, %s186
    %s203 = sphi 0, %s187
  $region4: #{basicblock_forward.4} parent=0 // loop_header_branch
    %15 = sbr.rel (%p13) target = $region8
  $region5: #{basicblock_forward.4} parent=0 // loop_body
    %s17 = ssub.s32 %s12, 1
    %s18 = ssub.s32 %s12, 2
    %s28 = sadd.s32 1, %s21
    %p29 = scmp.ge.s32.totalorder %s28, 1
    %s30 = scalar_select %p29, 0, %s28
    %s31 = sadd.s32 1, %s20
    %s32 = scalar_select %p29, %s31, %s20
    %p33 = scmp.ge.s32.totalorder %s32, 2
    %s34 = scalar_select %p33, 0, %s32
    %s35 = sadd.s32 1, %s19
    %s36 = scalar_select %p33, %s35, %s19
    %p37 = scmp.ge.s32.totalorder %s36, 2
    %s38 = scalar_select %p37, 0, %s36
    %s39 = ssub.s32 %s19, %s38
    %p40 = scmp.eq.s32.totalorder %s39, 0
    %s42 = sadd.s32 %s41, 1
    %s43 = scalar_select %p40, %s41, %s42
    %p46 = pneg %p40
    %p47 = scmp.eq.s32.totalorder %s12, 3
    %p48 = por %p46, %p47
    %p49 = scmp.ne.s32.totalorder %s41, %s44
    %p50 = scmp.eq.s32.totalorder %s12, 0
    %p51 = por %p49, %p50
    %p52 = scmp.ne.s32.totalorder %s41, %s44
    %p53 = scmp.eq.s32.totalorder %s17, 3
    %p54 = por %p52, %p53
    %p55 = scmp.ne.s32.totalorder %s44, %s45
    %p56 = scmp.eq.s32.totalorder %s17, 0
    %p57 = por %p55, %p56
    %p58 = scmp.ne.s32.totalorder %s44, %s45
    %p59 = scmp.eq.s32.totalorder %s18, 3
    %p60 = por %p58, %p59
    %p62 = scmp.ne.s32.totalorder %s45, %s61
    %p63 = scmp.eq.s32.totalorder %s18, 0
    %p64 = por %p62, %p63
    %s65 = ssub.s32 %s21, %s30
    %p66 = scmp.eq.s32.totalorder %s65, 0
    %s68 = sadd.s32 %s67, 1
    %s69 = scalar_select %p66, %s67, %s68
    %p72 = pneg %p66
    %p73 = scmp.eq.s32.totalorder %s12, 3
    %p74 = por %p72, %p73
    %p75 = scmp.ne.s32.totalorder %s67, %s70
    %p76 = scmp.eq.s32.totalorder %s12, 0
    %p77 = por %p75, %p76
    %p78 = scmp.ne.s32.totalorder %s67, %s70
    %p79 = scmp.eq.s32.totalorder %s17, 3
    %p80 = por %p78, %p79
    %p81 = scmp.ne.s32.totalorder %s70, %s71
    %p82 = scmp.eq.s32.totalorder %s17, 0
    %p83 = por %p81, %p82
    %p84 = scmp.ne.s32.totalorder %s70, %s71
    %p85 = scmp.eq.s32.totalorder %s18, 3
    %p86 = por %p84, %p85
    %p88 = scmp.ne.s32.totalorder %s71, %s87
    %p89 = scmp.eq.s32.totalorder %s18, 0
    %p90 = por %p88, %p89
    %s91 = ssub.s32 %s21, %s30
    %p92 = scmp.eq.s32.totalorder %s91, 0
    %s94 = sadd.s32 %s93, 1
    %s95 = scalar_select %p92, %s93, %s94
    %p98 = pneg %p92
    %p99 = scmp.eq.s32.totalorder %s12, 3
    %p100 = por %p98, %p99
    %p101 = scmp.ne.s32.totalorder %s93, %s96
    %p102 = scmp.eq.s32.totalorder %s12, 0
    %p103 = por %p101, %p102
    %p104 = scmp.ne.s32.totalorder %s93, %s96
    %p105 = scmp.eq.s32.totalorder %s17, 3
    %p106 = por %p104, %p105
    %p107 = scmp.ne.s32.totalorder %s96, %s97
    %p108 = scmp.eq.s32.totalorder %s17, 0
    %p109 = por %p107, %p108
    %p110 = scmp.ne.s32.totalorder %s96, %s97
    %p111 = scmp.eq.s32.totalorder %s18, 3
    %p112 = por %p110, %p111
    %p114 = scmp.ne.s32.totalorder %s97, %s113
    %p115 = scmp.eq.s32.totalorder %s18, 0
    %p116 = por %p114, %p115
    %s117 = ssub.s32 %s19, %s38
    %s118 = ssub.s32 %s20, %s34
    %s119 = sor.u32 %s117, %s118
    %s120 = ssub.s32 %s21, %s30
    %s121 = sor.u32 %s119, %s120
    %p122 = scmp.eq.s32.totalorder %s121, 0
    %s124 = sadd.s32 %s123, 1
    %s125 = scalar_select %p122, %s123, %s124
    %p128 = pneg %p122
    %p129 = scmp.eq.s32.totalorder %s12, 3
    %p130 = por %p128, %p129
    %p131 = scmp.ne.s32.totalorder %s123, %s126
    %p132 = scmp.eq.s32.totalorder %s12, 0
    %p133 = por %p131, %p132
    %p134 = scmp.ne.s32.totalorder %s123, %s126
    %p135 = scmp.eq.s32.totalorder %s17, 3
    %p136 = por %p134, %p135
    %p137 = scmp.ne.s32.totalorder %s126, %s127
    %p138 = scmp.eq.s32.totalorder %s17, 0
    %p139 = por %p137, %p138
    %p140 = scmp.ne.s32.totalorder %s126, %s127
    %p141 = scmp.eq.s32.totalorder %s18, 3
    %p142 = por %p140, %p141
    %p144 = scmp.ne.s32.totalorder %s127, %s143
    %p145 = scmp.eq.s32.totalorder %s18, 0
    %p146 = por %p144, %p145
    %s147 = ssub.s32 %s19, %s38
    %s148 = ssub.s32 %s20, %s34
    %s149 = sor.u32 %s147, %s148
    %s150 = ssub.s32 %s21, %s30
    %s151 = sor.u32 %s149, %s150
    %p152 = scmp.eq.s32.totalorder %s151, 0
    %s154 = sadd.s32 %s153, 1
    %s155 = scalar_select %p152, %s153, %s154
    %p158 = pneg %p152
    %p159 = scmp.eq.s32.totalorder %s12, 3
    %p160 = por %p158, %p159
    %p161 = scmp.ne.s32.totalorder %s153, %s156
    %p162 = scmp.eq.s32.totalorder %s12, 0
    %p163 = por %p161, %p162
    %p164 = scmp.ne.s32.totalorder %s153, %s156
    %p165 = scmp.eq.s32.totalorder %s17, 3
    %p166 = por %p164, %p165
    %p167 = scmp.ne.s32.totalorder %s156, %s157
    %p168 = scmp.eq.s32.totalorder %s17, 0
    %p169 = por %p167, %p168
    %p170 = scmp.ne.s32.totalorder %s156, %s157
    %p171 = scmp.eq.s32.totalorder %s18, 3
    %p172 = por %p170, %p171
    %p174 = scmp.ne.s32.totalorder %s157, %s173
    %p175 = scmp.eq.s32.totalorder %s18, 0
    %p176 = por %p174, %p175
    %s177 = ssub.s32 %s19, %s38
    %s178 = ssub.s32 %s20, %s34
    %s179 = sor.u32 %s177, %s178
    %s180 = ssub.s32 %s21, %s30
    %s181 = sor.u32 %s179, %s180
    %p182 = scmp.eq.s32.totalorder %s181, 0
    %s184 = sadd.s32 %s183, 1
    %s185 = scalar_select %p182, %s183, %s184
    %p188 = pneg %p182
    %p189 = scmp.eq.s32.totalorder %s12, 3
    %p190 = por %p188, %p189
    %p191 = scmp.ne.s32.totalorder %s183, %s186
    %p192 = scmp.eq.s32.totalorder %s12, 0
    %p193 = por %p191, %p192
    %p194 = scmp.ne.s32.totalorder %s183, %s186
    %p195 = scmp.eq.s32.totalorder %s17, 3
    %p196 = por %p194, %p195
    %p197 = scmp.ne.s32.totalorder %s186, %s187
    %p198 = scmp.eq.s32.totalorder %s17, 0
    %p199 = por %p197, %p198
    %p200 = scmp.ne.s32.totalorder %s186, %s187
    %p201 = scmp.eq.s32.totalorder %s18, 3
    %p202 = por %p200, %p201
    %p204 = scmp.ne.s32.totalorder %s187, %s203
    %p205 = scmp.eq.s32.totalorder %s18, 0
    %p206 = por %p204, %p205
    %p207 = scmp.le.s32.totalorder 1, %s12
    %p208 = scmp.lt.s32.totalorder %s12, 5
    %p209 = pnand %p207, %p208
    %p210 = pneg %p209
    // Predicated region
    $region9: #{basicblock_forward.4} parent=5 // pred_check
      _
    $region10: #{basicblock_forward.4} parent=5 // pred_check_branch
      %212 = sbr.rel (%p209) target = $region12
    $region11: #{basicblock_forward.4} parent=5 // pred_region
      %s213 = ssub.s32 %s12, 1
      // Predicated region
      $region13: #{basicblock_forward.4} parent=11 // pred_check
        %p214 = pneg %p83
      $region14: #{basicblock_forward.4} parent=11 // pred_check_branch
        %216 = sbr.rel (%p214) target = $region16
      $region15: #{basicblock_forward.4} parent=11 // pred_region
        %p217 = scmp.lt.s32.totalorder %s24, 0
        %s218 = scalar_select %p217, %s24, 0
        %s219 = smul.addr %s218, 2
        %s220 = scalar_lea.vmem %s1, %s219
      $region16: #{basicblock_forward.4} parent=11 // pred_fallthru
        _
      // Predicated region
      $region17: #{basicblock_forward.4} parent=11 // pred_check
        %p221 = pneg %p109
      $region18: #{basicblock_forward.4} parent=11 // pred_check_branch
        %223 = sbr.rel (%p221) target = $region20
      $region19: #{basicblock_forward.4} parent=11 // pred_region
        %p224 = scmp.lt.s32.totalorder %s24, 0
        %s225 = scalar_select %p224, %s24, 0
        %s226 = scalar_lea.vmem %s2, %s225
      $region20: #{basicblock_forward.4} parent=11 // pred_fallthru
        _
    $region12: #{basicblock_forward.4} parent=5 // pred_fallthru
      _
    %p227 = scmp.lt.s32.totalorder %s12, 4
    // Predicated region
    $region21: #{basicblock_forward.4} parent=5 // pred_check
      %p228 = pneg %p227
    $region22: #{basicblock_forward.4} parent=5 // pred_check_branch
      %230 = sbr.rel (%p228) target = $region24
    $region23: #{basicblock_forward.4} parent=5 // pred_region
      // Predicated region
      $region25: #{basicblock_forward.4} parent=23 // pred_check
        %p231 = pneg %p51
      $region26: #{basicblock_forward.4} parent=23 // pred_check_branch
        %233 = sbr.rel (%p231) target = $region28
      $region27: #{basicblock_forward.4} parent=23 // pred_region
        %p234 = scmp.lt.s32.totalorder %s19, 1
        %s235 = scalar_select %p234, %s19, 1
        %s236 = smul.addr %s235, 32
        %s237 = smul.addr %s236, 8
        %s238 = scalar_lea.vmem %s0, %s237
      $region28: #{basicblock_forward.4} parent=23 // pred_fallthru
        _
    $region24: #{basicblock_forward.4} parent=5 // pred_fallthru
      _
    %p239 = scmp.le.s32.totalorder 1, %s12
    %p240 = scmp.lt.s32.totalorder %s12, 5
    %p241 = pnand %p239, %p240
    %p242 = pneg %p241
    // Predicated region
    $region29: #{basicblock_forward.4} parent=5 // pred_check
      _
    $region30: #{basicblock_forward.4} parent=5 // pred_check_branch
      %244 = sbr.rel (%p241) target = $region32
    $region31: #{basicblock_forward.4} parent=5 // pred_region
      %s245 = ssub.s32 %s12, 1
      %p246 = scmp.lt.s32.totalorder %s22, 1
      %s247 = scalar_select %p246, %s22, 1
      %s248 = smul.addr %s247, 32
      %s249 = smul.addr %s248, 8
      %s250 = scalar_lea.vmem %s0, %s249
      %p251 = pneg %p57
      %p252 = pneg %p54
      %p253 = scmp.lt.s32.totalorder %s24, 0
      %s254 = scalar_select %p253, %s24, 0
      %s255 = smul.addr %s254, 2
      %s256 = scalar_lea.vmem %s1, %s255
      %p257 = pneg %p83
      %p258 = pneg %p80
      %p259 = scmp.lt.s32.totalorder %s24, 0
      %s260 = scalar_select %p259, %s24, 0
      %s261 = scalar_lea.vmem %s2, %s260
      %p262 = pneg %p109
      %p263 = pneg %p106
      %p264 = pneg %p139
      %p265 = pneg %p136
      %s266 = smul.u32 8, %s23
      %p267 = scmp.lt.s32.totalorder %s22, 1
      %s268 = scalar_select %p267, %s22, 1
      %p269 = scmp.lt.s32.totalorder %s266, 15
      %s270 = scalar_select %p269, %s266, 15
      %p271 = scmp.lt.s32.totalorder %s24, 0
      %s272 = scalar_select %p271, %s24, 0
      %s273 = smul.addr %s270, 2
      %s274 = sadd.s32 %s272, %s273
      %s275 = smul.addr %s268, 32
      %s276 = sadd.s32 %s274, %s275
      %s277 = smul.addr %s276, 8
      %s278 = scalar_lea.vmem %s3, %s277
      %p279 = pneg %p169
      %p280 = pneg %p166
      %p281 = scmp.lt.s32.totalorder %s22, 1
      %s282 = scalar_select %p281, %s22, 1
      %p283 = scmp.lt.s32.totalorder %s23, 1
      %s284 = scalar_select %p283, %s23, 1
      %p285 = scmp.lt.s32.totalorder %s24, 0
      %s286 = scalar_select %p285, %s24, 0
      %s287 = sadd.s32 %s286, %s284
      %s288 = smul.addr %s282, 2
      %s289 = sadd.s32 %s287, %s288
      %s290 = scalar_lea.vmem %s4, %s289
      %p291 = pneg %p199
      %p292 = pneg %p196
      %p293 = scmp.lt.s32.totalorder %s22, 1
      %s294 = scalar_select %p293, %s22, 1
      %p295 = scmp.lt.s32.totalorder %s23, 1
      %s296 = scalar_select %p295, %s23, 1
      %p297 = scmp.lt.s32.totalorder %s24, 0
      %s298 = scalar_select %p297, %s24, 0
      %s299 = sadd.s32 %s298, %s296
      %s300 = smul.addr %s294, 2
      %s301 = sadd.s32 %s299, %s300
      %s302 = scalar_lea.vmem %s5, %s301
      %p303 = scmp.lt.s32.totalorder %s22, 1
      %s304 = scalar_select %p303, %s22, 1
      %s305 = smul.addr %s304, 32
      %s306 = smul.addr %s305, 8
      %s307 = scalar_lea.vmem %s0, %s306
      %p308 = scmp.lt.s32.totalorder %s24, 0
      %s309 = scalar_select %p308, %s24, 0
      %s310 = smul.addr %s309, 2
      %s311 = scalar_lea.vmem %s1, %s310
      %p312 = scmp.lt.s32.totalorder %s24, 0
      %s313 = scalar_select %p312, %s24, 0
      %s314 = scalar_lea.vmem %s2, %s313
      %s315 = smul.u32 8, %s23
      %p316 = scmp.lt.s32.totalorder %s22, 1
      %s317 = scalar_select %p316, %s22, 1
      %p318 = scmp.lt.s32.totalorder %s315, 15
      %s319 = scalar_select %p318, %s315, 15
      %p320 = scmp.lt.s32.totalorder %s24, 0
      %s321 = scalar_select %p320, %s24, 0
      %s322 = smul.addr %s319, 2
      %s323 = sadd.s32 %s321, %s322
      %s324 = smul.addr %s317, 32
      %s325 = sadd.s32 %s323, %s324
      %s326 = smul.addr %s325, 8
      %s327 = scalar_lea.vmem %s3, %s326
      %s328 = smul.u32 8, %s23
      %p329 = scmp.lt.s32.totalorder %s22, 1
      %s330 = scalar_select %p329, %s22, 1
      %p331 = scmp.lt.s32.totalorder %s23, 1
      %s332 = scalar_select %p331, %s23, 1
      %p333 = scmp.lt.s32.totalorder %s24, 0
      %s334 = scalar_select %p333, %s24, 0
      %s335 = sadd.s32 %s334, %s332
      %s336 = smul.addr %s330, 2
      %s337 = sadd.s32 %s335, %s336
      %s338 = scalar_lea.vmem %s4, %s337
      %p339 = scmp.lt.s32.totalorder %s22, 1
      %s340 = scalar_select %p339, %s22, 1
      %p341 = scmp.lt.s32.totalorder %s23, 1
      %s342 = scalar_select %p341, %s23, 1
      %p343 = scmp.lt.s32.totalorder %s24, 0
      %s344 = scalar_select %p343, %s24, 0
      %s345 = sadd.s32 %s344, %s342
      %s346 = smul.addr %s340, 2
      %s347 = sadd.s32 %s345, %s346
      %s348 = scalar_lea.vmem %s5, %s347
      %s350 = smul.u32 %s23, 8
      %vm351 = vcmask 31744
      %352 = vst.msk [vmem:[#allocation2] sm:$0xff] %vm351, 0.0
      %353 = vst.msk [vmem:[#allocation2 + $0x8] sm:$0xff] %vm351, 0.0
      %354 = vst.msk [vmem:[#allocation2 + $0x10] sm:$0xff] %vm351, 0.0
      %355 = vst.msk [vmem:[#allocation2 + $0x18] sm:$0xff] %vm351, 0.0
      %356 = vst.msk [vmem:[#allocation2 + $0x20] sm:$0xff] %vm351, 0.0
      %357 = vst.msk [vmem:[#allocation2 + $0x28] sm:$0xff] %vm351, 0.0
      %358 = vst.msk [vmem:[#allocation2 + $0x30] sm:$0xff] %vm351, 0.0
      %359 = vst.msk [vmem:[#allocation2 + $0x38] sm:$0xff] %vm351, 0.0
      %360 = vst.msk [vmem:[#allocation2 + $0x40] sm:$0xff] %vm351, 0.0
      %361 = vst.msk [vmem:[#allocation2 + $0x48] sm:$0xff] %vm351, 0.0
      %362 = vst.msk [vmem:[#allocation2 + $0x50] sm:$0xff] %vm351, 0.0
      %363 = vst.msk [vmem:[#allocation2 + $0x58] sm:$0xff] %vm351, 0.0
      %364 = vst.msk [vmem:[#allocation2 + $0x60] sm:$0xff] %vm351, 0.0
      %365 = vst.msk [vmem:[#allocation2 + $0x68] sm:$0xff] %vm351, 0.0
      %366 = vst.msk [vmem:[#allocation2 + $0x70] sm:$0xff] %vm351, 0.0
      %367 = vst.msk [vmem:[#allocation2 + $0x78] sm:$0xff] %vm351, 0.0
      %368 = vst.msk [vmem:[#allocation2 + $0x80] sm:$0xff] %vm351, 0.0
      %369 = vst.msk [vmem:[#allocation2 + $0x88] sm:$0xff] %vm351, 0.0
      %370 = vst.msk [vmem:[#allocation2 + $0x90] sm:$0xff] %vm351, 0.0
      %371 = vst.msk [vmem:[#allocation2 + $0x98] sm:$0xff] %vm351, 0.0
      %372 = vst.msk [vmem:[#allocation2 + $0xa0] sm:$0xff] %vm351, 0.0
      %373 = vst.msk [vmem:[#allocation2 + $0xa8] sm:$0xff] %vm351, 0.0
      %374 = vst.msk [vmem:[#allocation2 + $0xb0] sm:$0xff] %vm351, 0.0
      %375 = vst.msk [vmem:[#allocation2 + $0xb8] sm:$0xff] %vm351, 0.0
      %376 = vst.msk [vmem:[#allocation2 + $0xc0] sm:$0xff] %vm351, 0.0
      %377 = vst.msk [vmem:[#allocation2 + $0xc8] sm:$0xff] %vm351, 0.0
      %378 = vst.msk [vmem:[#allocation2 + $0xd0] sm:$0xff] %vm351, 0.0
      %379 = vst.msk [vmem:[#allocation2 + $0xd8] sm:$0xff] %vm351, 0.0
      %380 = vst.msk [vmem:[#allocation2 + $0xe0] sm:$0xff] %vm351, 0.0
      %381 = vst.msk [vmem:[#allocation2 + $0xe8] sm:$0xff] %vm351, 0.0
      %382 = vst.msk [vmem:[#allocation2 + $0xf0] sm:$0xff] %vm351, 0.0
      %383 = vst.msk [vmem:[#allocation2 + $0xf8] sm:$0xff] %vm351, 0.0
      %384 = vst.msk [vmem:[#allocation2 + $0x100] sm:$0xff] %vm351, 0.0
      %385 = vst.msk [vmem:[#allocation2 + $0x108] sm:$0xff] %vm351, 0.0
      %386 = vst.msk [vmem:[#allocation2 + $0x110] sm:$0xff] %vm351, 0.0
      %387 = vst.msk [vmem:[#allocation2 + $0x118] sm:$0xff] %vm351, 0.0
      %388 = vst.msk [vmem:[#allocation2 + $0x120] sm:$0xff] %vm351, 0.0
      %389 = vst.msk [vmem:[#allocation2 + $0x128] sm:$0xff] %vm351, 0.0
      %390 = vst.msk [vmem:[#allocation2 + $0x130] sm:$0xff] %vm351, 0.0
      %391 = vst.msk [vmem:[#allocation2 + $0x138] sm:$0xff] %vm351, 0.0
      %392 = vst.msk [vmem:[#allocation2 + $0x140] sm:$0xff] %vm351, 0.0
      %393 = vst.msk [vmem:[#allocation2 + $0x148] sm:$0xff] %vm351, 0.0
      %394 = vst.msk [vmem:[#allocation2 + $0x150] sm:$0xff] %vm351, 0.0
      %395 = vst.msk [vmem:[#allocation2 + $0x158] sm:$0xff] %vm351, 0.0
      %396 = vst.msk [vmem:[#allocation2 + $0x160] sm:$0xff] %vm351, 0.0
      %397 = vst.msk [vmem:[#allocation2 + $0x168] sm:$0xff] %vm351, 0.0
      %398 = vst.msk [vmem:[#allocation2 + $0x170] sm:$0xff] %vm351, 0.0
      %399 = vst.msk [vmem:[#allocation2 + $0x178] sm:$0xff] %vm351, 0.0
      %400 = vst.msk [vmem:[#allocation2 + $0x180] sm:$0xff] %vm351, 0.0
      %401 = vst.msk [vmem:[#allocation2 + $0x188] sm:$0xff] %vm351, 0.0
      %402 = vst.msk [vmem:[#allocation2 + $0x190] sm:$0xff] %vm351, 0.0
      %403 = vst.msk [vmem:[#allocation2 + $0x198] sm:$0xff] %vm351, 0.0
      %404 = vst.msk [vmem:[#allocation2 + $0x1a0] sm:$0xff] %vm351, 0.0
      %405 = vst.msk [vmem:[#allocation2 + $0x1a8] sm:$0xff] %vm351, 0.0
      %406 = vst.msk [vmem:[#allocation2 + $0x1b0] sm:$0xff] %vm351, 0.0
      %407 = vst.msk [vmem:[#allocation2 + $0x1b8] sm:$0xff] %vm351, 0.0
      %408 = vst.msk [vmem:[#allocation2 + $0x1c0] sm:$0xff] %vm351, 0.0
      %409 = vst.msk [vmem:[#allocation2 + $0x1c8] sm:$0xff] %vm351, 0.0
      %410 = vst.msk [vmem:[#allocation2 + $0x1d0] sm:$0xff] %vm351, 0.0
      %411 = vst.msk [vmem:[#allocation2 + $0x1d8] sm:$0xff] %vm351, 0.0
      %412 = vst.msk [vmem:[#allocation2 + $0x1e0] sm:$0xff] %vm351, 0.0
      %413 = vst.msk [vmem:[#allocation2 + $0x1e8] sm:$0xff] %vm351, 0.0
      %414 = vst.msk [vmem:[#allocation2 + $0x1f0] sm:$0xff] %vm351, 0.0
      %415 = vst.msk [vmem:[#allocation2 + $0x1f8] sm:$0xff] %vm351, 0.0
      %416 = vst.msk [vmem:[#allocation2 + $0x200] sm:$0xff] %vm351, 0.0
      %417 = vst.msk [vmem:[#allocation2 + $0x208] sm:$0xff] %vm351, 0.0
      %418 = vst.msk [vmem:[#allocation2 + $0x210] sm:$0xff] %vm351, 0.0
      %419 = vst.msk [vmem:[#allocation2 + $0x218] sm:$0xff] %vm351, 0.0
      %420 = vst.msk [vmem:[#allocation2 + $0x220] sm:$0xff] %vm351, 0.0
      %421 = vst.msk [vmem:[#allocation2 + $0x228] sm:$0xff] %vm351, 0.0
      %422 = vst.msk [vmem:[#allocation2 + $0x230] sm:$0xff] %vm351, 0.0
      %423 = vst.msk [vmem:[#allocation2 + $0x238] sm:$0xff] %vm351, 0.0
      %424 = vst.msk [vmem:[#allocation2 + $0x240] sm:$0xff] %vm351, 0.0
      %425 = vst.msk [vmem:[#allocation2 + $0x248] sm:$0xff] %vm351, 0.0
      %426 = vst.msk [vmem:[#allocation2 + $0x250] sm:$0xff] %vm351, 0.0
      %427 = vst.msk [vmem:[#allocation2 + $0x258] sm:$0xff] %vm351, 0.0
      %428 = vst.msk [vmem:[#allocation2 + $0x260] sm:$0xff] %vm351, 0.0
      %429 = vst.msk [vmem:[#allocation2 + $0x268] sm:$0xff] %vm351, 0.0
      %430 = vst.msk [vmem:[#allocation2 + $0x270] sm:$0xff] %vm351, 0.0
      %431 = vst.msk [vmem:[#allocation2 + $0x278] sm:$0xff] %vm351, 0.0
      %432 = vst.msk [vmem:[#allocation2 + $0x280] sm:$0xff] %vm351, 0.0
      %433 = vst.msk [vmem:[#allocation2 + $0x288] sm:$0xff] %vm351, 0.0
      %434 = vst.msk [vmem:[#allocation2 + $0x290] sm:$0xff] %vm351, 0.0
      %435 = vst.msk [vmem:[#allocation2 + $0x298] sm:$0xff] %vm351, 0.0
      %436 = vst.msk [vmem:[#allocation2 + $0x2a0] sm:$0xff] %vm351, 0.0
      %437 = vst.msk [vmem:[#allocation2 + $0x2a8] sm:$0xff] %vm351, 0.0
      %438 = vst.msk [vmem:[#allocation2 + $0x2b0] sm:$0xff] %vm351, 0.0
      %439 = vst.msk [vmem:[#allocation2 + $0x2b8] sm:$0xff] %vm351, 0.0
      %440 = vst.msk [vmem:[#allocation2 + $0x2c0] sm:$0xff] %vm351, 0.0
      %441 = vst.msk [vmem:[#allocation2 + $0x2c8] sm:$0xff] %vm351, 0.0
      %442 = vst.msk [vmem:[#allocation2 + $0x2d0] sm:$0xff] %vm351, 0.0
      %443 = vst.msk [vmem:[#allocation2 + $0x2d8] sm:$0xff] %vm351, 0.0
      %444 = vst.msk [vmem:[#allocation2 + $0x2e0] sm:$0xff] %vm351, 0.0
      %445 = vst.msk [vmem:[#allocation2 + $0x2e8] sm:$0xff] %vm351, 0.0
      %446 = vst.msk [vmem:[#allocation2 + $0x2f0] sm:$0xff] %vm351, 0.0
      %447 = vst.msk [vmem:[#allocation2 + $0x2f8] sm:$0xff] %vm351, 0.0
      %448 = vst.msk [vmem:[#allocation2 + $0x300] sm:$0xff] %vm351, 0.0
      %449 = vst.msk [vmem:[#allocation2 + $0x308] sm:$0xff] %vm351, 0.0
      %450 = vst.msk [vmem:[#allocation2 + $0x310] sm:$0xff] %vm351, 0.0
      %451 = vst.msk [vmem:[#allocation2 + $0x318] sm:$0xff] %vm351, 0.0
      %452 = vst.msk [vmem:[#allocation2 + $0x320] sm:$0xff] %vm351, 0.0
      %453 = vst.msk [vmem:[#allocation2 + $0x328] sm:$0xff] %vm351, 0.0
      %454 = vst.msk [vmem:[#allocation2 + $0x330] sm:$0xff] %vm351, 0.0
      %455 = vst.msk [vmem:[#allocation2 + $0x338] sm:$0xff] %vm351, 0.0
      %456 = vst.msk [vmem:[#allocation2 + $0x340] sm:$0xff] %vm351, 0.0
      %457 = vst.msk [vmem:[#allocation2 + $0x348] sm:$0xff] %vm351, 0.0
      %458 = vst.msk [vmem:[#allocation2 + $0x350] sm:$0xff] %vm351, 0.0
      %459 = vst.msk [vmem:[#allocation2 + $0x358] sm:$0xff] %vm351, 0.0
      %v460 = vld [vmem:[%s307] sm:$0xff]
      %v461 = vld [vmem:[%s307 + $0x8] sm:$0xff]
      %v462 = vld [vmem:[%s307 + $0x10] sm:$0xff]
      %v463 = vld [vmem:[%s307 + $0x18] sm:$0xff]
      %v464 = vld [vmem:[%s307 + $0x20] sm:$0xff]
      %v465 = vld [vmem:[%s307 + $0x28] sm:$0xff]
      %v466 = vld [vmem:[%s307 + $0x30] sm:$0xff]
      %v467 = vld [vmem:[%s307 + $0x38] sm:$0xff]
      %v468 = vld [vmem:[%s307 + $0x40] sm:$0xff]
      %v469 = vld [vmem:[%s307 + $0x48] sm:$0xff]
      %v470 = vld [vmem:[%s307 + $0x50] sm:$0xff]
      %v471 = vld [vmem:[%s307 + $0x58] sm:$0xff]
      %v472 = vld [vmem:[%s307 + $0x60] sm:$0xff]
      %v473 = vld [vmem:[%s307 + $0x68] sm:$0xff]
      %v474 = vld [vmem:[%s307 + $0x70] sm:$0xff]
      %v475 = vld [vmem:[%s307 + $0x78] sm:$0xff]
      %v476 = vld [vmem:[%s307 + $0x80] sm:$0xff]
      %v477 = vld [vmem:[%s307 + $0x88] sm:$0xff]
      %v478 = vld [vmem:[%s307 + $0x90] sm:$0xff]
      %v479 = vld [vmem:[%s307 + $0x98] sm:$0xff]
      %v480 = vld [vmem:[%s307 + $0xa0] sm:$0xff]
      %v481 = vld [vmem:[%s307 + $0xa8] sm:$0xff]
      %v482 = vld [vmem:[%s307 + $0xb0] sm:$0xff]
      %v483 = vld [vmem:[%s307 + $0xb8] sm:$0xff]
      %v484 = vld [vmem:[%s307 + $0xc0] sm:$0xff]
      %v485 = vld [vmem:[%s307 + $0xc8] sm:$0xff]
      %v486 = vld [vmem:[%s307 + $0xd0] sm:$0xff]
      %v487 = vld [vmem:[%s307 + $0xd8] sm:$0xff]
      %v488 = vld [vmem:[%s307 + $0xe0] sm:$0xff]
      %v489 = vld [vmem:[%s307 + $0xe8] sm:$0xff]
      %v490 = vld [vmem:[%s307 + $0xf0] sm:$0xff]
      %v491 = vld [vmem:[%s307 + $0xf8] sm:$0xff]
      %s492 = scalar_lea.vmem [#allocation2], 48
      %493 = vst.msk [vmem:[%s492 + $0x10] sm:$0xff] %vm351, %v460
      %494 = vst.msk [vmem:[%s492 + $0x18] sm:$0xff] %vm351, %v461
      %495 = vst.msk [vmem:[%s492 + $0x40] sm:$0xff] %vm351, %v462
      %496 = vst.msk [vmem:[%s492 + $0x48] sm:$0xff] %vm351, %v463
      %497 = vst.msk [vmem:[%s492 + $0x70] sm:$0xff] %vm351, %v464
      %498 = vst.msk [vmem:[%s492 + $0x78] sm:$0xff] %vm351, %v465
      %499 = vst.msk [vmem:[%s492 + $0xa0] sm:$0xff] %vm351, %v466
      %500 = vst.msk [vmem:[%s492 + $0xa8] sm:$0xff] %vm351, %v467
      %501 = vst.msk [vmem:[%s492 + $0xd0] sm:$0xff] %vm351, %v468
      %502 = vst.msk [vmem:[%s492 + $0xd8] sm:$0xff] %vm351, %v469
      %503 = vst.msk [vmem:[%s492 + $0x100] sm:$0xff] %vm351, %v470
      %504 = vst.msk [vmem:[%s492 + $0x108] sm:$0xff] %vm351, %v471
      %505 = vst.msk [vmem:[%s492 + $0x130] sm:$0xff] %vm351, %v472
      %506 = vst.msk [vmem:[%s492 + $0x138] sm:$0xff] %vm351, %v473
      %507 = vst.msk [vmem:[%s492 + $0x160] sm:$0xff] %vm351, %v474
      %508 = vst.msk [vmem:[%s492 + $0x168] sm:$0xff] %vm351, %v475
      %509 = vst.msk [vmem:[%s492 + $0x190] sm:$0xff] %vm351, %v476
      %510 = vst.msk [vmem:[%s492 + $0x198] sm:$0xff] %vm351, %v477
      %511 = vst.msk [vmem:[%s492 + $0x1c0] sm:$0xff] %vm351, %v478
      %512 = vst.msk [vmem:[%s492 + $0x1c8] sm:$0xff] %vm351, %v479
      %513 = vst.msk [vmem:[%s492 + $0x1f0] sm:$0xff] %vm351, %v480
      %514 = vst.msk [vmem:[%s492 + $0x1f8] sm:$0xff] %vm351, %v481
      %515 = vst.msk [vmem:[%s492 + $0x220] sm:$0xff] %vm351, %v482
      %516 = vst.msk [vmem:[%s492 + $0x228] sm:$0xff] %vm351, %v483
      %517 = vst.msk [vmem:[%s492 + $0x250] sm:$0xff] %vm351, %v484
      %518 = vst.msk [vmem:[%s492 + $0x258] sm:$0xff] %vm351, %v485
      %519 = vst.msk [vmem:[%s492 + $0x280] sm:$0xff] %vm351, %v486
      %520 = vst.msk [vmem:[%s492 + $0x288] sm:$0xff] %vm351, %v487
      %521 = vst.msk [vmem:[%s492 + $0x2b0] sm:$0xff] %vm351, %v488
      %522 = vst.msk [vmem:[%s492 + $0x2b8] sm:$0xff] %vm351, %v489
      %523 = vst.msk [vmem:[%s492 + $0x2e0] sm:$0xff] %vm351, %v490
      %524 = vst.msk [vmem:[%s492 + $0x2e8] sm:$0xff] %vm351, %v491
      %s525 = smul.u32 %s350, 48
      %s526 = scalar_lea.vmem [#allocation2], %s525
      %v527 = vld [vmem:[%s526 + $0x8] sm:$0xff]
      %v528 = vld [vmem:[%s526 + $0x10] sm:$0xff]
      %v529 = vld [vmem:[%s526 + $0x18] sm:$0xff]
      %v530 = vld [vmem:[%s526 + $0x20] sm:$0xff]
      %v531 = vld [vmem:[%s526 + $0x38] sm:$0xff]
      %v532 = vld [vmem:[%s526 + $0x40] sm:$0xff]
      %v533 = vld [vmem:[%s526 + $0x48] sm:$0xff]
      %v534 = vld [vmem:[%s526 + $0x50] sm:$0xff]
      %v535 = vld [vmem:[%s526 + $0x68] sm:$0xff]
      %v536 = vld [vmem:[%s526 + $0x70] sm:$0xff]
      %v537 = vld [vmem:[%s526 + $0x78] sm:$0xff]
      %v538 = vld [vmem:[%s526 + $0x80] sm:$0xff]
      %v539 = vld [vmem:[%s526 + $0x98] sm:$0xff]
      %v540 = vld [vmem:[%s526 + $0xa0] sm:$0xff]
      %v541 = vld [vmem:[%s526 + $0xa8] sm:$0xff]
      %v542 = vld [vmem:[%s526 + $0xb0] sm:$0xff]
      %v543 = vld [vmem:[%s526 + $0xc8] sm:$0xff]
      %v544 = vld [vmem:[%s526 + $0xd0] sm:$0xff]
      %v545 = vld [vmem:[%s526 + $0xd8] sm:$0xff]
      %v546 = vld [vmem:[%s526 + $0xe0] sm:$0xff]
      %v547 = vld [vmem:[%s526 + $0xf8] sm:$0xff]
      %v548 = vld [vmem:[%s526 + $0x100] sm:$0xff]
      %v549 = vld [vmem:[%s526 + $0x108] sm:$0xff]
      %v550 = vld [vmem:[%s526 + $0x110] sm:$0xff]
      %v551 = vld [vmem:[%s526 + $0x128] sm:$0xff]
      %v552 = vld [vmem:[%s526 + $0x130] sm:$0xff]
      %v553 = vld [vmem:[%s526 + $0x138] sm:$0xff]
      %v554 = vld [vmem:[%s526 + $0x140] sm:$0xff]
      %v555 = vld [vmem:[%s526 + $0x158] sm:$0xff]
      %v556 = vld [vmem:[%s526 + $0x160] sm:$0xff]
      %v557 = vld [vmem:[%s526 + $0x168] sm:$0xff]
      %v558 = vld [vmem:[%s526 + $0x170] sm:$0xff]
      %vm583 = vcmask 1040384
      %v584 = vrot.slane %v527, 7
      %v585 = vrot.slane %v528, 7
      %v586 = vsel %vm583, %v584, %v585
      %v587 = vrot.slane %v529, 7
      %v588 = vsel %vm583, %v585, %v587
      %v589 = vrot.slane %v531, 7
      %v590 = vrot.slane %v532, 7
      %v591 = vsel %vm583, %v589, %v590
      %v592 = vrot.slane %v533, 7
      %v593 = vsel %vm583, %v590, %v592
      %v594 = vrot.slane %v535, 7
      %v595 = vrot.slane %v536, 7
      %v596 = vsel %vm583, %v594, %v595
      %v597 = vrot.slane %v537, 7
      %v598 = vsel %vm583, %v595, %v597
      %v599 = vrot.slane %v539, 7
      %v600 = vrot.slane %v540, 7
      %v601 = vsel %vm583, %v599, %v600
      %v602 = vrot.slane %v541, 7
      %v603 = vsel %vm583, %v600, %v602
      %v604 = vrot.slane %v543, 7
      %v605 = vrot.slane %v544, 7
      %v606 = vsel %vm583, %v604, %v605
      %v607 = vrot.slane %v545, 7
      %v608 = vsel %vm583, %v605, %v607
      %v609 = vrot.slane %v547, 7
      %v610 = vrot.slane %v548, 7
      %v611 = vsel %vm583, %v609, %v610
      %v612 = vrot.slane %v549, 7
      %v613 = vsel %vm583, %v610, %v612
      %v614 = vrot.slane %v551, 7
      %v615 = vrot.slane %v552, 7
      %v616 = vsel %vm583, %v614, %v615
      %v617 = vrot.slane %v553, 7
      %v618 = vsel %vm583, %v615, %v617
      %v619 = vrot.slane %v555, 7
      %v620 = vrot.slane %v556, 7
      %v621 = vsel %vm583, %v619, %v620
      %v622 = vrot.slane %v557, 7
      %v623 = vsel %vm583, %v620, %v622
      %v640 = vpack.c.bf16 %v588, %v586
      %v641 = vpack.c.bf16 %v593, %v591
      %v642 = vpack.c.bf16 %v598, %v596
      %v643 = vpack.c.bf16 %v603, %v601
      %v644 = vpack.c.bf16 %v608, %v606
      %v645 = vpack.c.bf16 %v613, %v611
      %v646 = vpack.c.bf16 %v618, %v616
      %v647 = vpack.c.bf16 %v623, %v621
      %v648 = vld [vmem:[%s311] sm:$0x3]
      %v649 = vpack.c.bf16 %v529, %v528
      %v650 = vpack.c.bf16 %v533, %v532
      %v651 = vpack.c.bf16 %v537, %v536
      %v652 = vpack.c.bf16 %v541, %v540
      %v653 = vpack.c.bf16 %v545, %v544
      %v654 = vpack.c.bf16 %v549, %v548
      %v655 = vpack.c.bf16 %v553, %v552
      %v656 = vpack.c.bf16 %v557, %v556
      %s657 = scalar_lea.vmem %s311, 2
      %v658 = vld [vmem:[%s657] sm:$0x3]
      %v660 = vsel %vm351, %v649, 0
      %v663 = vsel %vm351, %v650, 0
      %v666 = vsel %vm351, %v651, 0
      %v669 = vsel %vm351, %v652, 0
      %v672 = vsel %vm351, %v653, 0
      %v675 = vsel %vm351, %v654, 0
      %v678 = vsel %vm351, %v655, 0
      %v681 = vsel %vm351, %v656, 0
      %vm683 = vcmask 1041408
      %v685 = vsel %vm683, %v658, 0
      %687 = vmatpush.bf16.msra.mxu0 0
      %688 = vmatpush.bf16.msra.mxu0 0
      %689 = vmatpush.bf16.msra.mxu0 0
      %690 = vmatpush.bf16.msra.mxu0 0
      %691 = vmatpush.bf16.msra.mxu0 0
      %692 = vmatpush.bf16.msra.mxu0 0
      %693 = vmatpush.bf16.msra.mxu0 0
      %694 = vmatpush.bf16.msra.mxu0 %v685
      %695 = vmatmul.bf16.gmra.mxu0 %v660
      %v696 = vpop.f32.mrf.mxu0
      %v697 = vadd.f32 0.0, %v696
      %v698 = vpop.f32.mrf.mxu0
      %v699 = vadd.f32 0.0, %v698
      %700 = vmatmul.bf16.gmra.mxu0 %v663
      %v701 = vpop.f32.mrf.mxu0
      %v702 = vadd.f32 0.0, %v701
      %v703 = vpop.f32.mrf.mxu0
      %v704 = vadd.f32 0.0, %v703
      %705 = vmatmul.bf16.gmra.mxu0 %v666
      %v706 = vpop.f32.mrf.mxu0
      %v707 = vadd.f32 0.0, %v706
      %v708 = vpop.f32.mrf.mxu0
      %v709 = vadd.f32 0.0, %v708
      %710 = vmatmul.bf16.gmra.mxu0 %v669
      %v711 = vpop.f32.mrf.mxu0
      %v712 = vadd.f32 0.0, %v711
      %v713 = vpop.f32.mrf.mxu0
      %v714 = vadd.f32 0.0, %v713
      %715 = vmatmul.bf16.gmra.mxu0 %v672
      %v716 = vpop.f32.mrf.mxu0
      %v717 = vadd.f32 0.0, %v716
      %v718 = vpop.f32.mrf.mxu0
      %v719 = vadd.f32 0.0, %v718
      %720 = vmatmul.bf16.gmra.mxu0 %v675
      %v721 = vpop.f32.mrf.mxu0
      %v722 = vadd.f32 0.0, %v721
      %v723 = vpop.f32.mrf.mxu0
      %v724 = vadd.f32 0.0, %v723
      %725 = vmatmul.bf16.gmra.mxu0 %v678
      %v726 = vpop.f32.mrf.mxu0
      %v727 = vadd.f32 0.0, %v726
      %v728 = vpop.f32.mrf.mxu0
      %v729 = vadd.f32 0.0, %v728
      %730 = vmatmul.bf16.gmra.mxu0 %v681
      %v731 = vpop.f32.mrf.mxu0
      %v732 = vadd.f32 0.0, %v731
      %v733 = vpop.f32.mrf.mxu0
      %v734 = vadd.f32 0.0, %v733
      %735 = vdwg.mxu0
      %v737 = vsel %vm351, %v640, 0
      %v740 = vsel %vm351, %v641, 0
      %v743 = vsel %vm351, %v642, 0
      %v746 = vsel %vm351, %v643, 0
      %v749 = vsel %vm351, %v644, 0
      %v752 = vsel %vm351, %v645, 0
      %v755 = vsel %vm351, %v646, 0
      %v758 = vsel %vm351, %v647, 0
      %v761 = vsel %vm683, %v648, 0
      %763 = vmatpush.bf16.msra.mxu0 0
      %764 = vmatpush.bf16.msra.mxu0 0
      %765 = vmatpush.bf16.msra.mxu0 0
      %766 = vmatpush.bf16.msra.mxu0 0
      %767 = vmatpush.bf16.msra.mxu0 0
      %768 = vmatpush.bf16.msra.mxu0 0
      %769 = vmatpush.bf16.msra.mxu0 0
      %770 = vmatpush.bf16.msra.mxu0 %v761
      %771 = vmatmul.bf16.gmra.mxu0 %v737
      %v772 = vpop.f32.mrf.mxu0
      %v773 = vadd.f32 %v697, %v772
      %v774 = vpop.f32.mrf.mxu0
      %v775 = vadd.f32 %v699, %v774
      %776 = vmatmul.bf16.gmra.mxu0 %v740
      %v777 = vpop.f32.mrf.mxu0
      %v778 = vadd.f32 %v702, %v777
      %v779 = vpop.f32.mrf.mxu0
      %v780 = vadd.f32 %v704, %v779
      %781 = vmatmul.bf16.gmra.mxu0 %v743
      %v782 = vpop.f32.mrf.mxu0
      %v783 = vadd.f32 %v707, %v782
      %v784 = vpop.f32.mrf.mxu0
      %v785 = vadd.f32 %v709, %v784
      %786 = vmatmul.bf16.gmra.mxu0 %v746
      %v787 = vpop.f32.mrf.mxu0
      %v788 = vadd.f32 %v712, %v787
      %v789 = vpop.f32.mrf.mxu0
      %v790 = vadd.f32 %v714, %v789
      %791 = vmatmul.bf16.gmra.mxu0 %v749
      %v792 = vpop.f32.mrf.mxu0
      %v793 = vadd.f32 %v717, %v792
      %v794 = vpop.f32.mrf.mxu0
      %v795 = vadd.f32 %v719, %v794
      %796 = vmatmul.bf16.gmra.mxu0 %v752
      %v797 = vpop.f32.mrf.mxu0
      %v798 = vadd.f32 %v722, %v797
      %v799 = vpop.f32.mrf.mxu0
      %v800 = vadd.f32 %v724, %v799
      %801 = vmatmul.bf16.gmra.mxu0 %v755
      %v802 = vpop.f32.mrf.mxu0
      %v803 = vadd.f32 %v727, %v802
      %v804 = vpop.f32.mrf.mxu0
      %v805 = vadd.f32 %v729, %v804
      %806 = vmatmul.bf16.gmra.mxu0 %v758
      %v807 = vpop.f32.mrf.mxu0
      %v808 = vadd.f32 %v732, %v807
      %v809 = vpop.f32.mrf.mxu0
      %v810 = vadd.f32 %v734, %v809
      %811 = vdwg.mxu0
      %vm820 = vcmask 1046528
      %v821 = vrot.slane %v528, 1
      %v822 = vrot.slane %v529, 1
      %v823 = vsel %vm820, %v821, %v822
      %v824 = vrot.slane %v530, 1
      %v825 = vsel %vm820, %v822, %v824
      %v826 = vrot.slane %v532, 1
      %v827 = vrot.slane %v533, 1
      %v828 = vsel %vm820, %v826, %v827
      %v829 = vrot.slane %v534, 1
      %v830 = vsel %vm820, %v827, %v829
      %v831 = vrot.slane %v536, 1
      %v832 = vrot.slane %v537, 1
      %v833 = vsel %vm820, %v831, %v832
      %v834 = vrot.slane %v538, 1
      %v835 = vsel %vm820, %v832, %v834
      %v836 = vrot.slane %v540, 1
      %v837 = vrot.slane %v541, 1
      %v838 = vsel %vm820, %v836, %v837
      %v839 = vrot.slane %v542, 1
      %v840 = vsel %vm820, %v837, %v839
      %v841 = vrot.slane %v544, 1
      %v842 = vrot.slane %v545, 1
      %v843 = vsel %vm820, %v841, %v842
      %v844 = vrot.slane %v546, 1
      %v845 = vsel %vm820, %v842, %v844
      %v846 = vrot.slane %v548, 1
      %v847 = vrot.slane %v549, 1
      %v848 = vsel %vm820, %v846, %v847
      %v849 = vrot.slane %v550, 1
      %v850 = vsel %vm820, %v847, %v849
      %v851 = vrot.slane %v552, 1
      %v852 = vrot.slane %v553, 1
      %v853 = vsel %vm820, %v851, %v852
      %v854 = vrot.slane %v554, 1
      %v855 = vsel %vm820, %v852, %v854
      %v856 = vrot.slane %v556, 1
      %v857 = vrot.slane %v557, 1
      %v858 = vsel %vm820, %v856, %v857
      %v859 = vrot.slane %v558, 1
      %v860 = vsel %vm820, %v857, %v859
      %v877 = vpack.c.bf16 %v825, %v823
      %v878 = vpack.c.bf16 %v830, %v828
      %v879 = vpack.c.bf16 %v835, %v833
      %v880 = vpack.c.bf16 %v840, %v838
      %v881 = vpack.c.bf16 %v845, %v843
      %v882 = vpack.c.bf16 %v850, %v848
      %v883 = vpack.c.bf16 %v855, %v853
      %v884 = vpack.c.bf16 %v860, %v858
      %s885 = scalar_lea.vmem %s311, 4
      %v886 = vld [vmem:[%s885] sm:$0x3]
      %v888 = vsel %vm351, %v877, 0
      %v891 = vsel %vm351, %v878, 0
      %v894 = vsel %vm351, %v879, 0
      %v897 = vsel %vm351, %v880, 0
      %v900 = vsel %vm351, %v881, 0
      %v903 = vsel %vm351, %v882, 0
      %v906 = vsel %vm351, %v883, 0
      %v909 = vsel %vm351, %v884, 0
      %v912 = vsel %vm683, %v886, 0
      %914 = vmatpush.bf16.msra.mxu0 0
      %915 = vmatpush.bf16.msra.mxu0 0
      %916 = vmatpush.bf16.msra.mxu0 0
      %917 = vmatpush.bf16.msra.mxu0 0
      %918 = vmatpush.bf16.msra.mxu0 0
      %919 = vmatpush.bf16.msra.mxu0 0
      %920 = vmatpush.bf16.msra.mxu0 0
      %921 = vmatpush.bf16.msra.mxu0 %v912
      %922 = vmatmul.bf16.gmra.mxu0 %v888
      %v923 = vpop.f32.mrf.mxu0
      %v924 = vadd.f32 0.0, %v923
      %v925 = vpop.f32.mrf.mxu0
      %v926 = vadd.f32 0.0, %v925
      %927 = vmatmul.bf16.gmra.mxu0 %v891
      %v928 = vpop.f32.mrf.mxu0
      %v929 = vadd.f32 0.0, %v928
      %v930 = vpop.f32.mrf.mxu0
      %v931 = vadd.f32 0.0, %v930
      %932 = vmatmul.bf16.gmra.mxu0 %v894
      %v933 = vpop.f32.mrf.mxu0
      %v934 = vadd.f32 0.0, %v933
      %v935 = vpop.f32.mrf.mxu0
      %v936 = vadd.f32 0.0, %v935
      %937 = vmatmul.bf16.gmra.mxu0 %v897
      %v938 = vpop.f32.mrf.mxu0
      %v939 = vadd.f32 0.0, %v938
      %v940 = vpop.f32.mrf.mxu0
      %v941 = vadd.f32 0.0, %v940
      %942 = vmatmul.bf16.gmra.mxu0 %v900
      %v943 = vpop.f32.mrf.mxu0
      %v944 = vadd.f32 0.0, %v943
      %v945 = vpop.f32.mrf.mxu0
      %v946 = vadd.f32 0.0, %v945
      %947 = vmatmul.bf16.gmra.mxu0 %v903
      %v948 = vpop.f32.mrf.mxu0
      %v949 = vadd.f32 0.0, %v948
      %v950 = vpop.f32.mrf.mxu0
      %v951 = vadd.f32 0.0, %v950
      %952 = vmatmul.bf16.gmra.mxu0 %v906
      %v953 = vpop.f32.mrf.mxu0
      %v954 = vadd.f32 0.0, %v953
      %v955 = vpop.f32.mrf.mxu0
      %v956 = vadd.f32 0.0, %v955
      %957 = vmatmul.bf16.gmra.mxu0 %v909
      %v958 = vpop.f32.mrf.mxu0
      %v959 = vadd.f32 0.0, %v958
      %v960 = vpop.f32.mrf.mxu0
      %v961 = vadd.f32 0.0, %v960
      %962 = vdwg.mxu0
      %v963 = vadd.f32 %v773, %v924
      %v964 = vadd.f32 %v775, %v926
      %v965 = vadd.f32 %v778, %v929
      %v966 = vadd.f32 %v780, %v931
      %v967 = vadd.f32 %v783, %v934
      %v968 = vadd.f32 %v785, %v936
      %v969 = vadd.f32 %v788, %v939
      %v970 = vadd.f32 %v790, %v941
      %v971 = vadd.f32 %v793, %v944
      %v972 = vadd.f32 %v795, %v946
      %v973 = vadd.f32 %v798, %v949
      %v974 = vadd.f32 %v800, %v951
      %v975 = vadd.f32 %v803, %v954
      %v976 = vadd.f32 %v805, %v956
      %v977 = vadd.f32 %v808, %v959
      %v978 = vadd.f32 %v810, %v961
      %s979 = sadd.s32 %s350, 1
      %s980 = smul.u32 %s979, 48
      %s981 = scalar_lea.vmem [#allocation2], %s980
      %v982 = vld [vmem:[%s981 + $0x8] sm:$0xff]
      %v983 = vld [vmem:[%s981 + $0x10] sm:$0xff]
      %v984 = vld [vmem:[%s981 + $0x18] sm:$0xff]
      %v985 = vld [vmem:[%s981 + $0x20] sm:$0xff]
      %v986 = vld [vmem:[%s981 + $0x38] sm:$0xff]
      %v987 = vld [vmem:[%s981 + $0x40] sm:$0xff]
      %v988 = vld [vmem:[%s981 + $0x48] sm:$0xff]
      %v989 = vld [vmem:[%s981 + $0x50] sm:$0xff]
      %v990 = vld [vmem:[%s981 + $0x68] sm:$0xff]
      %v991 = vld [vmem:[%s981 + $0x70] sm:$0xff]
      %v992 = vld [vmem:[%s981 + $0x78] sm:$0xff]
      %v993 = vld [vmem:[%s981 + $0x80] sm:$0xff]
      %v994 = vld [vmem:[%s981 + $0x98] sm:$0xff]
      %v995 = vld [vmem:[%s981 + $0xa0] sm:$0xff]
      %v996 = vld [vmem:[%s981 + $0xa8] sm:$0xff]
      %v997 = vld [vmem:[%s981 + $0xb0] sm:$0xff]
      %v998 = vld [vmem:[%s981 + $0xc8] sm:$0xff]
      %v999 = vld [vmem:[%s981 + $0xd0] sm:$0xff]
      %v1000 = vld [vmem:[%s981 + $0xd8] sm:$0xff]
      %v1001 = vld [vmem:[%s981 + $0xe0] sm:$0xff]
      %v1002 = vld [vmem:[%s981 + $0xf8] sm:$0xff]
      %v1003 = vld [vmem:[%s981 + $0x100] sm:$0xff]
      %v1004 = vld [vmem:[%s981 + $0x108] sm:$0xff]
      %v1005 = vld [vmem:[%s981 + $0x110] sm:$0xff]
      %v1006 = vld [vmem:[%s981 + $0x128] sm:$0xff]
      %v1007 = vld [vmem:[%s981 + $0x130] sm:$0xff]
      %v1008 = vld [vmem:[%s981 + $0x138] sm:$0xff]
      %v1009 = vld [vmem:[%s981 + $0x140] sm:$0xff]
      %v1010 = vld [vmem:[%s981 + $0x158] sm:$0xff]
      %v1011 = vld [vmem:[%s981 + $0x160] sm:$0xff]
      %v1012 = vld [vmem:[%s981 + $0x168] sm:$0xff]
      %v1013 = vld [vmem:[%s981 + $0x170] sm:$0xff]
      %v1038 = vrot.slane %v982, 7
      %v1039 = vrot.slane %v983, 7
      %v1040 = vsel %vm583, %v1038, %v1039
      %v1041 = vrot.slane %v984, 7
      %v1042 = vsel %vm583, %v1039, %v1041
      %v1043 = vrot.slane %v986, 7
      %v1044 = vrot.slane %v987, 7
      %v1045 = vsel %vm583, %v1043, %v1044
      %v1046 = vrot.slane %v988, 7
      %v1047 = vsel %vm583, %v1044, %v1046
      %v1048 = vrot.slane %v990, 7
      %v1049 = vrot.slane %v991, 7
      %v1050 = vsel %vm583, %v1048, %v1049
      %v1051 = vrot.slane %v992, 7
      %v1052 = vsel %vm583, %v1049, %v1051
      %v1053 = vrot.slane %v994, 7
      %v1054 = vrot.slane %v995, 7
      %v1055 = vsel %vm583, %v1053, %v1054
      %v1056 = vrot.slane %v996, 7
      %v1057 = vsel %vm583, %v1054, %v1056
      %v1058 = vrot.slane %v998, 7
      %v1059 = vrot.slane %v999, 7
      %v1060 = vsel %vm583, %v1058, %v1059
      %v1061 = vrot.slane %v1000, 7
      %v1062 = vsel %vm583, %v1059, %v1061
      %v1063 = vrot.slane %v1002, 7
      %v1064 = vrot.slane %v1003, 7
      %v1065 = vsel %vm583, %v1063, %v1064
      %v1066 = vrot.slane %v1004, 7
      %v1067 = vsel %vm583, %v1064, %v1066
      %v1068 = vrot.slane %v1006, 7
      %v1069 = vrot.slane %v1007, 7
      %v1070 = vsel %vm583, %v1068, %v1069
      %v1071 = vrot.slane %v1008, 7
      %v1072 = vsel %vm583, %v1069, %v1071
      %v1073 = vrot.slane %v1010, 7
      %v1074 = vrot.slane %v1011, 7
      %v1075 = vsel %vm583, %v1073, %v1074
      %v1076 = vrot.slane %v1012, 7
      %v1077 = vsel %vm583, %v1074, %v1076
      %v1094 = vpack.c.bf16 %v1042, %v1040
      %v1095 = vpack.c.bf16 %v1047, %v1045
      %v1096 = vpack.c.bf16 %v1052, %v1050
      %v1097 = vpack.c.bf16 %v1057, %v1055
      %v1098 = vpack.c.bf16 %v1062, %v1060
      %v1099 = vpack.c.bf16 %v1067, %v1065
      %v1100 = vpack.c.bf16 %v1072, %v1070
      %v1101 = vpack.c.bf16 %v1077, %v1075
      %s1102 = scalar_lea.vmem %s311, 6
      %v1103 = vld [vmem:[%s1102] sm:$0x3]
      %v1105 = vsel %vm351, %v1094, 0
      %v1108 = vsel %vm351, %v1095, 0
      %v1111 = vsel %vm351, %v1096, 0
      %v1114 = vsel %vm351, %v1097, 0
      %v1117 = vsel %vm351, %v1098, 0
      %v1120 = vsel %vm351, %v1099, 0
      %v1123 = vsel %vm351, %v1100, 0
      %v1126 = vsel %vm351, %v1101, 0
      %v1129 = vsel %vm683, %v1103, 0
      %1131 = vmatpush.bf16.msra.mxu0 0
      %1132 = vmatpush.bf16.msra.mxu0 0
      %1133 = vmatpush.bf16.msra.mxu0 0
      %1134 = vmatpush.bf16.msra.mxu0 0
      %1135 = vmatpush.bf16.msra.mxu0 0
      %1136 = vmatpush.bf16.msra.mxu0 0
      %1137 = vmatpush.bf16.msra.mxu0 0
      %1138 = vmatpush.bf16.msra.mxu0 %v1129
      %1139 = vmatmul.bf16.gmra.mxu0 %v1105
      %v1140 = vpop.f32.mrf.mxu0
      %v1141 = vadd.f32 0.0, %v1140
      %v1142 = vpop.f32.mrf.mxu0
      %v1143 = vadd.f32 0.0, %v1142
      %1144 = vmatmul.bf16.gmra.mxu0 %v1108
      %v1145 = vpop.f32.mrf.mxu0
      %v1146 = vadd.f32 0.0, %v1145
      %v1147 = vpop.f32.mrf.mxu0
      %v1148 = vadd.f32 0.0, %v1147
      %1149 = vmatmul.bf16.gmra.mxu0 %v1111
      %v1150 = vpop.f32.mrf.mxu0
      %v1151 = vadd.f32 0.0, %v1150
      %v1152 = vpop.f32.mrf.mxu0
      %v1153 = vadd.f32 0.0, %v1152
      %1154 = vmatmul.bf16.gmra.mxu0 %v1114
      %v1155 = vpop.f32.mrf.mxu0
      %v1156 = vadd.f32 0.0, %v1155
      %v1157 = vpop.f32.mrf.mxu0
      %v1158 = vadd.f32 0.0, %v1157
      %1159 = vmatmul.bf16.gmra.mxu0 %v1117
      %v1160 = vpop.f32.mrf.mxu0
      %v1161 = vadd.f32 0.0, %v1160
      %v1162 = vpop.f32.mrf.mxu0
      %v1163 = vadd.f32 0.0, %v1162
      %1164 = vmatmul.bf16.gmra.mxu0 %v1120
      %v1165 = vpop.f32.mrf.mxu0
      %v1166 = vadd.f32 0.0, %v1165
      %v1167 = vpop.f32.mrf.mxu0
      %v1168 = vadd.f32 0.0, %v1167
      %1169 = vmatmul.bf16.gmra.mxu0 %v1123
      %v1170 = vpop.f32.mrf.mxu0
      %v1171 = vadd.f32 0.0, %v1170
      %v1172 = vpop.f32.mrf.mxu0
      %v1173 = vadd.f32 0.0, %v1172
      %1174 = vmatmul.bf16.gmra.mxu0 %v1126
      %v1175 = vpop.f32.mrf.mxu0
      %v1176 = vadd.f32 0.0, %v1175
      %v1177 = vpop.f32.mrf.mxu0
      %v1178 = vadd.f32 0.0, %v1177
      %1179 = vdwg.mxu0
      %v1180 = vadd.f32 %v963, %v1141
      %v1181 = vadd.f32 %v964, %v1143
      %v1182 = vadd.f32 %v965, %v1146
      %v1183 = vadd.f32 %v966, %v1148
      %v1184 = vadd.f32 %v967, %v1151
      %v1185 = vadd.f32 %v968, %v1153
      %v1186 = vadd.f32 %v969, %v1156
      %v1187 = vadd.f32 %v970, %v1158
      %v1188 = vadd.f32 %v971, %v1161
      %v1189 = vadd.f32 %v972, %v1163
      %v1190 = vadd.f32 %v973, %v1166
      %v1191 = vadd.f32 %v974, %v1168
      %v1192 = vadd.f32 %v975, %v1171
      %v1193 = vadd.f32 %v976, %v1173
      %v1194 = vadd.f32 %v977, %v1176
      %v1195 = vadd.f32 %v978, %v1178
      %v1196 = vpack.c.bf16 %v984, %v983
      %v1197 = vpack.c.bf16 %v988, %v987
      %v1198 = vpack.c.bf16 %v992, %v991
      %v1199 = vpack.c.bf16 %v996, %v995
      %v1200 = vpack.c.bf16 %v1000, %v999
      %v1201 = vpack.c.bf16 %v1004, %v1003
      %v1202 = vpack.c.bf16 %v1008, %v1007
      %v1203 = vpack.c.bf16 %v1012, %v1011
      %s1204 = scalar_lea.vmem %s311, 8
      %v1205 = vld [vmem:[%s1204] sm:$0x3]
      %v1207 = vsel %vm351, %v1196, 0
      %v1210 = vsel %vm351, %v1197, 0
      %v1213 = vsel %vm351, %v1198, 0
      %v1216 = vsel %vm351, %v1199, 0
      %v1219 = vsel %vm351, %v1200, 0
      %v1222 = vsel %vm351, %v1201, 0
      %v1225 = vsel %vm351, %v1202, 0
      %v1228 = vsel %vm351, %v1203, 0
      %v1231 = vsel %vm683, %v1205, 0
      %1233 = vmatpush.bf16.msra.mxu0 0
      %1234 = vmatpush.bf16.msra.mxu0 0
      %1235 = vmatpush.bf16.msra.mxu0 0
      %1236 = vmatpush.bf16.msra.mxu0 0
      %1237 = vmatpush.bf16.msra.mxu0 0
      %1238 = vmatpush.bf16.msra.mxu0 0
      %1239 = vmatpush.bf16.msra.mxu0 0
      %1240 = vmatpush.bf16.msra.mxu0 %v1231
      %1241 = vmatmul.bf16.gmra.mxu0 %v1207
      %v1242 = vpop.f32.mrf.mxu0
      %v1243 = vadd.f32 0.0, %v1242
      %v1244 = vpop.f32.mrf.mxu0
      %v1245 = vadd.f32 0.0, %v1244
      %1246 = vmatmul.bf16.gmra.mxu0 %v1210
      %v1247 = vpop.f32.mrf.mxu0
      %v1248 = vadd.f32 0.0, %v1247
      %v1249 = vpop.f32.mrf.mxu0
      %v1250 = vadd.f32 0.0, %v1249
      %1251 = vmatmul.bf16.gmra.mxu0 %v1213
      %v1252 = vpop.f32.mrf.mxu0
      %v1253 = vadd.f32 0.0, %v1252
      %v1254 = vpop.f32.mrf.mxu0
      %v1255 = vadd.f32 0.0, %v1254
      %1256 = vmatmul.bf16.gmra.mxu0 %v1216
      %v1257 = vpop.f32.mrf.mxu0
      %v1258 = vadd.f32 0.0, %v1257
      %v1259 = vpop.f32.mrf.mxu0
      %v1260 = vadd.f32 0.0, %v1259
      %1261 = vmatmul.bf16.gmra.mxu0 %v1219
      %v1262 = vpop.f32.mrf.mxu0
      %v1263 = vadd.f32 0.0, %v1262
      %v1264 = vpop.f32.mrf.mxu0
      %v1265 = vadd.f32 0.0, %v1264
      %1266 = vmatmul.bf16.gmra.mxu0 %v1222
      %v1267 = vpop.f32.mrf.mxu0
      %v1268 = vadd.f32 0.0, %v1267
      %v1269 = vpop.f32.mrf.mxu0
      %v1270 = vadd.f32 0.0, %v1269
      %1271 = vmatmul.bf16.gmra.mxu0 %v1225
      %v1272 = vpop.f32.mrf.mxu0
      %v1273 = vadd.f32 0.0, %v1272
      %v1274 = vpop.f32.mrf.mxu0
      %v1275 = vadd.f32 0.0, %v1274
      %1276 = vmatmul.bf16.gmra.mxu0 %v1228
      %v1277 = vpop.f32.mrf.mxu0
      %v1278 = vadd.f32 0.0, %v1277
      %v1279 = vpop.f32.mrf.mxu0
      %v1280 = vadd.f32 0.0, %v1279
      %1281 = vdwg.mxu0
      %v1282 = vadd.f32 %v1180, %v1243
      %v1283 = vadd.f32 %v1181, %v1245
      %v1284 = vadd.f32 %v1182, %v1248
      %v1285 = vadd.f32 %v1183, %v1250
      %v1286 = vadd.f32 %v1184, %v1253
      %v1287 = vadd.f32 %v1185, %v1255
      %v1288 = vadd.f32 %v1186, %v1258
      %v1289 = vadd.f32 %v1187, %v1260
      %v1290 = vadd.f32 %v1188, %v1263
      %v1291 = vadd.f32 %v1189, %v1265
      %v1292 = vadd.f32 %v1190, %v1268
      %v1293 = vadd.f32 %v1191, %v1270
      %v1294 = vadd.f32 %v1192, %v1273
      %v1295 = vadd.f32 %v1193, %v1275
      %v1296 = vadd.f32 %v1194, %v1278
      %v1297 = vadd.f32 %v1195, %v1280
      %v1306 = vrot.slane %v983, 1
      %v1307 = vrot.slane %v984, 1
      %v1308 = vsel %vm820, %v1306, %v1307
      %v1309 = vrot.slane %v985, 1
      %v1310 = vsel %vm820, %v1307, %v1309
      %v1311 = vrot.slane %v987, 1
      %v1312 = vrot.slane %v988, 1
      %v1313 = vsel %vm820, %v1311, %v1312
      %v1314 = vrot.slane %v989, 1
      %v1315 = vsel %vm820, %v1312, %v1314
      %v1316 = vrot.slane %v991, 1
      %v1317 = vrot.slane %v992, 1
      %v1318 = vsel %vm820, %v1316, %v1317
      %v1319 = vrot.slane %v993, 1
      %v1320 = vsel %vm820, %v1317, %v1319
      %v1321 = vrot.slane %v995, 1
      %v1322 = vrot.slane %v996, 1
      %v1323 = vsel %vm820, %v1321, %v1322
      %v1324 = vrot.slane %v997, 1
      %v1325 = vsel %vm820, %v1322, %v1324
      %v1326 = vrot.slane %v999, 1
      %v1327 = vrot.slane %v1000, 1
      %v1328 = vsel %vm820, %v1326, %v1327
      %v1329 = vrot.slane %v1001, 1
      %v1330 = vsel %vm820, %v1327, %v1329
      %v1331 = vrot.slane %v1003, 1
      %v1332 = vrot.slane %v1004, 1
      %v1333 = vsel %vm820, %v1331, %v1332
      %v1334 = vrot.slane %v1005, 1
      %v1335 = vsel %vm820, %v1332, %v1334
      %v1336 = vrot.slane %v1007, 1
      %v1337 = vrot.slane %v1008, 1
      %v1338 = vsel %vm820, %v1336, %v1337
      %v1339 = vrot.slane %v1009, 1
      %v1340 = vsel %vm820, %v1337, %v1339
      %v1341 = vrot.slane %v1011, 1
      %v1342 = vrot.slane %v1012, 1
      %v1343 = vsel %vm820, %v1341, %v1342
      %v1344 = vrot.slane %v1013, 1
      %v1345 = vsel %vm820, %v1342, %v1344
      %v1362 = vpack.c.bf16 %v1310, %v1308
      %v1363 = vpack.c.bf16 %v1315, %v1313
      %v1364 = vpack.c.bf16 %v1320, %v1318
      %v1365 = vpack.c.bf16 %v1325, %v1323
      %v1366 = vpack.c.bf16 %v1330, %v1328
      %v1367 = vpack.c.bf16 %v1335, %v1333
      %v1368 = vpack.c.bf16 %v1340, %v1338
      %v1369 = vpack.c.bf16 %v1345, %v1343
      %s1370 = scalar_lea.vmem %s311, 10
      %v1371 = vld [vmem:[%s1370] sm:$0x3]
      %v1373 = vsel %vm351, %v1362, 0
      %v1376 = vsel %vm351, %v1363, 0
      %v1379 = vsel %vm351, %v1364, 0
      %v1382 = vsel %vm351, %v1365, 0
      %v1385 = vsel %vm351, %v1366, 0
      %v1388 = vsel %vm351, %v1367, 0
      %v1391 = vsel %vm351, %v1368, 0
      %v1394 = vsel %vm351, %v1369, 0
      %v1397 = vsel %vm683, %v1371, 0
      %1399 = vmatpush.bf16.msra.mxu0 0
      %1400 = vmatpush.bf16.msra.mxu0 0
      %1401 = vmatpush.bf16.msra.mxu0 0
      %1402 = vmatpush.bf16.msra.mxu0 0
      %1403 = vmatpush.bf16.msra.mxu0 0
      %1404 = vmatpush.bf16.msra.mxu0 0
      %1405 = vmatpush.bf16.msra.mxu0 0
      %1406 = vmatpush.bf16.msra.mxu0 %v1397
      %1407 = vmatmul.bf16.gmra.mxu0 %v1373
      %v1408 = vpop.f32.mrf.mxu0
      %v1409 = vadd.f32 0.0, %v1408
      %v1410 = vpop.f32.mrf.mxu0
      %v1411 = vadd.f32 0.0, %v1410
      %1412 = vmatmul.bf16.gmra.mxu0 %v1376
      %v1413 = vpop.f32.mrf.mxu0
      %v1414 = vadd.f32 0.0, %v1413
      %v1415 = vpop.f32.mrf.mxu0
      %v1416 = vadd.f32 0.0, %v1415
      %1417 = vmatmul.bf16.gmra.mxu0 %v1379
      %v1418 = vpop.f32.mrf.mxu0
      %v1419 = vadd.f32 0.0, %v1418
      %v1420 = vpop.f32.mrf.mxu0
      %v1421 = vadd.f32 0.0, %v1420
      %1422 = vmatmul.bf16.gmra.mxu0 %v1382
      %v1423 = vpop.f32.mrf.mxu0
      %v1424 = vadd.f32 0.0, %v1423
      %v1425 = vpop.f32.mrf.mxu0
      %v1426 = vadd.f32 0.0, %v1425
      %1427 = vmatmul.bf16.gmra.mxu0 %v1385
      %v1428 = vpop.f32.mrf.mxu0
      %v1429 = vadd.f32 0.0, %v1428
      %v1430 = vpop.f32.mrf.mxu0
      %v1431 = vadd.f32 0.0, %v1430
      %1432 = vmatmul.bf16.gmra.mxu0 %v1388
      %v1433 = vpop.f32.mrf.mxu0
      %v1434 = vadd.f32 0.0, %v1433
      %v1435 = vpop.f32.mrf.mxu0
      %v1436 = vadd.f32 0.0, %v1435
      %1437 = vmatmul.bf16.gmra.mxu0 %v1391
      %v1438 = vpop.f32.mrf.mxu0
      %v1439 = vadd.f32 0.0, %v1438
      %v1440 = vpop.f32.mrf.mxu0
      %v1441 = vadd.f32 0.0, %v1440
      %1442 = vmatmul.bf16.gmra.mxu0 %v1394
      %v1443 = vpop.f32.mrf.mxu0
      %v1444 = vadd.f32 0.0, %v1443
      %v1445 = vpop.f32.mrf.mxu0
      %v1446 = vadd.f32 0.0, %v1445
      %1447 = vdwg.mxu0
      %v1448 = vadd.f32 %v1282, %v1409
      %v1449 = vadd.f32 %v1283, %v1411
      %v1450 = vadd.f32 %v1284, %v1414
      %v1451 = vadd.f32 %v1285, %v1416
      %v1452 = vadd.f32 %v1286, %v1419
      %v1453 = vadd.f32 %v1287, %v1421
      %v1454 = vadd.f32 %v1288, %v1424
      %v1455 = vadd.f32 %v1289, %v1426
      %v1456 = vadd.f32 %v1290, %v1429
      %v1457 = vadd.f32 %v1291, %v1431
      %v1458 = vadd.f32 %v1292, %v1434
      %v1459 = vadd.f32 %v1293, %v1436
      %v1460 = vadd.f32 %v1294, %v1439
      %v1461 = vadd.f32 %v1295, %v1441
      %v1462 = vadd.f32 %v1296, %v1444
      %v1463 = vadd.f32 %v1297, %v1446
      %s1464 = sadd.s32 %s350, 2
      %s1465 = smul.u32 %s1464, 48
      %s1466 = scalar_lea.vmem [#allocation2], %s1465
      %v1467 = vld [vmem:[%s1466 + $0x8] sm:$0xff]
      %v1468 = vld [vmem:[%s1466 + $0x10] sm:$0xff]
      %v1469 = vld [vmem:[%s1466 + $0x18] sm:$0xff]
      %v1470 = vld [vmem:[%s1466 + $0x20] sm:$0xff]
      %v1471 = vld [vmem:[%s1466 + $0x38] sm:$0xff]
      %v1472 = vld [vmem:[%s1466 + $0x40] sm:$0xff]
      %v1473 = vld [vmem:[%s1466 + $0x48] sm:$0xff]
      %v1474 = vld [vmem:[%s1466 + $0x50] sm:$0xff]
      %v1475 = vld [vmem:[%s1466 + $0x68] sm:$0xff]
      %v1476 = vld [vmem:[%s1466 + $0x70] sm:$0xff]
      %v1477 = vld [vmem:[%s1466 + $0x78] sm:$0xff]
      %v1478 = vld [vmem:[%s1466 + $0x80] sm:$0xff]
      %v1479 = vld [vmem:[%s1466 + $0x98] sm:$0xff]
      %v1480 = vld [vmem:[%s1466 + $0xa0] sm:$0xff]
      %v1481 = vld [vmem:[%s1466 + $0xa8] sm:$0xff]
      %v1482 = vld [vmem:[%s1466 + $0xb0] sm:$0xff]
      %v1483 = vld [vmem:[%s1466 + $0xc8] sm:$0xff]
      %v1484 = vld [vmem:[%s1466 + $0xd0] sm:$0xff]
      %v1485 = vld [vmem:[%s1466 + $0xd8] sm:$0xff]
      %v1486 = vld [vmem:[%s1466 + $0xe0] sm:$0xff]
      %v1487 = vld [vmem:[%s1466 + $0xf8] sm:$0xff]
      %v1488 = vld [vmem:[%s1466 + $0x100] sm:$0xff]
      %v1489 = vld [vmem:[%s1466 + $0x108] sm:$0xff]
      %v1490 = vld [vmem:[%s1466 + $0x110] sm:$0xff]
      %v1491 = vld [vmem:[%s1466 + $0x128] sm:$0xff]
      %v1492 = vld [vmem:[%s1466 + $0x130] sm:$0xff]
      %v1493 = vld [vmem:[%s1466 + $0x138] sm:$0xff]
      %v1494 = vld [vmem:[%s1466 + $0x140] sm:$0xff]
      %v1495 = vld [vmem:[%s1466 + $0x158] sm:$0xff]
      %v1496 = vld [vmem:[%s1466 + $0x160] sm:$0xff]
      %v1497 = vld [vmem:[%s1466 + $0x168] sm:$0xff]
      %v1498 = vld [vmem:[%s1466 + $0x170] sm:$0xff]
      %v1523 = vrot.slane %v1467, 7
      %v1524 = vrot.slane %v1468, 7
      %v1525 = vsel %vm583, %v1523, %v1524
      %v1526 = vrot.slane %v1469, 7
      %v1527 = vsel %vm583, %v1524, %v1526
      %v1528 = vrot.slane %v1471, 7
      %v1529 = vrot.slane %v1472, 7
      %v1530 = vsel %vm583, %v1528, %v1529
      %v1531 = vrot.slane %v1473, 7
      %v1532 = vsel %vm583, %v1529, %v1531
      %v1533 = vrot.slane %v1475, 7
      %v1534 = vrot.slane %v1476, 7
      %v1535 = vsel %vm583, %v1533, %v1534
      %v1536 = vrot.slane %v1477, 7
      %v1537 = vsel %vm583, %v1534, %v1536
      %v1538 = vrot.slane %v1479, 7
      %v1539 = vrot.slane %v1480, 7
      %v1540 = vsel %vm583, %v1538, %v1539
      %v1541 = vrot.slane %v1481, 7
      %v1542 = vsel %vm583, %v1539, %v1541
      %v1543 = vrot.slane %v1483, 7
      %v1544 = vrot.slane %v1484, 7
      %v1545 = vsel %vm583, %v1543, %v1544
      %v1546 = vrot.slane %v1485, 7
      %v1547 = vsel %vm583, %v1544, %v1546
      %v1548 = vrot.slane %v1487, 7
      %v1549 = vrot.slane %v1488, 7
      %v1550 = vsel %vm583, %v1548, %v1549
      %v1551 = vrot.slane %v1489, 7
      %v1552 = vsel %vm583, %v1549, %v1551
      %v1553 = vrot.slane %v1491, 7
      %v1554 = vrot.slane %v1492, 7
      %v1555 = vsel %vm583, %v1553, %v1554
      %v1556 = vrot.slane %v1493, 7
      %v1557 = vsel %vm583, %v1554, %v1556
      %v1558 = vrot.slane %v1495, 7
      %v1559 = vrot.slane %v1496, 7
      %v1560 = vsel %vm583, %v1558, %v1559
      %v1561 = vrot.slane %v1497, 7
      %v1562 = vsel %vm583, %v1559, %v1561
      %v1579 = vpack.c.bf16 %v1527, %v1525
      %v1580 = vpack.c.bf16 %v1532, %v1530
      %v1581 = vpack.c.bf16 %v1537, %v1535
      %v1582 = vpack.c.bf16 %v1542, %v1540
      %v1583 = vpack.c.bf16 %v1547, %v1545
      %v1584 = vpack.c.bf16 %v1552, %v1550
      %v1585 = vpack.c.bf16 %v1557, %v1555
      %v1586 = vpack.c.bf16 %v1562, %v1560
      %s1587 = scalar_lea.vmem %s311, 12
      %v1588 = vld [vmem:[%s1587] sm:$0x3]
      %v1590 = vsel %vm351, %v1579, 0
      %v1593 = vsel %vm351, %v1580, 0
      %v1596 = vsel %vm351, %v1581, 0
      %v1599 = vsel %vm351, %v1582, 0
      %v1602 = vsel %vm351, %v1583, 0
      %v1605 = vsel %vm351, %v1584, 0
      %v1608 = vsel %vm351, %v1585, 0
      %v1611 = vsel %vm351, %v1586, 0
      %v1614 = vsel %vm683, %v1588, 0
      %1616 = vmatpush.bf16.msra.mxu0 0
      %1617 = vmatpush.bf16.msra.mxu0 0
      %1618 = vmatpush.bf16.msra.mxu0 0
      %1619 = vmatpush.bf16.msra.mxu0 0
      %1620 = vmatpush.bf16.msra.mxu0 0
      %1621 = vmatpush.bf16.msra.mxu0 0
      %1622 = vmatpush.bf16.msra.mxu0 0
      %1623 = vmatpush.bf16.msra.mxu0 %v1614
      %1624 = vmatmul.bf16.gmra.mxu0 %v1590
      %v1625 = vpop.f32.mrf.mxu0
      %v1626 = vadd.f32 0.0, %v1625
      %v1627 = vpop.f32.mrf.mxu0
      %v1628 = vadd.f32 0.0, %v1627
      %1629 = vmatmul.bf16.gmra.mxu0 %v1593
      %v1630 = vpop.f32.mrf.mxu0
      %v1631 = vadd.f32 0.0, %v1630
      %v1632 = vpop.f32.mrf.mxu0
      %v1633 = vadd.f32 0.0, %v1632
      %1634 = vmatmul.bf16.gmra.mxu0 %v1596
      %v1635 = vpop.f32.mrf.mxu0
      %v1636 = vadd.f32 0.0, %v1635
      %v1637 = vpop.f32.mrf.mxu0
      %v1638 = vadd.f32 0.0, %v1637
      %1639 = vmatmul.bf16.gmra.mxu0 %v1599
      %v1640 = vpop.f32.mrf.mxu0
      %v1641 = vadd.f32 0.0, %v1640
      %v1642 = vpop.f32.mrf.mxu0
      %v1643 = vadd.f32 0.0, %v1642
      %1644 = vmatmul.bf16.gmra.mxu0 %v1602
      %v1645 = vpop.f32.mrf.mxu0
      %v1646 = vadd.f32 0.0, %v1645
      %v1647 = vpop.f32.mrf.mxu0
      %v1648 = vadd.f32 0.0, %v1647
      %1649 = vmatmul.bf16.gmra.mxu0 %v1605
      %v1650 = vpop.f32.mrf.mxu0
      %v1651 = vadd.f32 0.0, %v1650
      %v1652 = vpop.f32.mrf.mxu0
      %v1653 = vadd.f32 0.0, %v1652
      %1654 = vmatmul.bf16.gmra.mxu0 %v1608
      %v1655 = vpop.f32.mrf.mxu0
      %v1656 = vadd.f32 0.0, %v1655
      %v1657 = vpop.f32.mrf.mxu0
      %v1658 = vadd.f32 0.0, %v1657
      %1659 = vmatmul.bf16.gmra.mxu0 %v1611
      %v1660 = vpop.f32.mrf.mxu0
      %v1661 = vadd.f32 0.0, %v1660
      %v1662 = vpop.f32.mrf.mxu0
      %v1663 = vadd.f32 0.0, %v1662
      %1664 = vdwg.mxu0
      %v1665 = vadd.f32 %v1448, %v1626
      %v1666 = vadd.f32 %v1449, %v1628
      %v1667 = vadd.f32 %v1450, %v1631
      %v1668 = vadd.f32 %v1451, %v1633
      %v1669 = vadd.f32 %v1452, %v1636
      %v1670 = vadd.f32 %v1453, %v1638
      %v1671 = vadd.f32 %v1454, %v1641
      %v1672 = vadd.f32 %v1455, %v1643
      %v1673 = vadd.f32 %v1456, %v1646
      %v1674 = vadd.f32 %v1457, %v1648
      %v1675 = vadd.f32 %v1458, %v1651
      %v1676 = vadd.f32 %v1459, %v1653
      %v1677 = vadd.f32 %v1460, %v1656
      %v1678 = vadd.f32 %v1461, %v1658
      %v1679 = vadd.f32 %v1462, %v1661
      %v1680 = vadd.f32 %v1463, %v1663
      %v1681 = vpack.c.bf16 %v1469, %v1468
      %v1682 = vpack.c.bf16 %v1473, %v1472
      %v1683 = vpack.c.bf16 %v1477, %v1476
      %v1684 = vpack.c.bf16 %v1481, %v1480
      %v1685 = vpack.c.bf16 %v1485, %v1484
      %v1686 = vpack.c.bf16 %v1489, %v1488
      %v1687 = vpack.c.bf16 %v1493, %v1492
      %v1688 = vpack.c.bf16 %v1497, %v1496
      %s1689 = scalar_lea.vmem %s311, 14
      %v1690 = vld [vmem:[%s1689] sm:$0x3]
      %v1692 = vsel %vm351, %v1681, 0
      %v1695 = vsel %vm351, %v1682, 0
      %v1698 = vsel %vm351, %v1683, 0
      %v1701 = vsel %vm351, %v1684, 0
      %v1704 = vsel %vm351, %v1685, 0
      %v1707 = vsel %vm351, %v1686, 0
      %v1710 = vsel %vm351, %v1687, 0
      %v1713 = vsel %vm351, %v1688, 0
      %v1716 = vsel %vm683, %v1690, 0
      %1718 = vmatpush.bf16.msra.mxu0 0
      %1719 = vmatpush.bf16.msra.mxu0 0
      %1720 = vmatpush.bf16.msra.mxu0 0
      %1721 = vmatpush.bf16.msra.mxu0 0
      %1722 = vmatpush.bf16.msra.mxu0 0
      %1723 = vmatpush.bf16.msra.mxu0 0
      %1724 = vmatpush.bf16.msra.mxu0 0
      %1725 = vmatpush.bf16.msra.mxu0 %v1716
      %1726 = vmatmul.bf16.gmra.mxu0 %v1692
      %v1727 = vpop.f32.mrf.mxu0
      %v1728 = vadd.f32 0.0, %v1727
      %v1729 = vpop.f32.mrf.mxu0
      %v1730 = vadd.f32 0.0, %v1729
      %1731 = vmatmul.bf16.gmra.mxu0 %v1695
      %v1732 = vpop.f32.mrf.mxu0
      %v1733 = vadd.f32 0.0, %v1732
      %v1734 = vpop.f32.mrf.mxu0
      %v1735 = vadd.f32 0.0, %v1734
      %1736 = vmatmul.bf16.gmra.mxu0 %v1698
      %v1737 = vpop.f32.mrf.mxu0
      %v1738 = vadd.f32 0.0, %v1737
      %v1739 = vpop.f32.mrf.mxu0
      %v1740 = vadd.f32 0.0, %v1739
      %1741 = vmatmul.bf16.gmra.mxu0 %v1701
      %v1742 = vpop.f32.mrf.mxu0
      %v1743 = vadd.f32 0.0, %v1742
      %v1744 = vpop.f32.mrf.mxu0
      %v1745 = vadd.f32 0.0, %v1744
      %1746 = vmatmul.bf16.gmra.mxu0 %v1704
      %v1747 = vpop.f32.mrf.mxu0
      %v1748 = vadd.f32 0.0, %v1747
      %v1749 = vpop.f32.mrf.mxu0
      %v1750 = vadd.f32 0.0, %v1749
      %1751 = vmatmul.bf16.gmra.mxu0 %v1707
      %v1752 = vpop.f32.mrf.mxu0
      %v1753 = vadd.f32 0.0, %v1752
      %v1754 = vpop.f32.mrf.mxu0
      %v1755 = vadd.f32 0.0, %v1754
      %1756 = vmatmul.bf16.gmra.mxu0 %v1710
      %v1757 = vpop.f32.mrf.mxu0
      %v1758 = vadd.f32 0.0, %v1757
      %v1759 = vpop.f32.mrf.mxu0
      %v1760 = vadd.f32 0.0, %v1759
      %1761 = vmatmul.bf16.gmra.mxu0 %v1713
      %v1762 = vpop.f32.mrf.mxu0
      %v1763 = vadd.f32 0.0, %v1762
      %v1764 = vpop.f32.mrf.mxu0
      %v1765 = vadd.f32 0.0, %v1764
      %1766 = vdwg.mxu0
      %v1767 = vadd.f32 %v1665, %v1728
      %v1768 = vadd.f32 %v1666, %v1730
      %v1769 = vadd.f32 %v1667, %v1733
      %v1770 = vadd.f32 %v1668, %v1735
      %v1771 = vadd.f32 %v1669, %v1738
      %v1772 = vadd.f32 %v1670, %v1740
      %v1773 = vadd.f32 %v1671, %v1743
      %v1774 = vadd.f32 %v1672, %v1745
      %v1775 = vadd.f32 %v1673, %v1748
      %v1776 = vadd.f32 %v1674, %v1750
      %v1777 = vadd.f32 %v1675, %v1753
      %v1778 = vadd.f32 %v1676, %v1755
      %v1779 = vadd.f32 %v1677, %v1758
      %v1780 = vadd.f32 %v1678, %v1760
      %v1781 = vadd.f32 %v1679, %v1763
      %v1782 = vadd.f32 %v1680, %v1765
      %v1791 = vrot.slane %v1468, 1
      %v1792 = vrot.slane %v1469, 1
      %v1793 = vsel %vm820, %v1791, %v1792
      %v1794 = vrot.slane %v1470, 1
      %v1795 = vsel %vm820, %v1792, %v1794
      %v1796 = vrot.slane %v1472, 1
      %v1797 = vrot.slane %v1473, 1
      %v1798 = vsel %vm820, %v1796, %v1797
      %v1799 = vrot.slane %v1474, 1
      %v1800 = vsel %vm820, %v1797, %v1799
      %v1801 = vrot.slane %v1476, 1
      %v1802 = vrot.slane %v1477, 1
      %v1803 = vsel %vm820, %v1801, %v1802
      %v1804 = vrot.slane %v1478, 1
      %v1805 = vsel %vm820, %v1802, %v1804
      %v1806 = vrot.slane %v1480, 1
      %v1807 = vrot.slane %v1481, 1
      %v1808 = vsel %vm820, %v1806, %v1807
      %v1809 = vrot.slane %v1482, 1
      %v1810 = vsel %vm820, %v1807, %v1809
      %v1811 = vrot.slane %v1484, 1
      %v1812 = vrot.slane %v1485, 1
      %v1813 = vsel %vm820, %v1811, %v1812
      %v1814 = vrot.slane %v1486, 1
      %v1815 = vsel %vm820, %v1812, %v1814
      %v1816 = vrot.slane %v1488, 1
      %v1817 = vrot.slane %v1489, 1
      %v1818 = vsel %vm820, %v1816, %v1817
      %v1819 = vrot.slane %v1490, 1
      %v1820 = vsel %vm820, %v1817, %v1819
      %v1821 = vrot.slane %v1492, 1
      %v1822 = vrot.slane %v1493, 1
      %v1823 = vsel %vm820, %v1821, %v1822
      %v1824 = vrot.slane %v1494, 1
      %v1825 = vsel %vm820, %v1822, %v1824
      %v1826 = vrot.slane %v1496, 1
      %v1827 = vrot.slane %v1497, 1
      %v1828 = vsel %vm820, %v1826, %v1827
      %v1829 = vrot.slane %v1498, 1
      %v1830 = vsel %vm820, %v1827, %v1829
      %v1847 = vpack.c.bf16 %v1795, %v1793
      %v1848 = vpack.c.bf16 %v1800, %v1798
      %v1849 = vpack.c.bf16 %v1805, %v1803
      %v1850 = vpack.c.bf16 %v1810, %v1808
      %v1851 = vpack.c.bf16 %v1815, %v1813
      %v1852 = vpack.c.bf16 %v1820, %v1818
      %v1853 = vpack.c.bf16 %v1825, %v1823
      %v1854 = vpack.c.bf16 %v1830, %v1828
      %s1855 = scalar_lea.vmem %s311, 16
      %v1856 = vld [vmem:[%s1855] sm:$0x3]
      %v1858 = vsel %vm351, %v1847, 0
      %v1861 = vsel %vm351, %v1848, 0
      %v1864 = vsel %vm351, %v1849, 0
      %v1867 = vsel %vm351, %v1850, 0
      %v1870 = vsel %vm351, %v1851, 0
      %v1873 = vsel %vm351, %v1852, 0
      %v1876 = vsel %vm351, %v1853, 0
      %v1879 = vsel %vm351, %v1854, 0
      %v1882 = vsel %vm683, %v1856, 0
      %1884 = vmatpush.bf16.msra.mxu0 0
      %1885 = vmatpush.bf16.msra.mxu0 0
      %1886 = vmatpush.bf16.msra.mxu0 0
      %1887 = vmatpush.bf16.msra.mxu0 0
      %1888 = vmatpush.bf16.msra.mxu0 0
      %1889 = vmatpush.bf16.msra.mxu0 0
      %1890 = vmatpush.bf16.msra.mxu0 0
      %1891 = vmatpush.bf16.msra.mxu0 %v1882
      %1892 = vmatmul.bf16.gmra.mxu0 %v1858
      %v1893 = vpop.f32.mrf.mxu0
      %v1894 = vadd.f32 0.0, %v1893
      %v1895 = vpop.f32.mrf.mxu0
      %v1896 = vadd.f32 0.0, %v1895
      %1897 = vmatmul.bf16.gmra.mxu0 %v1861
      %v1898 = vpop.f32.mrf.mxu0
      %v1899 = vadd.f32 0.0, %v1898
      %v1900 = vpop.f32.mrf.mxu0
      %v1901 = vadd.f32 0.0, %v1900
      %1902 = vmatmul.bf16.gmra.mxu0 %v1864
      %v1903 = vpop.f32.mrf.mxu0
      %v1904 = vadd.f32 0.0, %v1903
      %v1905 = vpop.f32.mrf.mxu0
      %v1906 = vadd.f32 0.0, %v1905
      %1907 = vmatmul.bf16.gmra.mxu0 %v1867
      %v1908 = vpop.f32.mrf.mxu0
      %v1909 = vadd.f32 0.0, %v1908
      %v1910 = vpop.f32.mrf.mxu0
      %v1911 = vadd.f32 0.0, %v1910
      %1912 = vmatmul.bf16.gmra.mxu0 %v1870
      %v1913 = vpop.f32.mrf.mxu0
      %v1914 = vadd.f32 0.0, %v1913
      %v1915 = vpop.f32.mrf.mxu0
      %v1916 = vadd.f32 0.0, %v1915
      %1917 = vmatmul.bf16.gmra.mxu0 %v1873
      %v1918 = vpop.f32.mrf.mxu0
      %v1919 = vadd.f32 0.0, %v1918
      %v1920 = vpop.f32.mrf.mxu0
      %v1921 = vadd.f32 0.0, %v1920
      %1922 = vmatmul.bf16.gmra.mxu0 %v1876
      %v1923 = vpop.f32.mrf.mxu0
      %v1924 = vadd.f32 0.0, %v1923
      %v1925 = vpop.f32.mrf.mxu0
      %v1926 = vadd.f32 0.0, %v1925
      %1927 = vmatmul.bf16.gmra.mxu0 %v1879
      %v1928 = vpop.f32.mrf.mxu0
      %v1929 = vadd.f32 0.0, %v1928
      %v1930 = vpop.f32.mrf.mxu0
      %v1931 = vadd.f32 0.0, %v1930
      %1932 = vdwg.mxu0
      %v1933 = vadd.f32 %v1767, %v1894
      %v1934 = vadd.f32 %v1768, %v1896
      %v1935 = vadd.f32 %v1769, %v1899
      %v1936 = vadd.f32 %v1770, %v1901
      %v1937 = vadd.f32 %v1771, %v1904
      %v1938 = vadd.f32 %v1772, %v1906
      %v1939 = vadd.f32 %v1773, %v1909
      %v1940 = vadd.f32 %v1774, %v1911
      %v1941 = vadd.f32 %v1775, %v1914
      %v1942 = vadd.f32 %v1776, %v1916
      %v1943 = vadd.f32 %v1777, %v1919
      %v1944 = vadd.f32 %v1778, %v1921
      %v1945 = vadd.f32 %v1779, %v1924
      %v1946 = vadd.f32 %v1780, %v1926
      %v1947 = vadd.f32 %v1781, %v1929
      %v1948 = vadd.f32 %v1782, %v1931
      %v1949 = vld [vmem:[%s314] sm:$0x1]
      %v1951 = vperm.slane %v1949, 0
      %v1953 = vadd.f32 %v1933, %v1951
      %v1954 = vadd.f32 %v1934, %v1951
      %v1955 = vadd.f32 %v1935, %v1951
      %v1956 = vadd.f32 %v1936, %v1951
      %v1957 = vadd.f32 %v1937, %v1951
      %v1958 = vadd.f32 %v1938, %v1951
      %v1959 = vadd.f32 %v1939, %v1951
      %v1960 = vadd.f32 %v1940, %v1951
      %v1961 = vadd.f32 %v1941, %v1951
      %v1962 = vadd.f32 %v1942, %v1951
      %v1963 = vadd.f32 %v1943, %v1951
      %v1964 = vadd.f32 %v1944, %v1951
      %v1965 = vadd.f32 %v1945, %v1951
      %v1966 = vadd.f32 %v1946, %v1951
      %v1967 = vadd.f32 %v1947, %v1951
      %v1968 = vadd.f32 %v1948, %v1951
      %v1969 = vsel %vm351, %v1953, 0.0
      %v1970 = vsel %vm351, %v1954, 0.0
      %v1971 = vadd.f32 %v1969, %v1970
      %v1972 = vsel %vm351, %v1955, 0.0
      %v1973 = vadd.f32 %v1971, %v1972
      %v1974 = vsel %vm351, %v1956, 0.0
      %v1975 = vadd.f32 %v1973, %v1974
      %v1976 = vsel %vm351, %v1957, 0.0
      %v1977 = vadd.f32 %v1975, %v1976
      %v1978 = vsel %vm351, %v1958, 0.0
      %v1979 = vadd.f32 %v1977, %v1978
      %v1980 = vsel %vm351, %v1959, 0.0
      %v1981 = vadd.f32 %v1979, %v1980
      %v1982 = vsel %vm351, %v1960, 0.0
      %v1983 = vadd.f32 %v1981, %v1982
      %v1984 = vsel %vm351, %v1961, 0.0
      %v1985 = vadd.f32 %v1983, %v1984
      %v1986 = vsel %vm351, %v1962, 0.0
      %v1987 = vadd.f32 %v1985, %v1986
      %v1988 = vsel %vm351, %v1963, 0.0
      %v1989 = vadd.f32 %v1987, %v1988
      %v1990 = vsel %vm351, %v1964, 0.0
      %v1991 = vadd.f32 %v1989, %v1990
      %v1992 = vsel %vm351, %v1965, 0.0
      %v1993 = vadd.f32 %v1991, %v1992
      %v1994 = vsel %vm351, %v1966, 0.0
      %v1995 = vadd.f32 %v1993, %v1994
      %v1996 = vsel %vm351, %v1967, 0.0
      %v1997 = vadd.f32 %v1995, %v1996
      %v1998 = vsel %vm351, %v1968, 0.0
      %v1999 = vadd.f32 %v1997, %v1998
      %v2000 = vrot.slane %v1999, 4
      %v2001 = vadd.f32 %v1999, %v2000
      %v2002 = vrot.slane %v2001, 2
      %v2003 = vadd.f32 %v2001, %v2002
      %v2004 = vrot.slane %v2003, 1
      %v2005 = vadd.f32 %v2003, %v2004
      %vm2006 = vcmask 24576
      %2007 = vst.msk [vmem:[%s338] sm:$0x1] %vm2006, %v2005
      %v2008 = vmul.f32 %v1953, %v1953
      %v2009 = vmul.f32 %v1954, %v1954
      %v2010 = vmul.f32 %v1955, %v1955
      %v2011 = vmul.f32 %v1956, %v1956
      %v2012 = vmul.f32 %v1957, %v1957
      %v2013 = vmul.f32 %v1958, %v1958
      %v2014 = vmul.f32 %v1959, %v1959
      %v2015 = vmul.f32 %v1960, %v1960
      %v2016 = vmul.f32 %v1961, %v1961
      %v2017 = vmul.f32 %v1962, %v1962
      %v2018 = vmul.f32 %v1963, %v1963
      %v2019 = vmul.f32 %v1964, %v1964
      %v2020 = vmul.f32 %v1965, %v1965
      %v2021 = vmul.f32 %v1966, %v1966
      %v2022 = vmul.f32 %v1967, %v1967
      %v2023 = vmul.f32 %v1968, %v1968
      %v2024 = vsel %vm351, %v2008, 0.0
      %v2025 = vsel %vm351, %v2009, 0.0
      %v2026 = vadd.f32 %v2024, %v2025
      %v2027 = vsel %vm351, %v2010, 0.0
      %v2028 = vadd.f32 %v2026, %v2027
      %v2029 = vsel %vm351, %v2011, 0.0
      %v2030 = vadd.f32 %v2028, %v2029
      %v2031 = vsel %vm351, %v2012, 0.0
      %v2032 = vadd.f32 %v2030, %v2031
      %v2033 = vsel %vm351, %v2013, 0.0
      %v2034 = vadd.f32 %v2032, %v2033
      %v2035 = vsel %vm351, %v2014, 0.0
      %v2036 = vadd.f32 %v2034, %v2035
      %v2037 = vsel %vm351, %v2015, 0.0
      %v2038 = vadd.f32 %v2036, %v2037
      %v2039 = vsel %vm351, %v2016, 0.0
      %v2040 = vadd.f32 %v2038, %v2039
      %v2041 = vsel %vm351, %v2017, 0.0
      %v2042 = vadd.f32 %v2040, %v2041
      %v2043 = vsel %vm351, %v2018, 0.0
      %v2044 = vadd.f32 %v2042, %v2043
      %v2045 = vsel %vm351, %v2019, 0.0
      %v2046 = vadd.f32 %v2044, %v2045
      %v2047 = vsel %vm351, %v2020, 0.0
      %v2048 = vadd.f32 %v2046, %v2047
      %v2049 = vsel %vm351, %v2021, 0.0
      %v2050 = vadd.f32 %v2048, %v2049
      %v2051 = vsel %vm351, %v2022, 0.0
      %v2052 = vadd.f32 %v2050, %v2051
      %v2053 = vsel %vm351, %v2023, 0.0
      %v2054 = vadd.f32 %v2052, %v2053
      %v2055 = vrot.slane %v2054, 4
      %v2056 = vadd.f32 %v2054, %v2055
      %v2057 = vrot.slane %v2056, 2
      %v2058 = vadd.f32 %v2056, %v2057
      %v2059 = vrot.slane %v2058, 1
      %v2060 = vadd.f32 %v2058, %v2059
      %2061 = vst.msk [vmem:[%s348] sm:$0x1] %vm2006, %v2060
      %2062 = vst.msk [vmem:[%s327] sm:$0xff] %vm351, %v1953
      %2063 = vst.msk [vmem:[%s327 + $0x8] sm:$0xff] %vm351, %v1954
      %2064 = vst.msk [vmem:[%s327 + $0x10] sm:$0xff] %vm351, %v1955
      %2065 = vst.msk [vmem:[%s327 + $0x18] sm:$0xff] %vm351, %v1956
      %2066 = vst.msk [vmem:[%s327 + $0x20] sm:$0xff] %vm351, %v1957
      %2067 = vst.msk [vmem:[%s327 + $0x28] sm:$0xff] %vm351, %v1958
      %2068 = vst.msk [vmem:[%s327 + $0x30] sm:$0xff] %vm351, %v1959
      %2069 = vst.msk [vmem:[%s327 + $0x38] sm:$0xff] %vm351, %v1960
      %2070 = vst.msk [vmem:[%s327 + $0x40] sm:$0xff] %vm351, %v1961
      %2071 = vst.msk [vmem:[%s327 + $0x48] sm:$0xff] %vm351, %v1962
      %2072 = vst.msk [vmem:[%s327 + $0x50] sm:$0xff] %vm351, %v1963
      %2073 = vst.msk [vmem:[%s327 + $0x58] sm:$0xff] %vm351, %v1964
      %2074 = vst.msk [vmem:[%s327 + $0x60] sm:$0xff] %vm351, %v1965
      %2075 = vst.msk [vmem:[%s327 + $0x68] sm:$0xff] %vm351, %v1966
      %2076 = vst.msk [vmem:[%s327 + $0x70] sm:$0xff] %vm351, %v1967
      %2077 = vst.msk [vmem:[%s327 + $0x78] sm:$0xff] %vm351, %v1968
      %s2078 = smul.u32 8, %s23
      %p2079 = scmp.lt.s32.totalorder %s22, 1
      %s2080 = scalar_select %p2079, %s22, 1
      %p2081 = scmp.lt.s32.totalorder %s2078, 15
      %s2082 = scalar_select %p2081, %s2078, 15
      %p2083 = scmp.lt.s32.totalorder %s24, 0
      %s2084 = scalar_select %p2083, %s24, 0
      %s2085 = smul.addr %s2082, 2
      %s2086 = sadd.s32 %s2084, %s2085
      %s2087 = smul.addr %s2080, 32
      %s2088 = sadd.s32 %s2086, %s2087
      %s2089 = smul.addr %s2088, 8
      %s2090 = scalar_lea.vmem %s3, %s2089
      %p2091 = scmp.lt.s32.totalorder %s22, 1
      %s2092 = scalar_select %p2091, %s22, 1
      %p2093 = scmp.lt.s32.totalorder %s23, 1
      %s2094 = scalar_select %p2093, %s23, 1
      %p2095 = scmp.lt.s32.totalorder %s24, 0
      %s2096 = scalar_select %p2095, %s24, 0
      %s2097 = sadd.s32 %s2096, %s2094
      %s2098 = smul.addr %s2092, 2
      %s2099 = sadd.s32 %s2097, %s2098
      %s2100 = scalar_lea.vmem %s4, %s2099
      %p2101 = scmp.lt.s32.totalorder %s22, 1
      %s2102 = scalar_select %p2101, %s22, 1
      %p2103 = scmp.lt.s32.totalorder %s23, 1
      %s2104 = scalar_select %p2103, %s23, 1
      %p2105 = scmp.lt.s32.totalorder %s24, 0
      %s2106 = scalar_select %p2105, %s24, 0
      %s2107 = sadd.s32 %s2106, %s2104
      %s2108 = smul.addr %s2102, 2
      %s2109 = sadd.s32 %s2107, %s2108
      %s2110 = scalar_lea.vmem %s5, %s2109
      // Predicated region
      $region33: #{basicblock_forward.4} parent=31 // pred_check
        %p2111 = pneg %p136
      $region34: #{basicblock_forward.4} parent=31 // pred_check_branch
        %2113 = sbr.rel (%p2111) target = $region36
      $region35: #{basicblock_forward.4} parent=31 // pred_region
        %s2114 = smul.u32 8, %s23
      $region36: #{basicblock_forward.4} parent=31 // pred_fallthru
        _
      // Predicated region
      $region37: #{basicblock_forward.4} parent=31 // pred_check
        %p2115 = pneg %p166
      $region38: #{basicblock_forward.4} parent=31 // pred_check_branch
        %2117 = sbr.rel (%p2115) target = $region40
      $region39: #{basicblock_forward.4} parent=31 // pred_region
        _
      $region40: #{basicblock_forward.4} parent=31 // pred_fallthru
        _
      // Predicated region
      $region41: #{basicblock_forward.4} parent=31 // pred_check
        %p2118 = pneg %p196
      $region42: #{basicblock_forward.4} parent=31 // pred_check_branch
        %2120 = sbr.rel (%p2118) target = $region44
      $region43: #{basicblock_forward.4} parent=31 // pred_region
        _
      $region44: #{basicblock_forward.4} parent=31 // pred_fallthru
        _
    $region32: #{basicblock_forward.4} parent=5 // pred_fallthru
      _
    %p2121 = scmp.le.s32.totalorder 2, %s12
    // Predicated region
    $region45: #{basicblock_forward.4} parent=5 // pred_check
      %p2122 = pneg %p2121
    $region46: #{basicblock_forward.4} parent=5 // pred_check_branch
      %2124 = sbr.rel (%p2122) target = $region48
    $region47: #{basicblock_forward.4} parent=5 // pred_region
      %s2125 = ssub.s32 %s12, 2
      // Predicated region
      $region49: #{basicblock_forward.4} parent=47 // pred_check
        %p2126 = pneg %p142
      $region50: #{basicblock_forward.4} parent=47 // pred_check_branch
        %2128 = sbr.rel (%p2126) target = $region52
      $region51: #{basicblock_forward.4} parent=47 // pred_region
        %s2129 = smul.u32 8, %s26
        %p2130 = scmp.lt.s32.totalorder %s25, 1
        %s2131 = scalar_select %p2130, %s25, 1
        %p2132 = scmp.lt.s32.totalorder %s2129, 15
        %s2133 = scalar_select %p2132, %s2129, 15
        %p2134 = scmp.lt.s32.totalorder %s27, 0
        %s2135 = scalar_select %p2134, %s27, 0
        %s2136 = smul.addr %s2133, 2
        %s2137 = sadd.s32 %s2135, %s2136
        %s2138 = smul.addr %s2131, 32
        %s2139 = sadd.s32 %s2137, %s2138
        %s2140 = smul.addr %s2139, 8
        %s2141 = scalar_lea.vmem %s3, %s2140
      $region52: #{basicblock_forward.4} parent=47 // pred_fallthru
        _
      // Predicated region
      $region53: #{basicblock_forward.4} parent=47 // pred_check
        %p2142 = pneg %p172
      $region54: #{basicblock_forward.4} parent=47 // pred_check_branch
        %2144 = sbr.rel (%p2142) target = $region56
      $region55: #{basicblock_forward.4} parent=47 // pred_region
        %p2145 = scmp.lt.s32.totalorder %s25, 1
        %s2146 = scalar_select %p2145, %s25, 1
        %p2147 = scmp.lt.s32.totalorder %s26, 1
        %s2148 = scalar_select %p2147, %s26, 1
        %p2149 = scmp.lt.s32.totalorder %s27, 0
        %s2150 = scalar_select %p2149, %s27, 0
        %s2151 = sadd.s32 %s2150, %s2148
        %s2152 = smul.addr %s2146, 2
        %s2153 = sadd.s32 %s2151, %s2152
        %s2154 = scalar_lea.vmem %s4, %s2153
      $region56: #{basicblock_forward.4} parent=47 // pred_fallthru
        _
      // Predicated region
      $region57: #{basicblock_forward.4} parent=47 // pred_check
        %p2155 = pneg %p202
      $region58: #{basicblock_forward.4} parent=47 // pred_check_branch
        %2157 = sbr.rel (%p2155) target = $region60
      $region59: #{basicblock_forward.4} parent=47 // pred_region
        %p2158 = scmp.lt.s32.totalorder %s25, 1
        %s2159 = scalar_select %p2158, %s25, 1
        %p2160 = scmp.lt.s32.totalorder %s26, 1
        %s2161 = scalar_select %p2160, %s26, 1
        %p2162 = scmp.lt.s32.totalorder %s27, 0
        %s2163 = scalar_select %p2162, %s27, 0
        %s2164 = sadd.s32 %s2163, %s2161
        %s2165 = smul.addr %s2159, 2
        %s2166 = sadd.s32 %s2164, %s2165
        %s2167 = scalar_lea.vmem %s5, %s2166
      $region60: #{basicblock_forward.4} parent=47 // pred_fallthru
        _
    $region48: #{basicblock_forward.4} parent=5 // pred_fallthru
      _
  $region6: #{basicblock_forward.4} parent=0 // loop_footer
    %s16 = sadd.s32 1, %s12
  $region7: #{basicblock_forward.4} parent=0 // loop_footer_branch
    %11 = sbr.rel target = $region3
  $region8: #{basicblock_forward.4} parent=0 // loop_exit
    _

</llo_original>
